<compile_context>
chip_gen: v7x
topology: tpu7x:2x2x1
jax: 0.10.0
libtpu: 0.0.40
codegen_flags: <defaults>
</compile_context>

<pallas_src>
import math

import jax
import jax.numpy as jnp
from jax import lax
from jax.experimental import pallas as pl
from jax.experimental.pallas import tpu as pltpu

# ---- small synthetic config (stands in for bert-base-multilingual-cased) ----
B, L, H, NH, FF, T = 2, 8, 32, 2, 64, 5       # batch, seq, hidden, heads, ffn, num_tags
HD = H // NH
VOCAB, TYPES, NLAYERS = 50, 2, 2
LN_EPS = 1e-12

VMEM = pltpu.MemorySpace.VMEM


# ----------------------------- fused Pallas kernel --------------------------

def _bert_crf_kernel(
    # data
    ids_ref, tt_ref, maskf_ref, tags_ref,
    # embeddings
    wemb_ref, pemb_ref, temb_ref, eg_ref, ebt_ref,
    # encoder layers (stacked over NLAYERS)
    wqkv_ref, bqkv_ref, wo_ref, bo_ref, g1_ref, bt1_ref,
    w1_ref, bb1_ref, w2_ref, bb2_ref, g2_ref, bt2_ref,
    # tag head + CRF params
    fcw_ref, fcb_ref, trans_ref, start_ref, end_ref,
    # outputs
    emis_ref, loss_ref,
    # scratch
    ctx_ref,
):
    f32 = jnp.float32

    def layer_norm(y, g, b):
        mu = jnp.mean(y, axis=-1, keepdims=True)
        var = jnp.mean((y - mu) ** 2, axis=-1, keepdims=True)
        return (y - mu) * lax.rsqrt(var + LN_EPS) * g + b

    # ---------------- embeddings (one-hot matmul gathers, all on the MXU) ----------------
    ids = ids_ref[...]                                        # (B*L, 1) int32
    tt = tt_ref[...]                                          # (B*L, 1) int32
    voc_iota = lax.broadcasted_iota(jnp.int32, (B * L, VOCAB), 1)
    typ_iota = lax.broadcasted_iota(jnp.int32, (B * L, TYPES), 1)
    x = jnp.dot((voc_iota == ids).astype(f32), wemb_ref[...],
                preferred_element_type=f32)
    x = x + jnp.dot((typ_iota == tt).astype(f32), temb_ref[...],
                    preferred_element_type=f32)
    x = x + pemb_ref[...]                                     # pre-tiled (B*L, H) positions
    x = layer_norm(x, eg_ref[...], ebt_ref[...])              # no zero-residual add

    maskf = maskf_ref[...]                                    # (B, L) float32
    neg = (1.0 - maskf) * (-1e9)                              # additive key mask, built once
    scale = 1.0 / math.sqrt(HD)

    # ---------------- encoder layers (statically unrolled) ----------------
    for l in range(NLAYERS):
        # fused QKV projection: one MXU matmul, lane-dense (B*L, 3H) output
        qkv = jnp.dot(x, wqkv_ref[l], preferred_element_type=f32) + bqkv_ref[l]
        for b in range(B):
            r0 = b * L
            negb = neg[b:b + 1, :]                            # (1, L)
            for h in range(NH):
                c0 = h * HD
                q = qkv[r0:r0 + L, c0:c0 + HD]
                k = qkv[r0:r0 + L, H + c0:H + c0 + HD]
                v = qkv[r0:r0 + L, 2 * H + c0:2 * H + c0 + HD]
                s = lax.dot_general(q, k, (((1,), (1,)), ((), ())),
                                    preferred_element_type=f32) * scale + negb
                smax = jnp.max(s, axis=-1, keepdims=True)
                p = jnp.exp(s - smax)
                p = p / jnp.sum(p, axis=-1, keepdims=True)
                ctx_ref[r0:r0 + L, c0:c0 + HD] = jnp.dot(p, v, preferred_element_type=f32)
        ctx = jnp.dot(ctx_ref[...], wo_ref[l], preferred_element_type=f32) + bo_ref[l]
        x = layer_norm(ctx + x, g1_ref[l], bt1_ref[l])
        ff = jnp.dot(x, w1_ref[l], preferred_element_type=f32) + bb1_ref[l]
        # TODO(synk): HF BERT uses exact erf GELU; tanh approximation kept (Mosaic-safe, tiny delta).
        ff = jax.nn.gelu(ff)
        ff = jnp.dot(ff, w2_ref[l], preferred_element_type=f32) + bb2_ref[l]
        x = layer_norm(ff + x, g2_ref[l], bt2_ref[l])

    # ---------------- tag head ----------------
    emis = jnp.dot(x, fcw_ref[...], preferred_element_type=f32) + fcb_ref[...]   # (B*L, T)
    emis_ref[...] = emis

    # ---------------- CRF NLL, torchcrf(batch_first=True), reduction='mean' ----------------
    trans = trans_ref[...]                                    # (T, T)
    start = start_ref[...]                                    # (1, T)
    end = end_ref[...]                                        # (1, T)
    tags = tags_ref[...]                                      # (B, L) int32

    tag_lane = lax.broadcasted_iota(jnp.int32, (B, T), 1)
    row_ids = lax.broadcasted_iota(jnp.int32, (B, B * L), 1)
    base = L * lax.broadcasted_iota(jnp.int32, (B, 1), 0)     # row offset b*L per batch

    def emis_at(i):
        # select rows {b*L + i} -> (B, T) via a one-hot selection matmul (no gathers)
        sel = (row_ids == base + i).astype(f32)               # (B, B*L)
        return jnp.dot(sel, emis, preferred_element_type=f32)

    def onehot_at(i):
        return (tag_lane == tags[:, i:i + 1]).astype(f32)     # (B, T)

    # stable exp-matmul logsumexp over the previous tag:
    #   lse_t(alpha[t] + trans[t, t']) = m + c[t'] + log(exp(alpha - m) @ exp(trans - c))
    cmax = jnp.max(trans, axis=0, keepdims=True)              # (1, T), once per kernel
    transexp = jnp.exp(trans - cmax)                          # (T, T)

    e0 = emis_at(0)
    oh = onehot_at(0)
    num = jnp.sum((start + e0) * oh, axis=-1, keepdims=True)  # (B, 1) gold-path score
    alpha = start + e0                                        # (B, T) forward scores
    oh_prev = oh
    last_oh = oh
    for i in range(1, L):
        mi = maskf[:, i:i + 1]                                # (B, 1)
        on = mi > 0.0
        oh_cur = onehot_at(i)
        e_i = emis_at(i)
        # gold path: trans[tags[i-1], tags[i]] + emis[i, tags[i]]  (row gathers via one-hots)
        trow = jnp.dot(oh_prev, trans, preferred_element_type=f32)            # (B, T)
        num = num + mi * jnp.sum((trow + e_i) * oh_cur, axis=-1, keepdims=True)
        last_oh = jnp.where(on, oh_cur, last_oh)
        # forward recursion, batched over B, 2-D only
        amax = jnp.max(alpha, axis=-1, keepdims=True)                         # (B, 1)
        ssum = jnp.dot(jnp.exp(alpha - amax), transexp,
                       preferred_element_type=f32)                            # (B, T)
        next_alpha = e_i + amax + cmax + jnp.log(ssum)
        alpha = jnp.where(on, next_alpha, alpha)
        oh_prev = oh_cur
    num = num + jnp.sum(end * last_oh, axis=-1, keepdims=True)
    af = alpha + end
    amax = jnp.max(af, axis=-1, keepdims=True)
    denom = amax + jnp.log(jnp.sum(jnp.exp(af - amax), axis=-1, keepdims=True))
    llh = num - denom                                         # (B, 1) log-likelihood
    # torchcrf reduction='mean' divides by the batch size
    loss_ref[...] = -jnp.sum(llh, axis=0, keepdims=True) / B


# ----------------------------- params & wrapper ------------------------------

def init_params(key):
    keys = jax.random.split(key, 32)
    ki = iter(keys)

    def nrm(shape, scale=0.02):
        return scale * jax.random.normal(next(ki), shape, jnp.float32)

    return {
        "word_emb": nrm((VOCAB, H)),
        "pos_emb": nrm((L, H)),
        "type_emb": nrm((TYPES, H)),
        "emb_ln_g": jnp.ones((1, H), jnp.float32),
        "emb_ln_b": jnp.zeros((1, H), jnp.float32),
        # encoder layer params stacked over the layer dimension
        "wqkv": nrm((NLAYERS, H, 3 * H)),
        "bqkv": jnp.zeros((NLAYERS, 1, 3 * H), jnp.float32),
        "wo": nrm((NLAYERS, H, H)),
        "bo": jnp.zeros((NLAYERS, 1, H), jnp.float32),
        "ln1_g": jnp.ones((NLAYERS, 1, H), jnp.float32),
        "ln1_b": jnp.zeros((NLAYERS, 1, H), jnp.float32),
        "w1": nrm((NLAYERS, H, FF)),
        "b1": jnp.zeros((NLAYERS, 1, FF), jnp.float32),
        "w2": nrm((NLAYERS, FF, H)),
        "b2": jnp.zeros((NLAYERS, 1, H), jnp.float32),
        "ln2_g": jnp.ones((NLAYERS, 1, H), jnp.float32),
        "ln2_b": jnp.zeros((NLAYERS, 1, H), jnp.float32),
        # tag head + CRF
        "fc_w": nrm((H, T)),
        "fc_b": jnp.zeros((1, T), jnp.float32),
        "crf_start": nrm((1, T), 0.1),
        "crf_end": nrm((1, T), 0.1),
        "crf_trans": nrm((T, T), 0.1),
    }


def bert_crf_forward(params, ids, mask, token_type_ids, target_tags):
    b, l = ids.shape
    ids_col = ids.reshape(b * l, 1).astype(jnp.int32)
    tt_col = token_type_ids.reshape(b * l, 1).astype(jnp.int32)
    maskf = mask.astype(jnp.float32)                          # (B, L)
    tags = target_tags.astype(jnp.int32)                      # (B, L)
    pos_tiled = jnp.tile(params["pos_emb"], (b, 1))           # (B*L, H), tiny, built once

    emis2d, loss = pl.pallas_call(
        _bert_crf_kernel,
        out_shape=(jax.ShapeDtypeStruct((b * l, T), jnp.float32),
                   jax.ShapeDtypeStruct((1, 1), jnp.float32)),
        in_specs=[pl.BlockSpec(memory_space=VMEM)] * 26,
        out_specs=(pl.BlockSpec(memory_space=VMEM),
                   pl.BlockSpec(memory_space=VMEM)),
        scratch_shapes=[pltpu.VMEM((b * l, H), jnp.float32)],   # attention context slab
    )(ids_col, tt_col, maskf, tags,
      params["word_emb"], pos_tiled, params["type_emb"],
      params["emb_ln_g"], params["emb_ln_b"],
      params["wqkv"], params["bqkv"], params["wo"], params["bo"],
      params["ln1_g"], params["ln1_b"],
      params["w1"], params["b1"], params["w2"], params["b2"],
      params["ln2_g"], params["ln2_b"],
      params["fc_w"], params["fc_b"],
      params["crf_trans"], params["crf_start"], params["crf_end"])

    return emis2d.reshape(b, l, T), loss[0, 0]


if __name__ == "__main__":
    key = jax.random.PRNGKey(0)
    pkey, ikey, tkey = jax.random.split(key, 3)
    params = init_params(pkey)

    ids = jax.random.randint(ikey, (B, L), 0, VOCAB, dtype=jnp.int32)
    token_type_ids = jnp.zeros((B, L), jnp.int32)
    target_tags = jax.random.randint(tkey, (B, L), 0, T, dtype=jnp.int32)
    # contiguous-prefix attention mask; first timestep must be on (torchcrf requirement)
    lengths = jnp.array([L, L - 3], jnp.int32)
    mask = (jnp.arange(L)[None, :] < lengths[:, None]).astype(jnp.int32)

    fwd = jax.jit(bert_crf_forward)
    emissions, loss = fwd(params, ids, mask, token_type_ids, target_tags)
    jax.block_until_ready((emissions, loss))
    assert emissions.shape == (B, L, T) and loss.shape == ()
    assert bool(jnp.isfinite(loss))
    print("KERNEL_OK")
</pallas_src>

<mosaic_0001>
module attributes {stable_mosaic.version = 11 : i64} {
  func.func @_bert_crf_kernel(%arg0: memref<16x1xi32, #tpu.memory_space<vmem>>, %arg1: memref<16x1xi32, #tpu.memory_space<vmem>>, %arg2: memref<2x8xf32, #tpu.memory_space<vmem>>, %arg3: memref<2x8xi32, #tpu.memory_space<vmem>>, %arg4: memref<50x32xf32, #tpu.memory_space<vmem>>, %arg5: memref<16x32xf32, #tpu.memory_space<vmem>>, %arg6: memref<2x32xf32, #tpu.memory_space<vmem>>, %arg7: memref<1x32xf32, #tpu.memory_space<vmem>>, %arg8: memref<1x32xf32, #tpu.memory_space<vmem>>, %arg9: memref<2x32x96xf32, #tpu.memory_space<vmem>>, %arg10: memref<2x1x96xf32, #tpu.memory_space<vmem>>, %arg11: memref<2x32x32xf32, #tpu.memory_space<vmem>>, %arg12: memref<2x1x32xf32, #tpu.memory_space<vmem>>, %arg13: memref<2x1x32xf32, #tpu.memory_space<vmem>>, %arg14: memref<2x1x32xf32, #tpu.memory_space<vmem>>, %arg15: memref<2x32x64xf32, #tpu.memory_space<vmem>>, %arg16: memref<2x1x64xf32, #tpu.memory_space<vmem>>, %arg17: memref<2x64x32xf32, #tpu.memory_space<vmem>>, %arg18: memref<2x1x32xf32, #tpu.memory_space<vmem>>, %arg19: memref<2x1x32xf32, #tpu.memory_space<vmem>>, %arg20: memref<2x1x32xf32, #tpu.memory_space<vmem>>, %arg21: memref<32x5xf32, #tpu.memory_space<vmem>>, %arg22: memref<1x5xf32, #tpu.memory_space<vmem>>, %arg23: memref<5x5xf32, #tpu.memory_space<vmem>>, %arg24: memref<1x5xf32, #tpu.memory_space<vmem>>, %arg25: memref<1x5xf32, #tpu.memory_space<vmem>>, %arg26: memref<16x5xf32, #tpu.memory_space<vmem>>, %arg27: memref<1x1xf32, #tpu.memory_space<vmem>>, %arg28: memref<16x32xf32, #tpu.memory_space<vmem>>) attributes {dimension_semantics = [], scalar_prefetch = 0 : i64, scratch_operands = 1 : i64, tpu.core_type = #tpu.core_type<tc>} {
    %c0 = arith.constant 0 : index
    %c0_0 = arith.constant 0 : index
    %0 = vector.load %arg0[%c0, %c0_0] : memref<16x1xi32, #tpu.memory_space<vmem>>, vector<16x1xi32>
    %c0_1 = arith.constant 0 : index
    %c0_2 = arith.constant 0 : index
    %1 = vector.load %arg1[%c0_1, %c0_2] : memref<16x1xi32, #tpu.memory_space<vmem>>, vector<16x1xi32>
    %2 = tpu.iota {dimensions = array<i32: 1>} : vector<16x50xi32>
    %3 = tpu.iota {dimensions = array<i32: 1>} : vector<16x2xi32>
    %4 = vector.broadcast %0 : vector<16x1xi32> to vector<16x50xi32>
    %5 = arith.cmpi eq, %2, %4 : vector<16x50xi32>
    %6 = arith.extui %5 : vector<16x50xi1> to vector<16x50xi32>
    %7 = arith.sitofp %6 : vector<16x50xi32> to vector<16x50xf32>
    %c0_3 = arith.constant 0 : index
    %c0_4 = arith.constant 0 : index
    %8 = vector.load %arg4[%c0_3, %c0_4] : memref<50x32xf32, #tpu.memory_space<vmem>>, vector<50x32xf32>
    %cst = arith.constant dense<0.000000e+00> : vector<16x32xf32>
    %9 = tpu.matmul %7, %8, %cst {dimension_numbers = #tpu.dot_dimension_numbers<[1], [0], [0], [1], [0, 0, 1, 1], [], []>} : vector<16x50xf32>, vector<50x32xf32>, vector<16x32xf32> -> vector<16x32xf32>
    %10 = vector.broadcast %1 : vector<16x1xi32> to vector<16x2xi32>
    %11 = arith.cmpi eq, %3, %10 : vector<16x2xi32>
    %12 = arith.extui %11 : vector<16x2xi1> to vector<16x2xi32>
    %13 = arith.sitofp %12 : vector<16x2xi32> to vector<16x2xf32>
    %c0_5 = arith.constant 0 : index
    %c0_6 = arith.constant 0 : index
    %14 = vector.load %arg6[%c0_5, %c0_6] : memref<2x32xf32, #tpu.memory_space<vmem>>, vector<2x32xf32>
    %cst_7 = arith.constant dense<0.000000e+00> : vector<16x32xf32>
    %15 = tpu.matmul %13, %14, %cst_7 {dimension_numbers = #tpu.dot_dimension_numbers<[1], [0], [0], [1], [0, 0, 1, 1], [], []>} : vector<16x2xf32>, vector<2x32xf32>, vector<16x32xf32> -> vector<16x32xf32>
    %16 = arith.addf %9, %15 : vector<16x32xf32>
    %c0_8 = arith.constant 0 : index
    %c0_9 = arith.constant 0 : index
    %17 = vector.load %arg5[%c0_8, %c0_9] : memref<16x32xf32, #tpu.memory_space<vmem>>, vector<16x32xf32>
    %18 = arith.addf %16, %17 : vector<16x32xf32>
    %c0_10 = arith.constant 0 : index
    %c0_11 = arith.constant 0 : index
    %19 = vector.load %arg7[%c0_10, %c0_11] : memref<1x32xf32, #tpu.memory_space<vmem>>, vector<1x32xf32>
    %c0_12 = arith.constant 0 : index
    %c0_13 = arith.constant 0 : index
    %20 = vector.load %arg8[%c0_12, %c0_13] : memref<1x32xf32, #tpu.memory_space<vmem>>, vector<1x32xf32>
    %cst_14 = arith.constant dense<0.000000e+00> : vector<16xf32>
    %21 = vector.multi_reduction <add>, %18, %cst_14 [1] : vector<16x32xf32> to vector<16xf32>
    %22 = vector.shape_cast %21 : vector<16xf32> to vector<16x1xf32>
    %cst_15 = arith.constant 3.200000e+01 : f32
    %23 = vector.broadcast %cst_15 : f32 to vector<16x1xf32>
    %24 = arith.divf %22, %23 : vector<16x1xf32>
    %25 = vector.broadcast %24 : vector<16x1xf32> to vector<16x32xf32>
    %26 = arith.subf %18, %25 : vector<16x32xf32>
    %27 = arith.mulf %26, %26 : vector<16x32xf32>
    %cst_16 = arith.constant dense<0.000000e+00> : vector<16xf32>
    %28 = vector.multi_reduction <add>, %27, %cst_16 [1] : vector<16x32xf32> to vector<16xf32>
    %29 = vector.shape_cast %28 : vector<16xf32> to vector<16x1xf32>
    %cst_17 = arith.constant 3.200000e+01 : f32
    %30 = vector.broadcast %cst_17 : f32 to vector<16x1xf32>
    %31 = arith.divf %29, %30 : vector<16x1xf32>
    %32 = vector.broadcast %24 : vector<16x1xf32> to vector<16x32xf32>
    %33 = arith.subf %18, %32 : vector<16x32xf32>
    %cst_18 = arith.constant 9.99999996E-13 : f32
    %34 = vector.broadcast %cst_18 : f32 to vector<16x1xf32>
    %35 = arith.addf %31, %34 : vector<16x1xf32>
    %36 = math.rsqrt %35 : vector<16x1xf32>
    %37 = vector.broadcast %36 : vector<16x1xf32> to vector<16x32xf32>
    %38 = arith.mulf %33, %37 : vector<16x32xf32>
    %39 = vector.broadcast %19 : vector<1x32xf32> to vector<16x32xf32>
    %40 = arith.mulf %38, %39 : vector<16x32xf32>
    %41 = vector.broadcast %20 : vector<1x32xf32> to vector<16x32xf32>
    %42 = arith.addf %40, %41 : vector<16x32xf32>
    %c0_19 = arith.constant 0 : index
    %c0_20 = arith.constant 0 : index
    %43 = vector.load %arg2[%c0_19, %c0_20] : memref<2x8xf32, #tpu.memory_space<vmem>>, vector<2x8xf32>
    %cst_21 = arith.constant 1.000000e+00 : f32
    %44 = vector.broadcast %cst_21 : f32 to vector<2x8xf32>
    %45 = arith.subf %44, %43 : vector<2x8xf32>
    %cst_22 = arith.constant -1.000000e+09 : f32
    %46 = vector.broadcast %cst_22 : f32 to vector<2x8xf32>
    %47 = arith.mulf %45, %46 : vector<2x8xf32>
    %c0_23 = arith.constant 0 : index
    %c0_24 = arith.constant 0 : index
    %c0_25 = arith.constant 0 : index
    %48 = vector.load %arg9[%c0_23, %c0_24, %c0_25] : memref<2x32x96xf32, #tpu.memory_space<vmem>>, vector<1x32x96xf32>
    %49 = vector.shape_cast %48 : vector<1x32x96xf32> to vector<32x96xf32>
    %cst_26 = arith.constant dense<0.000000e+00> : vector<16x96xf32>
    %50 = tpu.matmul %42, %49, %cst_26 {dimension_numbers = #tpu.dot_dimension_numbers<[1], [0], [0], [1], [0, 0, 1, 1], [], []>} : vector<16x32xf32>, vector<32x96xf32>, vector<16x96xf32> -> vector<16x96xf32>
    %c0_27 = arith.constant 0 : index
    %c0_28 = arith.constant 0 : index
    %c0_29 = arith.constant 0 : index
    %51 = vector.load %arg10[%c0_27, %c0_28, %c0_29] : memref<2x1x96xf32, #tpu.memory_space<vmem>>, vector<1x1x96xf32>
    %52 = vector.shape_cast %51 : vector<1x1x96xf32> to vector<1x96xf32>
    %53 = vector.broadcast %52 : vector<1x96xf32> to vector<16x96xf32>
    %54 = arith.addf %50, %53 : vector<16x96xf32>
    %55 = vector.extract_strided_slice %47 {offsets = [0, 0], sizes = [1, 8], strides = [1, 1]} : vector<2x8xf32> to vector<1x8xf32>
    %56 = vector.extract_strided_slice %54 {offsets = [0, 0], sizes = [8, 16], strides = [1, 1]} : vector<16x96xf32> to vector<8x16xf32>
    %57 = vector.extract_strided_slice %54 {offsets = [0, 32], sizes = [8, 16], strides = [1, 1]} : vector<16x96xf32> to vector<8x16xf32>
    %58 = vector.extract_strided_slice %54 {offsets = [0, 64], sizes = [8, 16], strides = [1, 1]} : vector<16x96xf32> to vector<8x16xf32>
    %cst_30 = arith.constant dense<0.000000e+00> : vector<8x8xf32>
    %59 = tpu.matmul %56, %57, %cst_30 {dimension_numbers = #tpu.dot_dimension_numbers<[1], [1], [0], [0], [0, 0, 1, 0], [], []>} : vector<8x16xf32>, vector<8x16xf32>, vector<8x8xf32> -> vector<8x8xf32>
    %cst_31 = arith.constant 2.500000e-01 : f32
    %60 = vector.broadcast %cst_31 : f32 to vector<8x8xf32>
    %61 = arith.mulf %59, %60 : vector<8x8xf32>
    %62 = vector.broadcast %55 : vector<1x8xf32> to vector<8x8xf32>
    %63 = arith.addf %61, %62 : vector<8x8xf32>
    %cst_32 = arith.constant dense<0xFF800000> : vector<8xf32>
    %64 = vector.multi_reduction <maximumf>, %63, %cst_32 [1] : vector<8x8xf32> to vector<8xf32>
    %65 = vector.shape_cast %64 : vector<8xf32> to vector<8x1xf32>
    %66 = vector.broadcast %65 : vector<8x1xf32> to vector<8x8xf32>
    %67 = arith.subf %63, %66 : vector<8x8xf32>
    %68 = math.exp %67 : vector<8x8xf32>
    %cst_33 = arith.constant dense<0.000000e+00> : vector<8xf32>
    %69 = vector.multi_reduction <add>, %68, %cst_33 [1] : vector<8x8xf32> to vector<8xf32>
    %70 = vector.shape_cast %69 : vector<8xf32> to vector<8x1xf32>
    %71 = vector.broadcast %70 : vector<8x1xf32> to vector<8x8xf32>
    %72 = arith.divf %68, %71 : vector<8x8xf32>
    %cst_34 = arith.constant dense<0.000000e+00> : vector<8x16xf32>
    %73 = tpu.matmul %72, %58, %cst_34 {dimension_numbers = #tpu.dot_dimension_numbers<[1], [0], [0], [1], [0, 0, 1, 1], [], []>} : vector<8x8xf32>, vector<8x16xf32>, vector<8x16xf32> -> vector<8x16xf32>
    %c0_35 = arith.constant 0 : index
    %c0_36 = arith.constant 0 : index
    %74 = vector.load %arg28[%c0_35, %c0_36] : memref<16x32xf32, #tpu.memory_space<vmem>>, vector<8x16xf32>
    tpu.vector_store %arg28[%c0_35, %c0_36], %73 {strides = array<i32>} : memref<16x32xf32, #tpu.memory_space<vmem>>, vector<8x16xf32>,
    %75 = vector.extract_strided_slice %54 {offsets = [0, 16], sizes = [8, 16], strides = [1, 1]} : vector<16x96xf32> to vector<8x16xf32>
    %76 = vector.extract_strided_slice %54 {offsets = [0, 48], sizes = [8, 16], strides = [1, 1]} : vector<16x96xf32> to vector<8x16xf32>
    %77 = vector.extract_strided_slice %54 {offsets = [0, 80], sizes = [8, 16], strides = [1, 1]} : vector<16x96xf32> to vector<8x16xf32>
    %cst_37 = arith.constant dense<0.000000e+00> : vector<8x8xf32>
    %78 = tpu.matmul %75, %76, %cst_37 {dimension_numbers = #tpu.dot_dimension_numbers<[1], [1], [0], [0], [0, 0, 1, 0], [], []>} : vector<8x16xf32>, vector<8x16xf32>, vector<8x8xf32> -> vector<8x8xf32>
    %cst_38 = arith.constant 2.500000e-01 : f32
    %79 = vector.broadcast %cst_38 : f32 to vector<8x8xf32>
    %80 = arith.mulf %78, %79 : vector<8x8xf32>
    %81 = vector.broadcast %55 : vector<1x8xf32> to vector<8x8xf32>
    %82 = arith.addf %80, %81 : vector<8x8xf32>
    %cst_39 = arith.constant dense<0xFF800000> : vector<8xf32>
    %83 = vector.multi_reduction <maximumf>, %82, %cst_39 [1] : vector<8x8xf32> to vector<8xf32>
    %84 = vector.shape_cast %83 : vector<8xf32> to vector<8x1xf32>
    %85 = vector.broadcast %84 : vector<8x1xf32> to vector<8x8xf32>
    %86 = arith.subf %82, %85 : vector<8x8xf32>
    %87 = math.exp %86 : vector<8x8xf32>
    %cst_40 = arith.constant dense<0.000000e+00> : vector<8xf32>
    %88 = vector.multi_reduction <add>, %87, %cst_40 [1] : vector<8x8xf32> to vector<8xf32>
    %89 = vector.shape_cast %88 : vector<8xf32> to vector<8x1xf32>
    %90 = vector.broadcast %89 : vector<8x1xf32> to vector<8x8xf32>
    %91 = arith.divf %87, %90 : vector<8x8xf32>
    %cst_41 = arith.constant dense<0.000000e+00> : vector<8x16xf32>
    %92 = tpu.matmul %91, %77, %cst_41 {dimension_numbers = #tpu.dot_dimension_numbers<[1], [0], [0], [1], [0, 0, 1, 1], [], []>} : vector<8x8xf32>, vector<8x16xf32>, vector<8x16xf32> -> vector<8x16xf32>
    %c0_42 = arith.constant 0 : index
    %c16 = arith.constant 16 : index
    %93 = vector.load %arg28[%c0_42, %c16] : memref<16x32xf32, #tpu.memory_space<vmem>>, vector<8x16xf32>
    tpu.vector_store %arg28[%c0_42, %c16], %92 {strides = array<i32>} : memref<16x32xf32, #tpu.memory_space<vmem>>, vector<8x16xf32>,
    %94 = vector.extract_strided_slice %47 {offsets = [1, 0], sizes = [1, 8], strides = [1, 1]} : vector<2x8xf32> to vector<1x8xf32>
    %95 = vector.extract_strided_slice %54 {offsets = [8, 0], sizes = [8, 16], strides = [1, 1]} : vector<16x96xf32> to vector<8x16xf32>
    %96 = vector.extract_strided_slice %54 {offsets = [8, 32], sizes = [8, 16], strides = [1, 1]} : vector<16x96xf32> to vector<8x16xf32>
    %97 = vector.extract_strided_slice %54 {offsets = [8, 64], sizes = [8, 16], strides = [1, 1]} : vector<16x96xf32> to vector<8x16xf32>
    %cst_43 = arith.constant dense<0.000000e+00> : vector<8x8xf32>
    %98 = tpu.matmul %95, %96, %cst_43 {dimension_numbers = #tpu.dot_dimension_numbers<[1], [1], [0], [0], [0, 0, 1, 0], [], []>} : vector<8x16xf32>, vector<8x16xf32>, vector<8x8xf32> -> vector<8x8xf32>
    %cst_44 = arith.constant 2.500000e-01 : f32
    %99 = vector.broadcast %cst_44 : f32 to vector<8x8xf32>
    %100 = arith.mulf %98, %99 : vector<8x8xf32>
    %101 = vector.broadcast %94 : vector<1x8xf32> to vector<8x8xf32>
    %102 = arith.addf %100, %101 : vector<8x8xf32>
    %cst_45 = arith.constant dense<0xFF800000> : vector<8xf32>
    %103 = vector.multi_reduction <maximumf>, %102, %cst_45 [1] : vector<8x8xf32> to vector<8xf32>
    %104 = vector.shape_cast %103 : vector<8xf32> to vector<8x1xf32>
    %105 = vector.broadcast %104 : vector<8x1xf32> to vector<8x8xf32>
    %106 = arith.subf %102, %105 : vector<8x8xf32>
    %107 = math.exp %106 : vector<8x8xf32>
    %cst_46 = arith.constant dense<0.000000e+00> : vector<8xf32>
    %108 = vector.multi_reduction <add>, %107, %cst_46 [1] : vector<8x8xf32> to vector<8xf32>
    %109 = vector.shape_cast %108 : vector<8xf32> to vector<8x1xf32>
    %110 = vector.broadcast %109 : vector<8x1xf32> to vector<8x8xf32>
    %111 = arith.divf %107, %110 : vector<8x8xf32>
    %cst_47 = arith.constant dense<0.000000e+00> : vector<8x16xf32>
    %112 = tpu.matmul %111, %97, %cst_47 {dimension_numbers = #tpu.dot_dimension_numbers<[1], [0], [0], [1], [0, 0, 1, 1], [], []>} : vector<8x8xf32>, vector<8x16xf32>, vector<8x16xf32> -> vector<8x16xf32>
    %c8 = arith.constant 8 : index
    %c0_48 = arith.constant 0 : index
    %113 = vector.load %arg28[%c8, %c0_48] : memref<16x32xf32, #tpu.memory_space<vmem>>, vector<8x16xf32>
    tpu.vector_store %arg28[%c8, %c0_48], %112 {strides = array<i32>} : memref<16x32xf32, #tpu.memory_space<vmem>>, vector<8x16xf32>,
    %114 = vector.extract_strided_slice %54 {offsets = [8, 16], sizes = [8, 16], strides = [1, 1]} : vector<16x96xf32> to vector<8x16xf32>
    %115 = vector.extract_strided_slice %54 {offsets = [8, 48], sizes = [8, 16], strides = [1, 1]} : vector<16x96xf32> to vector<8x16xf32>
    %116 = vector.extract_strided_slice %54 {offsets = [8, 80], sizes = [8, 16], strides = [1, 1]} : vector<16x96xf32> to vector<8x16xf32>
    %cst_49 = arith.constant dense<0.000000e+00> : vector<8x8xf32>
    %117 = tpu.matmul %114, %115, %cst_49 {dimension_numbers = #tpu.dot_dimension_numbers<[1], [1], [0], [0], [0, 0, 1, 0], [], []>} : vector<8x16xf32>, vector<8x16xf32>, vector<8x8xf32> -> vector<8x8xf32>
    %cst_50 = arith.constant 2.500000e-01 : f32
    %118 = vector.broadcast %cst_50 : f32 to vector<8x8xf32>
    %119 = arith.mulf %117, %118 : vector<8x8xf32>
    %120 = vector.broadcast %94 : vector<1x8xf32> to vector<8x8xf32>
    %121 = arith.addf %119, %120 : vector<8x8xf32>
    %cst_51 = arith.constant dense<0xFF800000> : vector<8xf32>
    %122 = vector.multi_reduction <maximumf>, %121, %cst_51 [1] : vector<8x8xf32> to vector<8xf32>
    %123 = vector.shape_cast %122 : vector<8xf32> to vector<8x1xf32>
    %124 = vector.broadcast %123 : vector<8x1xf32> to vector<8x8xf32>
    %125 = arith.subf %121, %124 : vector<8x8xf32>
    %126 = math.exp %125 : vector<8x8xf32>
    %cst_52 = arith.constant dense<0.000000e+00> : vector<8xf32>
    %127 = vector.multi_reduction <add>, %126, %cst_52 [1] : vector<8x8xf32> to vector<8xf32>
    %128 = vector.shape_cast %127 : vector<8xf32> to vector<8x1xf32>
    %129 = vector.broadcast %128 : vector<8x1xf32> to vector<8x8xf32>
    %130 = arith.divf %126, %129 : vector<8x8xf32>
    %cst_53 = arith.constant dense<0.000000e+00> : vector<8x16xf32>
    %131 = tpu.matmul %130, %116, %cst_53 {dimension_numbers = #tpu.dot_dimension_numbers<[1], [0], [0], [1], [0, 0, 1, 1], [], []>} : vector<8x8xf32>, vector<8x16xf32>, vector<8x16xf32> -> vector<8x16xf32>
    %c8_54 = arith.constant 8 : index
    %c16_55 = arith.constant 16 : index
    %132 = vector.load %arg28[%c8_54, %c16_55] : memref<16x32xf32, #tpu.memory_space<vmem>>, vector<8x16xf32>
    tpu.vector_store %arg28[%c8_54, %c16_55], %131 {strides = array<i32>} : memref<16x32xf32, #tpu.memory_space<vmem>>, vector<8x16xf32>,
    %c0_56 = arith.constant 0 : index
    %c0_57 = arith.constant 0 : index
    %133 = vector.load %arg28[%c0_56, %c0_57] : memref<16x32xf32, #tpu.memory_space<vmem>>, vector<16x32xf32>
    %c0_58 = arith.constant 0 : index
    %c0_59 = arith.constant 0 : index
    %c0_60 = arith.constant 0 : index
    %134 = vector.load %arg11[%c0_58, %c0_59, %c0_60] : memref<2x32x32xf32, #tpu.memory_space<vmem>>, vector<1x32x32xf32>
    %135 = vector.shape_cast %134 : vector<1x32x32xf32> to vector<32x32xf32>
    %cst_61 = arith.constant dense<0.000000e+00> : vector<16x32xf32>
    %136 = tpu.matmul %133, %135, %cst_61 {dimension_numbers = #tpu.dot_dimension_numbers<[1], [0], [0], [1], [0, 0, 1, 1], [], []>} : vector<16x32xf32>, vector<32x32xf32>, vector<16x32xf32> -> vector<16x32xf32>
    %c0_62 = arith.constant 0 : index
    %c0_63 = arith.constant 0 : index
    %c0_64 = arith.constant 0 : index
    %137 = vector.load %arg12[%c0_62, %c0_63, %c0_64] : memref<2x1x32xf32, #tpu.memory_space<vmem>>, vector<1x1x32xf32>
    %138 = vector.shape_cast %137 : vector<1x1x32xf32> to vector<1x32xf32>
    %139 = vector.broadcast %138 : vector<1x32xf32> to vector<16x32xf32>
    %140 = arith.addf %136, %139 : vector<16x32xf32>
    %141 = arith.addf %140, %42 : vector<16x32xf32>
    %c0_65 = arith.constant 0 : index
    %c0_66 = arith.constant 0 : index
    %c0_67 = arith.constant 0 : index
    %142 = vector.load %arg13[%c0_65, %c0_66, %c0_67] : memref<2x1x32xf32, #tpu.memory_space<vmem>>, vector<1x1x32xf32>
    %143 = vector.shape_cast %142 : vector<1x1x32xf32> to vector<1x32xf32>
    %c0_68 = arith.constant 0 : index
    %c0_69 = arith.constant 0 : index
    %c0_70 = arith.constant 0 : index
    %144 = vector.load %arg14[%c0_68, %c0_69, %c0_70] : memref<2x1x32xf32, #tpu.memory_space<vmem>>, vector<1x1x32xf32>
    %145 = vector.shape_cast %144 : vector<1x1x32xf32> to vector<1x32xf32>
    %cst_71 = arith.constant dense<0.000000e+00> : vector<16xf32>
    %146 = vector.multi_reduction <add>, %141, %cst_71 [1] : vector<16x32xf32> to vector<16xf32>
    %147 = vector.shape_cast %146 : vector<16xf32> to vector<16x1xf32>
    %cst_72 = arith.constant 3.200000e+01 : f32
    %148 = vector.broadcast %cst_72 : f32 to vector<16x1xf32>
    %149 = arith.divf %147, %148 : vector<16x1xf32>
    %150 = vector.broadcast %149 : vector<16x1xf32> to vector<16x32xf32>
    %151 = arith.subf %141, %150 : vector<16x32xf32>
    %152 = arith.mulf %151, %151 : vector<16x32xf32>
    %cst_73 = arith.constant dense<0.000000e+00> : vector<16xf32>
    %153 = vector.multi_reduction <add>, %152, %cst_73 [1] : vector<16x32xf32> to vector<16xf32>
    %154 = vector.shape_cast %153 : vector<16xf32> to vector<16x1xf32>
    %cst_74 = arith.constant 3.200000e+01 : f32
    %155 = vector.broadcast %cst_74 : f32 to vector<16x1xf32>
    %156 = arith.divf %154, %155 : vector<16x1xf32>
    %157 = vector.broadcast %149 : vector<16x1xf32> to vector<16x32xf32>
    %158 = arith.subf %141, %157 : vector<16x32xf32>
    %cst_75 = arith.constant 9.99999996E-13 : f32
    %159 = vector.broadcast %cst_75 : f32 to vector<16x1xf32>
    %160 = arith.addf %156, %159 : vector<16x1xf32>
    %161 = math.rsqrt %160 : vector<16x1xf32>
    %162 = vector.broadcast %161 : vector<16x1xf32> to vector<16x32xf32>
    %163 = arith.mulf %158, %162 : vector<16x32xf32>
    %164 = vector.broadcast %143 : vector<1x32xf32> to vector<16x32xf32>
    %165 = arith.mulf %163, %164 : vector<16x32xf32>
    %166 = vector.broadcast %145 : vector<1x32xf32> to vector<16x32xf32>
    %167 = arith.addf %165, %166 : vector<16x32xf32>
    %c0_76 = arith.constant 0 : index
    %c0_77 = arith.constant 0 : index
    %c0_78 = arith.constant 0 : index
    %168 = vector.load %arg15[%c0_76, %c0_77, %c0_78] : memref<2x32x64xf32, #tpu.memory_space<vmem>>, vector<1x32x64xf32>
    %169 = vector.shape_cast %168 : vector<1x32x64xf32> to vector<32x64xf32>
    %cst_79 = arith.constant dense<0.000000e+00> : vector<16x64xf32>
    %170 = tpu.matmul %167, %169, %cst_79 {dimension_numbers = #tpu.dot_dimension_numbers<[1], [0], [0], [1], [0, 0, 1, 1], [], []>} : vector<16x32xf32>, vector<32x64xf32>, vector<16x64xf32> -> vector<16x64xf32>
    %c0_80 = arith.constant 0 : index
    %c0_81 = arith.constant 0 : index
    %c0_82 = arith.constant 0 : index
    %171 = vector.load %arg16[%c0_80, %c0_81, %c0_82] : memref<2x1x64xf32, #tpu.memory_space<vmem>>, vector<1x1x64xf32>
    %172 = vector.shape_cast %171 : vector<1x1x64xf32> to vector<1x64xf32>
    %173 = vector.broadcast %172 : vector<1x64xf32> to vector<16x64xf32>
    %174 = arith.addf %170, %173 : vector<16x64xf32>
    %175 = arith.mulf %174, %174 : vector<16x64xf32>
    %176 = arith.mulf %174, %175 : vector<16x64xf32>
    %cst_83 = arith.constant 4.471500e-02 : f32
    %177 = vector.broadcast %cst_83 : f32 to vector<16x64xf32>
    %178 = arith.mulf %177, %176 : vector<16x64xf32>
    %179 = arith.addf %174, %178 : vector<16x64xf32>
    %cst_84 = arith.constant 0.797884583 : f32
    %180 = vector.broadcast %cst_84 : f32 to vector<16x64xf32>
    %181 = arith.mulf %180, %179 : vector<16x64xf32>
    %182 = math.tanh %181 : vector<16x64xf32>
    %cst_85 = arith.constant 1.000000e+00 : f32
    %183 = vector.broadcast %cst_85 : f32 to vector<16x64xf32>
    %184 = arith.addf %183, %182 : vector<16x64xf32>
    %cst_86 = arith.constant 5.000000e-01 : f32
    %185 = vector.broadcast %cst_86 : f32 to vector<16x64xf32>
    %186 = arith.mulf %185, %184 : vector<16x64xf32>
    %187 = arith.mulf %174, %186 : vector<16x64xf32>
    %c0_87 = arith.constant 0 : index
    %c0_88 = arith.constant 0 : index
    %c0_89 = arith.constant 0 : index
    %188 = vector.load %arg17[%c0_87, %c0_88, %c0_89] : memref<2x64x32xf32, #tpu.memory_space<vmem>>, vector<1x64x32xf32>
    %189 = vector.shape_cast %188 : vector<1x64x32xf32> to vector<64x32xf32>
    %cst_90 = arith.constant dense<0.000000e+00> : vector<16x32xf32>
    %190 = tpu.matmul %187, %189, %cst_90 {dimension_numbers = #tpu.dot_dimension_numbers<[1], [0], [0], [1], [0, 0, 1, 1], [], []>} : vector<16x64xf32>, vector<64x32xf32>, vector<16x32xf32> -> vector<16x32xf32>
    %c0_91 = arith.constant 0 : index
    %c0_92 = arith.constant 0 : index
    %c0_93 = arith.constant 0 : index
    %191 = vector.load %arg18[%c0_91, %c0_92, %c0_93] : memref<2x1x32xf32, #tpu.memory_space<vmem>>, vector<1x1x32xf32>
    %192 = vector.shape_cast %191 : vector<1x1x32xf32> to vector<1x32xf32>
    %193 = vector.broadcast %192 : vector<1x32xf32> to vector<16x32xf32>
    %194 = arith.addf %190, %193 : vector<16x32xf32>
    %195 = arith.addf %194, %167 : vector<16x32xf32>
    %c0_94 = arith.constant 0 : index
    %c0_95 = arith.constant 0 : index
    %c0_96 = arith.constant 0 : index
    %196 = vector.load %arg19[%c0_94, %c0_95, %c0_96] : memref<2x1x32xf32, #tpu.memory_space<vmem>>, vector<1x1x32xf32>
    %197 = vector.shape_cast %196 : vector<1x1x32xf32> to vector<1x32xf32>
    %c0_97 = arith.constant 0 : index
    %c0_98 = arith.constant 0 : index
    %c0_99 = arith.constant 0 : index
    %198 = vector.load %arg20[%c0_97, %c0_98, %c0_99] : memref<2x1x32xf32, #tpu.memory_space<vmem>>, vector<1x1x32xf32>
    %199 = vector.shape_cast %198 : vector<1x1x32xf32> to vector<1x32xf32>
    %cst_100 = arith.constant dense<0.000000e+00> : vector<16xf32>
    %200 = vector.multi_reduction <add>, %195, %cst_100 [1] : vector<16x32xf32> to vector<16xf32>
    %201 = vector.shape_cast %200 : vector<16xf32> to vector<16x1xf32>
    %cst_101 = arith.constant 3.200000e+01 : f32
    %202 = vector.broadcast %cst_101 : f32 to vector<16x1xf32>
    %203 = arith.divf %201, %202 : vector<16x1xf32>
    %204 = vector.broadcast %203 : vector<16x1xf32> to vector<16x32xf32>
    %205 = arith.subf %195, %204 : vector<16x32xf32>
    %206 = arith.mulf %205, %205 : vector<16x32xf32>
    %cst_102 = arith.constant dense<0.000000e+00> : vector<16xf32>
    %207 = vector.multi_reduction <add>, %206, %cst_102 [1] : vector<16x32xf32> to vector<16xf32>
    %208 = vector.shape_cast %207 : vector<16xf32> to vector<16x1xf32>
    %cst_103 = arith.constant 3.200000e+01 : f32
    %209 = vector.broadcast %cst_103 : f32 to vector<16x1xf32>
    %210 = arith.divf %208, %209 : vector<16x1xf32>
    %211 = vector.broadcast %203 : vector<16x1xf32> to vector<16x32xf32>
    %212 = arith.subf %195, %211 : vector<16x32xf32>
    %cst_104 = arith.constant 9.99999996E-13 : f32
    %213 = vector.broadcast %cst_104 : f32 to vector<16x1xf32>
    %214 = arith.addf %210, %213 : vector<16x1xf32>
    %215 = math.rsqrt %214 : vector<16x1xf32>
    %216 = vector.broadcast %215 : vector<16x1xf32> to vector<16x32xf32>
    %217 = arith.mulf %212, %216 : vector<16x32xf32>
    %218 = vector.broadcast %197 : vector<1x32xf32> to vector<16x32xf32>
    %219 = arith.mulf %217, %218 : vector<16x32xf32>
    %220 = vector.broadcast %199 : vector<1x32xf32> to vector<16x32xf32>
    %221 = arith.addf %219, %220 : vector<16x32xf32>
    %c1 = arith.constant 1 : index
    %c0_105 = arith.constant 0 : index
    %c0_106 = arith.constant 0 : index
    %222 = vector.load %arg9[%c1, %c0_105, %c0_106] : memref<2x32x96xf32, #tpu.memory_space<vmem>>, vector<1x32x96xf32>
    %223 = vector.shape_cast %222 : vector<1x32x96xf32> to vector<32x96xf32>
    %cst_107 = arith.constant dense<0.000000e+00> : vector<16x96xf32>
    %224 = tpu.matmul %221, %223, %cst_107 {dimension_numbers = #tpu.dot_dimension_numbers<[1], [0], [0], [1], [0, 0, 1, 1], [], []>} : vector<16x32xf32>, vector<32x96xf32>, vector<16x96xf32> -> vector<16x96xf32>
    %c1_108 = arith.constant 1 : index
    %c0_109 = arith.constant 0 : index
    %c0_110 = arith.constant 0 : index
    %225 = vector.load %arg10[%c1_108, %c0_109, %c0_110] : memref<2x1x96xf32, #tpu.memory_space<vmem>>, vector<1x1x96xf32>
    %226 = vector.shape_cast %225 : vector<1x1x96xf32> to vector<1x96xf32>
    %227 = vector.broadcast %226 : vector<1x96xf32> to vector<16x96xf32>
    %228 = arith.addf %224, %227 : vector<16x96xf32>
    %229 = vector.extract_strided_slice %47 {offsets = [0, 0], sizes = [1, 8], strides = [1, 1]} : vector<2x8xf32> to vector<1x8xf32>
    %230 = vector.extract_strided_slice %228 {offsets = [0, 0], sizes = [8, 16], strides = [1, 1]} : vector<16x96xf32> to vector<8x16xf32>
    %231 = vector.extract_strided_slice %228 {offsets = [0, 32], sizes = [8, 16], strides = [1, 1]} : vector<16x96xf32> to vector<8x16xf32>
    %232 = vector.extract_strided_slice %228 {offsets = [0, 64], sizes = [8, 16], strides = [1, 1]} : vector<16x96xf32> to vector<8x16xf32>
    %cst_111 = arith.constant dense<0.000000e+00> : vector<8x8xf32>
    %233 = tpu.matmul %230, %231, %cst_111 {dimension_numbers = #tpu.dot_dimension_numbers<[1], [1], [0], [0], [0, 0, 1, 0], [], []>} : vector<8x16xf32>, vector<8x16xf32>, vector<8x8xf32> -> vector<8x8xf32>
    %cst_112 = arith.constant 2.500000e-01 : f32
    %234 = vector.broadcast %cst_112 : f32 to vector<8x8xf32>
    %235 = arith.mulf %233, %234 : vector<8x8xf32>
    %236 = vector.broadcast %229 : vector<1x8xf32> to vector<8x8xf32>
    %237 = arith.addf %235, %236 : vector<8x8xf32>
    %cst_113 = arith.constant dense<0xFF800000> : vector<8xf32>
    %238 = vector.multi_reduction <maximumf>, %237, %cst_113 [1] : vector<8x8xf32> to vector<8xf32>
    %239 = vector.shape_cast %238 : vector<8xf32> to vector<8x1xf32>
    %240 = vector.broadcast %239 : vector<8x1xf32> to vector<8x8xf32>
    %241 = arith.subf %237, %240 : vector<8x8xf32>
    %242 = math.exp %241 : vector<8x8xf32>
    %cst_114 = arith.constant dense<0.000000e+00> : vector<8xf32>
    %243 = vector.multi_reduction <add>, %242, %cst_114 [1] : vector<8x8xf32> to vector<8xf32>
    %244 = vector.shape_cast %243 : vector<8xf32> to vector<8x1xf32>
    %245 = vector.broadcast %244 : vector<8x1xf32> to vector<8x8xf32>
    %246 = arith.divf %242, %245 : vector<8x8xf32>
    %cst_115 = arith.constant dense<0.000000e+00> : vector<8x16xf32>
    %247 = tpu.matmul %246, %232, %cst_115 {dimension_numbers = #tpu.dot_dimension_numbers<[1], [0], [0], [1], [0, 0, 1, 1], [], []>} : vector<8x8xf32>, vector<8x16xf32>, vector<8x16xf32> -> vector<8x16xf32>
    %c0_116 = arith.constant 0 : index
    %c0_117 = arith.constant 0 : index
    %248 = vector.load %arg28[%c0_116, %c0_117] : memref<16x32xf32, #tpu.memory_space<vmem>>, vector<8x16xf32>
    tpu.vector_store %arg28[%c0_116, %c0_117], %247 {strides = array<i32>} : memref<16x32xf32, #tpu.memory_space<vmem>>, vector<8x16xf32>,
    %249 = vector.extract_strided_slice %228 {offsets = [0, 16], sizes = [8, 16], strides = [1, 1]} : vector<16x96xf32> to vector<8x16xf32>
    %250 = vector.extract_strided_slice %228 {offsets = [0, 48], sizes = [8, 16], strides = [1, 1]} : vector<16x96xf32> to vector<8x16xf32>
    %251 = vector.extract_strided_slice %228 {offsets = [0, 80], sizes = [8, 16], strides = [1, 1]} : vector<16x96xf32> to vector<8x16xf32>
    %cst_118 = arith.constant dense<0.000000e+00> : vector<8x8xf32>
    %252 = tpu.matmul %249, %250, %cst_118 {dimension_numbers = #tpu.dot_dimension_numbers<[1], [1], [0], [0], [0, 0, 1, 0], [], []>} : vector<8x16xf32>, vector<8x16xf32>, vector<8x8xf32> -> vector<8x8xf32>
    %cst_119 = arith.constant 2.500000e-01 : f32
    %253 = vector.broadcast %cst_119 : f32 to vector<8x8xf32>
    %254 = arith.mulf %252, %253 : vector<8x8xf32>
    %255 = vector.broadcast %229 : vector<1x8xf32> to vector<8x8xf32>
    %256 = arith.addf %254, %255 : vector<8x8xf32>
    %cst_120 = arith.constant dense<0xFF800000> : vector<8xf32>
    %257 = vector.multi_reduction <maximumf>, %256, %cst_120 [1] : vector<8x8xf32> to vector<8xf32>
    %258 = vector.shape_cast %257 : vector<8xf32> to vector<8x1xf32>
    %259 = vector.broadcast %258 : vector<8x1xf32> to vector<8x8xf32>
    %260 = arith.subf %256, %259 : vector<8x8xf32>
    %261 = math.exp %260 : vector<8x8xf32>
    %cst_121 = arith.constant dense<0.000000e+00> : vector<8xf32>
    %262 = vector.multi_reduction <add>, %261, %cst_121 [1] : vector<8x8xf32> to vector<8xf32>
    %263 = vector.shape_cast %262 : vector<8xf32> to vector<8x1xf32>
    %264 = vector.broadcast %263 : vector<8x1xf32> to vector<8x8xf32>
    %265 = arith.divf %261, %264 : vector<8x8xf32>
    %cst_122 = arith.constant dense<0.000000e+00> : vector<8x16xf32>
    %266 = tpu.matmul %265, %251, %cst_122 {dimension_numbers = #tpu.dot_dimension_numbers<[1], [0], [0], [1], [0, 0, 1, 1], [], []>} : vector<8x8xf32>, vector<8x16xf32>, vector<8x16xf32> -> vector<8x16xf32>
    %c0_123 = arith.constant 0 : index
    %c16_124 = arith.constant 16 : index
    %267 = vector.load %arg28[%c0_123, %c16_124] : memref<16x32xf32, #tpu.memory_space<vmem>>, vector<8x16xf32>
    tpu.vector_store %arg28[%c0_123, %c16_124], %266 {strides = array<i32>} : memref<16x32xf32, #tpu.memory_space<vmem>>, vector<8x16xf32>,
    %268 = vector.extract_strided_slice %47 {offsets = [1, 0], sizes = [1, 8], strides = [1, 1]} : vector<2x8xf32> to vector<1x8xf32>
    %269 = vector.extract_strided_slice %228 {offsets = [8, 0], sizes = [8, 16], strides = [1, 1]} : vector<16x96xf32> to vector<8x16xf32>
    %270 = vector.extract_strided_slice %228 {offsets = [8, 32], sizes = [8, 16], strides = [1, 1]} : vector<16x96xf32> to vector<8x16xf32>
    %271 = vector.extract_strided_slice %228 {offsets = [8, 64], sizes = [8, 16], strides = [1, 1]} : vector<16x96xf32> to vector<8x16xf32>
    %cst_125 = arith.constant dense<0.000000e+00> : vector<8x8xf32>
    %272 = tpu.matmul %269, %270, %cst_125 {dimension_numbers = #tpu.dot_dimension_numbers<[1], [1], [0], [0], [0, 0, 1, 0], [], []>} : vector<8x16xf32>, vector<8x16xf32>, vector<8x8xf32> -> vector<8x8xf32>
    %cst_126 = arith.constant 2.500000e-01 : f32
    %273 = vector.broadcast %cst_126 : f32 to vector<8x8xf32>
    %274 = arith.mulf %272, %273 : vector<8x8xf32>
    %275 = vector.broadcast %268 : vector<1x8xf32> to vector<8x8xf32>
    %276 = arith.addf %274, %275 : vector<8x8xf32>
    %cst_127 = arith.constant dense<0xFF800000> : vector<8xf32>
    %277 = vector.multi_reduction <maximumf>, %276, %cst_127 [1] : vector<8x8xf32> to vector<8xf32>
    %278 = vector.shape_cast %277 : vector<8xf32> to vector<8x1xf32>
    %279 = vector.broadcast %278 : vector<8x1xf32> to vector<8x8xf32>
    %280 = arith.subf %276, %279 : vector<8x8xf32>
    %281 = math.exp %280 : vector<8x8xf32>
    %cst_128 = arith.constant dense<0.000000e+00> : vector<8xf32>
    %282 = vector.multi_reduction <add>, %281, %cst_128 [1] : vector<8x8xf32> to vector<8xf32>
    %283 = vector.shape_cast %282 : vector<8xf32> to vector<8x1xf32>
    %284 = vector.broadcast %283 : vector<8x1xf32> to vector<8x8xf32>
    %285 = arith.divf %281, %284 : vector<8x8xf32>
    %cst_129 = arith.constant dense<0.000000e+00> : vector<8x16xf32>
    %286 = tpu.matmul %285, %271, %cst_129 {dimension_numbers = #tpu.dot_dimension_numbers<[1], [0], [0], [1], [0, 0, 1, 1], [], []>} : vector<8x8xf32>, vector<8x16xf32>, vector<8x16xf32> -> vector<8x16xf32>
    %c8_130 = arith.constant 8 : index
    %c0_131 = arith.constant 0 : index
    %287 = vector.load %arg28[%c8_130, %c0_131] : memref<16x32xf32, #tpu.memory_space<vmem>>, vector<8x16xf32>
    tpu.vector_store %arg28[%c8_130, %c0_131], %286 {strides = array<i32>} : memref<16x32xf32, #tpu.memory_space<vmem>>, vector<8x16xf32>,
    %288 = vector.extract_strided_slice %228 {offsets = [8, 16], sizes = [8, 16], strides = [1, 1]} : vector<16x96xf32> to vector<8x16xf32>
    %289 = vector.extract_strided_slice %228 {offsets = [8, 48], sizes = [8, 16], strides = [1, 1]} : vector<16x96xf32> to vector<8x16xf32>
    %290 = vector.extract_strided_slice %228 {offsets = [8, 80], sizes = [8, 16], strides = [1, 1]} : vector<16x96xf32> to vector<8x16xf32>
    %cst_132 = arith.constant dense<0.000000e+00> : vector<8x8xf32>
    %291 = tpu.matmul %288, %289, %cst_132 {dimension_numbers = #tpu.dot_dimension_numbers<[1], [1], [0], [0], [0, 0, 1, 0], [], []>} : vector<8x16xf32>, vector<8x16xf32>, vector<8x8xf32> -> vector<8x8xf32>
    %cst_133 = arith.constant 2.500000e-01 : f32
    %292 = vector.broadcast %cst_133 : f32 to vector<8x8xf32>
    %293 = arith.mulf %291, %292 : vector<8x8xf32>
    %294 = vector.broadcast %268 : vector<1x8xf32> to vector<8x8xf32>
    %295 = arith.addf %293, %294 : vector<8x8xf32>
    %cst_134 = arith.constant dense<0xFF800000> : vector<8xf32>
    %296 = vector.multi_reduction <maximumf>, %295, %cst_134 [1] : vector<8x8xf32> to vector<8xf32>
    %297 = vector.shape_cast %296 : vector<8xf32> to vector<8x1xf32>
    %298 = vector.broadcast %297 : vector<8x1xf32> to vector<8x8xf32>
    %299 = arith.subf %295, %298 : vector<8x8xf32>
    %300 = math.exp %299 : vector<8x8xf32>
    %cst_135 = arith.constant dense<0.000000e+00> : vector<8xf32>
    %301 = vector.multi_reduction <add>, %300, %cst_135 [1] : vector<8x8xf32> to vector<8xf32>
    %302 = vector.shape_cast %301 : vector<8xf32> to vector<8x1xf32>
    %303 = vector.broadcast %302 : vector<8x1xf32> to vector<8x8xf32>
    %304 = arith.divf %300, %303 : vector<8x8xf32>
    %cst_136 = arith.constant dense<0.000000e+00> : vector<8x16xf32>
    %305 = tpu.matmul %304, %290, %cst_136 {dimension_numbers = #tpu.dot_dimension_numbers<[1], [0], [0], [1], [0, 0, 1, 1], [], []>} : vector<8x8xf32>, vector<8x16xf32>, vector<8x16xf32> -> vector<8x16xf32>
    %c8_137 = arith.constant 8 : index
    %c16_138 = arith.constant 16 : index
    %306 = vector.load %arg28[%c8_137, %c16_138] : memref<16x32xf32, #tpu.memory_space<vmem>>, vector<8x16xf32>
    tpu.vector_store %arg28[%c8_137, %c16_138], %305 {strides = array<i32>} : memref<16x32xf32, #tpu.memory_space<vmem>>, vector<8x16xf32>,
    %c0_139 = arith.constant 0 : index
    %c0_140 = arith.constant 0 : index
    %307 = vector.load %arg28[%c0_139, %c0_140] : memref<16x32xf32, #tpu.memory_space<vmem>>, vector<16x32xf32>
    %c1_141 = arith.constant 1 : index
    %c0_142 = arith.constant 0 : index
    %c0_143 = arith.constant 0 : index
    %308 = vector.load %arg11[%c1_141, %c0_142, %c0_143] : memref<2x32x32xf32, #tpu.memory_space<vmem>>, vector<1x32x32xf32>
    %309 = vector.shape_cast %308 : vector<1x32x32xf32> to vector<32x32xf32>
    %cst_144 = arith.constant dense<0.000000e+00> : vector<16x32xf32>
    %310 = tpu.matmul %307, %309, %cst_144 {dimension_numbers = #tpu.dot_dimension_numbers<[1], [0], [0], [1], [0, 0, 1, 1], [], []>} : vector<16x32xf32>, vector<32x32xf32>, vector<16x32xf32> -> vector<16x32xf32>
    %c1_145 = arith.constant 1 : index
    %c0_146 = arith.constant 0 : index
    %c0_147 = arith.constant 0 : index
    %311 = vector.load %arg12[%c1_145, %c0_146, %c0_147] : memref<2x1x32xf32, #tpu.memory_space<vmem>>, vector<1x1x32xf32>
    %312 = vector.shape_cast %311 : vector<1x1x32xf32> to vector<1x32xf32>
    %313 = vector.broadcast %312 : vector<1x32xf32> to vector<16x32xf32>
    %314 = arith.addf %310, %313 : vector<16x32xf32>
    %315 = arith.addf %314, %221 : vector<16x32xf32>
    %c1_148 = arith.constant 1 : index
    %c0_149 = arith.constant 0 : index
    %c0_150 = arith.constant 0 : index
    %316 = vector.load %arg13[%c1_148, %c0_149, %c0_150] : memref<2x1x32xf32, #tpu.memory_space<vmem>>, vector<1x1x32xf32>
    %317 = vector.shape_cast %316 : vector<1x1x32xf32> to vector<1x32xf32>
    %c1_151 = arith.constant 1 : index
    %c0_152 = arith.constant 0 : index
    %c0_153 = arith.constant 0 : index
    %318 = vector.load %arg14[%c1_151, %c0_152, %c0_153] : memref<2x1x32xf32, #tpu.memory_space<vmem>>, vector<1x1x32xf32>
    %319 = vector.shape_cast %318 : vector<1x1x32xf32> to vector<1x32xf32>
    %cst_154 = arith.constant dense<0.000000e+00> : vector<16xf32>
    %320 = vector.multi_reduction <add>, %315, %cst_154 [1] : vector<16x32xf32> to vector<16xf32>
    %321 = vector.shape_cast %320 : vector<16xf32> to vector<16x1xf32>
    %cst_155 = arith.constant 3.200000e+01 : f32
    %322 = vector.broadcast %cst_155 : f32 to vector<16x1xf32>
    %323 = arith.divf %321, %322 : vector<16x1xf32>
    %324 = vector.broadcast %323 : vector<16x1xf32> to vector<16x32xf32>
    %325 = arith.subf %315, %324 : vector<16x32xf32>
    %326 = arith.mulf %325, %325 : vector<16x32xf32>
    %cst_156 = arith.constant dense<0.000000e+00> : vector<16xf32>
    %327 = vector.multi_reduction <add>, %326, %cst_156 [1] : vector<16x32xf32> to vector<16xf32>
    %328 = vector.shape_cast %327 : vector<16xf32> to vector<16x1xf32>
    %cst_157 = arith.constant 3.200000e+01 : f32
    %329 = vector.broadcast %cst_157 : f32 to vector<16x1xf32>
    %330 = arith.divf %328, %329 : vector<16x1xf32>
    %331 = vector.broadcast %323 : vector<16x1xf32> to vector<16x32xf32>
    %332 = arith.subf %315, %331 : vector<16x32xf32>
    %cst_158 = arith.constant 9.99999996E-13 : f32
    %333 = vector.broadcast %cst_158 : f32 to vector<16x1xf32>
    %334 = arith.addf %330, %333 : vector<16x1xf32>
    %335 = math.rsqrt %334 : vector<16x1xf32>
    %336 = vector.broadcast %335 : vector<16x1xf32> to vector<16x32xf32>
    %337 = arith.mulf %332, %336 : vector<16x32xf32>
    %338 = vector.broadcast %317 : vector<1x32xf32> to vector<16x32xf32>
    %339 = arith.mulf %337, %338 : vector<16x32xf32>
    %340 = vector.broadcast %319 : vector<1x32xf32> to vector<16x32xf32>
    %341 = arith.addf %339, %340 : vector<16x32xf32>
    %c1_159 = arith.constant 1 : index
    %c0_160 = arith.constant 0 : index
    %c0_161 = arith.constant 0 : index
    %342 = vector.load %arg15[%c1_159, %c0_160, %c0_161] : memref<2x32x64xf32, #tpu.memory_space<vmem>>, vector<1x32x64xf32>
    %343 = vector.shape_cast %342 : vector<1x32x64xf32> to vector<32x64xf32>
    %cst_162 = arith.constant dense<0.000000e+00> : vector<16x64xf32>
    %344 = tpu.matmul %341, %343, %cst_162 {dimension_numbers = #tpu.dot_dimension_numbers<[1], [0], [0], [1], [0, 0, 1, 1], [], []>} : vector<16x32xf32>, vector<32x64xf32>, vector<16x64xf32> -> vector<16x64xf32>
    %c1_163 = arith.constant 1 : index
    %c0_164 = arith.constant 0 : index
    %c0_165 = arith.constant 0 : index
    %345 = vector.load %arg16[%c1_163, %c0_164, %c0_165] : memref<2x1x64xf32, #tpu.memory_space<vmem>>, vector<1x1x64xf32>
    %346 = vector.shape_cast %345 : vector<1x1x64xf32> to vector<1x64xf32>
    %347 = vector.broadcast %346 : vector<1x64xf32> to vector<16x64xf32>
    %348 = arith.addf %344, %347 : vector<16x64xf32>
    %349 = arith.mulf %348, %348 : vector<16x64xf32>
    %350 = arith.mulf %348, %349 : vector<16x64xf32>
    %cst_166 = arith.constant 4.471500e-02 : f32
    %351 = vector.broadcast %cst_166 : f32 to vector<16x64xf32>
    %352 = arith.mulf %351, %350 : vector<16x64xf32>
    %353 = arith.addf %348, %352 : vector<16x64xf32>
    %cst_167 = arith.constant 0.797884583 : f32
    %354 = vector.broadcast %cst_167 : f32 to vector<16x64xf32>
    %355 = arith.mulf %354, %353 : vector<16x64xf32>
    %356 = math.tanh %355 : vector<16x64xf32>
    %cst_168 = arith.constant 1.000000e+00 : f32
    %357 = vector.broadcast %cst_168 : f32 to vector<16x64xf32>
    %358 = arith.addf %357, %356 : vector<16x64xf32>
    %cst_169 = arith.constant 5.000000e-01 : f32
    %359 = vector.broadcast %cst_169 : f32 to vector<16x64xf32>
    %360 = arith.mulf %359, %358 : vector<16x64xf32>
    %361 = arith.mulf %348, %360 : vector<16x64xf32>
    %c1_170 = arith.constant 1 : index
    %c0_171 = arith.constant 0 : index
    %c0_172 = arith.constant 0 : index
    %362 = vector.load %arg17[%c1_170, %c0_171, %c0_172] : memref<2x64x32xf32, #tpu.memory_space<vmem>>, vector<1x64x32xf32>
    %363 = vector.shape_cast %362 : vector<1x64x32xf32> to vector<64x32xf32>
    %cst_173 = arith.constant dense<0.000000e+00> : vector<16x32xf32>
    %364 = tpu.matmul %361, %363, %cst_173 {dimension_numbers = #tpu.dot_dimension_numbers<[1], [0], [0], [1], [0, 0, 1, 1], [], []>} : vector<16x64xf32>, vector<64x32xf32>, vector<16x32xf32> -> vector<16x32xf32>
    %c1_174 = arith.constant 1 : index
    %c0_175 = arith.constant 0 : index
    %c0_176 = arith.constant 0 : index
    %365 = vector.load %arg18[%c1_174, %c0_175, %c0_176] : memref<2x1x32xf32, #tpu.memory_space<vmem>>, vector<1x1x32xf32>
    %366 = vector.shape_cast %365 : vector<1x1x32xf32> to vector<1x32xf32>
    %367 = vector.broadcast %366 : vector<1x32xf32> to vector<16x32xf32>
    %368 = arith.addf %364, %367 : vector<16x32xf32>
    %369 = arith.addf %368, %341 : vector<16x32xf32>
    %c1_177 = arith.constant 1 : index
    %c0_178 = arith.constant 0 : index
    %c0_179 = arith.constant 0 : index
    %370 = vector.load %arg19[%c1_177, %c0_178, %c0_179] : memref<2x1x32xf32, #tpu.memory_space<vmem>>, vector<1x1x32xf32>
    %371 = vector.shape_cast %370 : vector<1x1x32xf32> to vector<1x32xf32>
    %c1_180 = arith.constant 1 : index
    %c0_181 = arith.constant 0 : index
    %c0_182 = arith.constant 0 : index
    %372 = vector.load %arg20[%c1_180, %c0_181, %c0_182] : memref<2x1x32xf32, #tpu.memory_space<vmem>>, vector<1x1x32xf32>
    %373 = vector.shape_cast %372 : vector<1x1x32xf32> to vector<1x32xf32>
    %cst_183 = arith.constant dense<0.000000e+00> : vector<16xf32>
    %374 = vector.multi_reduction <add>, %369, %cst_183 [1] : vector<16x32xf32> to vector<16xf32>
    %375 = vector.shape_cast %374 : vector<16xf32> to vector<16x1xf32>
    %cst_184 = arith.constant 3.200000e+01 : f32
    %376 = vector.broadcast %cst_184 : f32 to vector<16x1xf32>
    %377 = arith.divf %375, %376 : vector<16x1xf32>
    %378 = vector.broadcast %377 : vector<16x1xf32> to vector<16x32xf32>
    %379 = arith.subf %369, %378 : vector<16x32xf32>
    %380 = arith.mulf %379, %379 : vector<16x32xf32>
    %cst_185 = arith.constant dense<0.000000e+00> : vector<16xf32>
    %381 = vector.multi_reduction <add>, %380, %cst_185 [1] : vector<16x32xf32> to vector<16xf32>
    %382 = vector.shape_cast %381 : vector<16xf32> to vector<16x1xf32>
    %cst_186 = arith.constant 3.200000e+01 : f32
    %383 = vector.broadcast %cst_186 : f32 to vector<16x1xf32>
    %384 = arith.divf %382, %383 : vector<16x1xf32>
    %385 = vector.broadcast %377 : vector<16x1xf32> to vector<16x32xf32>
    %386 = arith.subf %369, %385 : vector<16x32xf32>
    %cst_187 = arith.constant 9.99999996E-13 : f32
    %387 = vector.broadcast %cst_187 : f32 to vector<16x1xf32>
    %388 = arith.addf %384, %387 : vector<16x1xf32>
    %389 = math.rsqrt %388 : vector<16x1xf32>
    %390 = vector.broadcast %389 : vector<16x1xf32> to vector<16x32xf32>
    %391 = arith.mulf %386, %390 : vector<16x32xf32>
    %392 = vector.broadcast %371 : vector<1x32xf32> to vector<16x32xf32>
    %393 = arith.mulf %391, %392 : vector<16x32xf32>
    %394 = vector.broadcast %373 : vector<1x32xf32> to vector<16x32xf32>
    %395 = arith.addf %393, %394 : vector<16x32xf32>
    %c0_188 = arith.constant 0 : index
    %c0_189 = arith.constant 0 : index
    %396 = vector.load %arg21[%c0_188, %c0_189] : memref<32x5xf32, #tpu.memory_space<vmem>>, vector<32x5xf32>
    %cst_190 = arith.constant dense<0.000000e+00> : vector<16x5xf32>
    %397 = tpu.matmul %395, %396, %cst_190 {dimension_numbers = #tpu.dot_dimension_numbers<[1], [0], [0], [1], [0, 0, 1, 1], [], []>} : vector<16x32xf32>, vector<32x5xf32>, vector<16x5xf32> -> vector<16x5xf32>
    %c0_191 = arith.constant 0 : index
    %c0_192 = arith.constant 0 : index
    %398 = vector.load %arg22[%c0_191, %c0_192] : memref<1x5xf32, #tpu.memory_space<vmem>>, vector<1x5xf32>
    %399 = vector.broadcast %398 : vector<1x5xf32> to vector<16x5xf32>
    %400 = arith.addf %397, %399 : vector<16x5xf32>
    %c0_193 = arith.constant 0 : index
    %c0_194 = arith.constant 0 : index
    %401 = vector.load %arg26[%c0_193, %c0_194] : memref<16x5xf32, #tpu.memory_space<vmem>>, vector<16x5xf32>
    tpu.vector_store %arg26[%c0_193, %c0_194], %400 {strides = array<i32>} : memref<16x5xf32, #tpu.memory_space<vmem>>, vector<16x5xf32>,
    %c0_195 = arith.constant 0 : index
    %c0_196 = arith.constant 0 : index
    %402 = vector.load %arg23[%c0_195, %c0_196] : memref<5x5xf32, #tpu.memory_space<vmem>>, vector<5x5xf32>
    %c0_197 = arith.constant 0 : index
    %c0_198 = arith.constant 0 : index
    %403 = vector.load %arg24[%c0_197, %c0_198] : memref<1x5xf32, #tpu.memory_space<vmem>>, vector<1x5xf32>
    %c0_199 = arith.constant 0 : index
    %c0_200 = arith.constant 0 : index
    %404 = vector.load %arg25[%c0_199, %c0_200] : memref<1x5xf32, #tpu.memory_space<vmem>>, vector<1x5xf32>
    %c0_201 = arith.constant 0 : index
    %c0_202 = arith.constant 0 : index
    %405 = vector.load %arg3[%c0_201, %c0_202] : memref<2x8xi32, #tpu.memory_space<vmem>>, vector<2x8xi32>
    %406 = tpu.iota {dimensions = array<i32: 1>} : vector<2x5xi32>
    %407 = tpu.iota {dimensions = array<i32: 1>} : vector<2x16xi32>
    %408 = tpu.iota {dimensions = array<i32: 0>} : vector<2x1xi32>
    %c8_i32 = arith.constant 8 : i32
    %409 = vector.broadcast %c8_i32 : i32 to vector<2x1xi32>
    %410 = arith.muli %409, %408 : vector<2x1xi32>
    %cst_203 = arith.constant dense<0xFF800000> : vector<5xf32>
    %411 = vector.multi_reduction <maximumf>, %402, %cst_203 [0] : vector<5x5xf32> to vector<5xf32>
    %412 = vector.shape_cast %411 : vector<5xf32> to vector<1x5xf32>
    %413 = vector.broadcast %412 : vector<1x5xf32> to vector<5x5xf32>
    %414 = arith.subf %402, %413 : vector<5x5xf32>
    %415 = math.exp %414 : vector<5x5xf32>
    %c0_i32 = arith.constant 0 : i32
    %416 = vector.broadcast %c0_i32 : i32 to vector<2x1xi32>
    %417 = arith.addi %410, %416 : vector<2x1xi32>
    %418 = vector.broadcast %417 : vector<2x1xi32> to vector<2x16xi32>
    %419 = arith.cmpi eq, %407, %418 : vector<2x16xi32>
    %420 = arith.extui %419 : vector<2x16xi1> to vector<2x16xi32>
    %421 = arith.sitofp %420 : vector<2x16xi32> to vector<2x16xf32>
    %cst_204 = arith.constant dense<0.000000e+00> : vector<2x5xf32>
    %422 = tpu.matmul %421, %400, %cst_204 {dimension_numbers = #tpu.dot_dimension_numbers<[1], [0], [0], [1], [0, 0, 1, 1], [], []>} : vector<2x16xf32>, vector<16x5xf32>, vector<2x5xf32> -> vector<2x5xf32>
    %423 = vector.extract_strided_slice %405 {offsets = [0, 0], sizes = [2, 1], strides = [1, 1]} : vector<2x8xi32> to vector<2x1xi32>
    %424 = vector.broadcast %423 : vector<2x1xi32> to vector<2x5xi32>
    %425 = arith.cmpi eq, %406, %424 : vector<2x5xi32>
    %426 = arith.extui %425 : vector<2x5xi1> to vector<2x5xi32>
    %427 = arith.sitofp %426 : vector<2x5xi32> to vector<2x5xf32>
    %428 = vector.broadcast %403 : vector<1x5xf32> to vector<2x5xf32>
    %429 = arith.addf %428, %422 : vector<2x5xf32>
    %430 = arith.mulf %429, %427 : vector<2x5xf32>
    %cst_205 = arith.constant dense<0.000000e+00> : vector<2xf32>
    %431 = vector.multi_reduction <add>, %430, %cst_205 [1] : vector<2x5xf32> to vector<2xf32>
    %432 = vector.shape_cast %431 : vector<2xf32> to vector<2x1xf32>
    %433 = vector.broadcast %403 : vector<1x5xf32> to vector<2x5xf32>
    %434 = arith.addf %433, %422 : vector<2x5xf32>
    %435 = vector.extract_strided_slice %43 {offsets = [0, 1], sizes = [2, 1], strides = [1, 1]} : vector<2x8xf32> to vector<2x1xf32>
    %cst_206 = arith.constant 0.000000e+00 : f32
    %436 = vector.broadcast %cst_206 : f32 to vector<2x1xf32>
    %437 = arith.cmpf ogt, %435, %436 : vector<2x1xf32>
    %438 = vector.extract_strided_slice %405 {offsets = [0, 1], sizes = [2, 1], strides = [1, 1]} : vector<2x8xi32> to vector<2x1xi32>
    %439 = vector.broadcast %438 : vector<2x1xi32> to vector<2x5xi32>
    %440 = arith.cmpi eq, %406, %439 : vector<2x5xi32>
    %441 = arith.extui %440 : vector<2x5xi1> to vector<2x5xi32>
    %442 = arith.sitofp %441 : vector<2x5xi32> to vector<2x5xf32>
    %c1_i32 = arith.constant 1 : i32
    %443 = vector.broadcast %c1_i32 : i32 to vector<2x1xi32>
    %444 = arith.addi %410, %443 : vector<2x1xi32>
    %445 = vector.broadcast %444 : vector<2x1xi32> to vector<2x16xi32>
    %446 = arith.cmpi eq, %407, %445 : vector<2x16xi32>
    %447 = arith.extui %446 : vector<2x16xi1> to vector<2x16xi32>
    %448 = arith.sitofp %447 : vector<2x16xi32> to vector<2x16xf32>
    %cst_207 = arith.constant dense<0.000000e+00> : vector<2x5xf32>
    %449 = tpu.matmul %448, %400, %cst_207 {dimension_numbers = #tpu.dot_dimension_numbers<[1], [0], [0], [1], [0, 0, 1, 1], [], []>} : vector<2x16xf32>, vector<16x5xf32>, vector<2x5xf32> -> vector<2x5xf32>
    %cst_208 = arith.constant dense<0.000000e+00> : vector<2x5xf32>
    %450 = tpu.matmul %427, %402, %cst_208 {dimension_numbers = #tpu.dot_dimension_numbers<[1], [0], [0], [1], [0, 0, 1, 1], [], []>} : vector<2x5xf32>, vector<5x5xf32>, vector<2x5xf32> -> vector<2x5xf32>
    %451 = arith.addf %450, %449 : vector<2x5xf32>
    %452 = arith.mulf %451, %442 : vector<2x5xf32>
    %cst_209 = arith.constant dense<0.000000e+00> : vector<2xf32>
    %453 = vector.multi_reduction <add>, %452, %cst_209 [1] : vector<2x5xf32> to vector<2xf32>
    %454 = vector.shape_cast %453 : vector<2xf32> to vector<2x1xf32>
    %455 = arith.mulf %435, %454 : vector<2x1xf32>
    %456 = arith.addf %432, %455 : vector<2x1xf32>
    %457 = vector.shape_cast %437 : vector<2x1xi1> to vector<2x1xi1>
    %458 = vector.broadcast %457 : vector<2x1xi1> to vector<2x5xi1>
    %459 = arith.select %458, %442, %427 : vector<2x5xi1>, vector<2x5xf32>
    %cst_210 = arith.constant dense<0xFF800000> : vector<2xf32>
    %460 = vector.multi_reduction <maximumf>, %434, %cst_210 [1] : vector<2x5xf32> to vector<2xf32>
    %461 = vector.shape_cast %460 : vector<2xf32> to vector<2x1xf32>
    %462 = vector.broadcast %461 : vector<2x1xf32> to vector<2x5xf32>
    %463 = arith.subf %434, %462 : vector<2x5xf32>
    %464 = math.exp %463 : vector<2x5xf32>
    %cst_211 = arith.constant dense<0.000000e+00> : vector<2x5xf32>
    %465 = tpu.matmul %464, %415, %cst_211 {dimension_numbers = #tpu.dot_dimension_numbers<[1], [0], [0], [1], [0, 0, 1, 1], [], []>} : vector<2x5xf32>, vector<5x5xf32>, vector<2x5xf32> -> vector<2x5xf32>
    %466 = vector.broadcast %461 : vector<2x1xf32> to vector<2x5xf32>
    %467 = arith.addf %449, %466 : vector<2x5xf32>
    %468 = vector.broadcast %412 : vector<1x5xf32> to vector<2x5xf32>
    %469 = arith.addf %467, %468 : vector<2x5xf32>
    %470 = math.log %465 : vector<2x5xf32>
    %471 = arith.addf %469, %470 : vector<2x5xf32>
    %472 = vector.shape_cast %437 : vector<2x1xi1> to vector<2x1xi1>
    %473 = vector.broadcast %472 : vector<2x1xi1> to vector<2x5xi1>
    %474 = arith.select %473, %471, %434 : vector<2x5xi1>, vector<2x5xf32>
    %475 = vector.extract_strided_slice %43 {offsets = [0, 2], sizes = [2, 1], strides = [1, 1]} : vector<2x8xf32> to vector<2x1xf32>
    %cst_212 = arith.constant 0.000000e+00 : f32
    %476 = vector.broadcast %cst_212 : f32 to vector<2x1xf32>
    %477 = arith.cmpf ogt, %475, %476 : vector<2x1xf32>
    %478 = vector.extract_strided_slice %405 {offsets = [0, 2], sizes = [2, 1], strides = [1, 1]} : vector<2x8xi32> to vector<2x1xi32>
    %479 = vector.broadcast %478 : vector<2x1xi32> to vector<2x5xi32>
    %480 = arith.cmpi eq, %406, %479 : vector<2x5xi32>
    %481 = arith.extui %480 : vector<2x5xi1> to vector<2x5xi32>
    %482 = arith.sitofp %481 : vector<2x5xi32> to vector<2x5xf32>
    %c2_i32 = arith.constant 2 : i32
    %483 = vector.broadcast %c2_i32 : i32 to vector<2x1xi32>
    %484 = arith.addi %410, %483 : vector<2x1xi32>
    %485 = vector.broadcast %484 : vector<2x1xi32> to vector<2x16xi32>
    %486 = arith.cmpi eq, %407, %485 : vector<2x16xi32>
    %487 = arith.extui %486 : vector<2x16xi1> to vector<2x16xi32>
    %488 = arith.sitofp %487 : vector<2x16xi32> to vector<2x16xf32>
    %cst_213 = arith.constant dense<0.000000e+00> : vector<2x5xf32>
    %489 = tpu.matmul %488, %400, %cst_213 {dimension_numbers = #tpu.dot_dimension_numbers<[1], [0], [0], [1], [0, 0, 1, 1], [], []>} : vector<2x16xf32>, vector<16x5xf32>, vector<2x5xf32> -> vector<2x5xf32>
    %cst_214 = arith.constant dense<0.000000e+00> : vector<2x5xf32>
    %490 = tpu.matmul %442, %402, %cst_214 {dimension_numbers = #tpu.dot_dimension_numbers<[1], [0], [0], [1], [0, 0, 1, 1], [], []>} : vector<2x5xf32>, vector<5x5xf32>, vector<2x5xf32> -> vector<2x5xf32>
    %491 = arith.addf %490, %489 : vector<2x5xf32>
    %492 = arith.mulf %491, %482 : vector<2x5xf32>
    %cst_215 = arith.constant dense<0.000000e+00> : vector<2xf32>
    %493 = vector.multi_reduction <add>, %492, %cst_215 [1] : vector<2x5xf32> to vector<2xf32>
    %494 = vector.shape_cast %493 : vector<2xf32> to vector<2x1xf32>
    %495 = arith.mulf %475, %494 : vector<2x1xf32>
    %496 = arith.addf %456, %495 : vector<2x1xf32>
    %497 = vector.shape_cast %477 : vector<2x1xi1> to vector<2x1xi1>
    %498 = vector.broadcast %497 : vector<2x1xi1> to vector<2x5xi1>
    %499 = arith.select %498, %482, %459 : vector<2x5xi1>, vector<2x5xf32>
    %cst_216 = arith.constant dense<0xFF800000> : vector<2xf32>
    %500 = vector.multi_reduction <maximumf>, %474, %cst_216 [1] : vector<2x5xf32> to vector<2xf32>
    %501 = vector.shape_cast %500 : vector<2xf32> to vector<2x1xf32>
    %502 = vector.broadcast %501 : vector<2x1xf32> to vector<2x5xf32>
    %503 = arith.subf %474, %502 : vector<2x5xf32>
    %504 = math.exp %503 : vector<2x5xf32>
    %cst_217 = arith.constant dense<0.000000e+00> : vector<2x5xf32>
    %505 = tpu.matmul %504, %415, %cst_217 {dimension_numbers = #tpu.dot_dimension_numbers<[1], [0], [0], [1], [0, 0, 1, 1], [], []>} : vector<2x5xf32>, vector<5x5xf32>, vector<2x5xf32> -> vector<2x5xf32>
    %506 = vector.broadcast %501 : vector<2x1xf32> to vector<2x5xf32>
    %507 = arith.addf %489, %506 : vector<2x5xf32>
    %508 = vector.broadcast %412 : vector<1x5xf32> to vector<2x5xf32>
    %509 = arith.addf %507, %508 : vector<2x5xf32>
    %510 = math.log %505 : vector<2x5xf32>
    %511 = arith.addf %509, %510 : vector<2x5xf32>
    %512 = vector.shape_cast %477 : vector<2x1xi1> to vector<2x1xi1>
    %513 = vector.broadcast %512 : vector<2x1xi1> to vector<2x5xi1>
    %514 = arith.select %513, %511, %474 : vector<2x5xi1>, vector<2x5xf32>
    %515 = vector.extract_strided_slice %43 {offsets = [0, 3], sizes = [2, 1], strides = [1, 1]} : vector<2x8xf32> to vector<2x1xf32>
    %cst_218 = arith.constant 0.000000e+00 : f32
    %516 = vector.broadcast %cst_218 : f32 to vector<2x1xf32>
    %517 = arith.cmpf ogt, %515, %516 : vector<2x1xf32>
    %518 = vector.extract_strided_slice %405 {offsets = [0, 3], sizes = [2, 1], strides = [1, 1]} : vector<2x8xi32> to vector<2x1xi32>
    %519 = vector.broadcast %518 : vector<2x1xi32> to vector<2x5xi32>
    %520 = arith.cmpi eq, %406, %519 : vector<2x5xi32>
    %521 = arith.extui %520 : vector<2x5xi1> to vector<2x5xi32>
    %522 = arith.sitofp %521 : vector<2x5xi32> to vector<2x5xf32>
    %c3_i32 = arith.constant 3 : i32
    %523 = vector.broadcast %c3_i32 : i32 to vector<2x1xi32>
    %524 = arith.addi %410, %523 : vector<2x1xi32>
    %525 = vector.broadcast %524 : vector<2x1xi32> to vector<2x16xi32>
    %526 = arith.cmpi eq, %407, %525 : vector<2x16xi32>
    %527 = arith.extui %526 : vector<2x16xi1> to vector<2x16xi32>
    %528 = arith.sitofp %527 : vector<2x16xi32> to vector<2x16xf32>
    %cst_219 = arith.constant dense<0.000000e+00> : vector<2x5xf32>
    %529 = tpu.matmul %528, %400, %cst_219 {dimension_numbers = #tpu.dot_dimension_numbers<[1], [0], [0], [1], [0, 0, 1, 1], [], []>} : vector<2x16xf32>, vector<16x5xf32>, vector<2x5xf32> -> vector<2x5xf32>
    %cst_220 = arith.constant dense<0.000000e+00> : vector<2x5xf32>
    %530 = tpu.matmul %482, %402, %cst_220 {dimension_numbers = #tpu.dot_dimension_numbers<[1], [0], [0], [1], [0, 0, 1, 1], [], []>} : vector<2x5xf32>, vector<5x5xf32>, vector<2x5xf32> -> vector<2x5xf32>
    %531 = arith.addf %530, %529 : vector<2x5xf32>
    %532 = arith.mulf %531, %522 : vector<2x5xf32>
    %cst_221 = arith.constant dense<0.000000e+00> : vector<2xf32>
    %533 = vector.multi_reduction <add>, %532, %cst_221 [1] : vector<2x5xf32> to vector<2xf32>
    %534 = vector.shape_cast %533 : vector<2xf32> to vector<2x1xf32>
    %535 = arith.mulf %515, %534 : vector<2x1xf32>
    %536 = arith.addf %496, %535 : vector<2x1xf32>
    %537 = vector.shape_cast %517 : vector<2x1xi1> to vector<2x1xi1>
    %538 = vector.broadcast %537 : vector<2x1xi1> to vector<2x5xi1>
    %539 = arith.select %538, %522, %499 : vector<2x5xi1>, vector<2x5xf32>
    %cst_222 = arith.constant dense<0xFF800000> : vector<2xf32>
    %540 = vector.multi_reduction <maximumf>, %514, %cst_222 [1] : vector<2x5xf32> to vector<2xf32>
    %541 = vector.shape_cast %540 : vector<2xf32> to vector<2x1xf32>
    %542 = vector.broadcast %541 : vector<2x1xf32> to vector<2x5xf32>
    %543 = arith.subf %514, %542 : vector<2x5xf32>
    %544 = math.exp %543 : vector<2x5xf32>
    %cst_223 = arith.constant dense<0.000000e+00> : vector<2x5xf32>
    %545 = tpu.matmul %544, %415, %cst_223 {dimension_numbers = #tpu.dot_dimension_numbers<[1], [0], [0], [1], [0, 0, 1, 1], [], []>} : vector<2x5xf32>, vector<5x5xf32>, vector<2x5xf32> -> vector<2x5xf32>
    %546 = vector.broadcast %541 : vector<2x1xf32> to vector<2x5xf32>
    %547 = arith.addf %529, %546 : vector<2x5xf32>
    %548 = vector.broadcast %412 : vector<1x5xf32> to vector<2x5xf32>
    %549 = arith.addf %547, %548 : vector<2x5xf32>
    %550 = math.log %545 : vector<2x5xf32>
    %551 = arith.addf %549, %550 : vector<2x5xf32>
    %552 = vector.shape_cast %517 : vector<2x1xi1> to vector<2x1xi1>
    %553 = vector.broadcast %552 : vector<2x1xi1> to vector<2x5xi1>
    %554 = arith.select %553, %551, %514 : vector<2x5xi1>, vector<2x5xf32>
    %555 = vector.extract_strided_slice %43 {offsets = [0, 4], sizes = [2, 1], strides = [1, 1]} : vector<2x8xf32> to vector<2x1xf32>
    %cst_224 = arith.constant 0.000000e+00 : f32
    %556 = vector.broadcast %cst_224 : f32 to vector<2x1xf32>
    %557 = arith.cmpf ogt, %555, %556 : vector<2x1xf32>
    %558 = vector.extract_strided_slice %405 {offsets = [0, 4], sizes = [2, 1], strides = [1, 1]} : vector<2x8xi32> to vector<2x1xi32>
    %559 = vector.broadcast %558 : vector<2x1xi32> to vector<2x5xi32>
    %560 = arith.cmpi eq, %406, %559 : vector<2x5xi32>
    %561 = arith.extui %560 : vector<2x5xi1> to vector<2x5xi32>
    %562 = arith.sitofp %561 : vector<2x5xi32> to vector<2x5xf32>
    %c4_i32 = arith.constant 4 : i32
    %563 = vector.broadcast %c4_i32 : i32 to vector<2x1xi32>
    %564 = arith.addi %410, %563 : vector<2x1xi32>
    %565 = vector.broadcast %564 : vector<2x1xi32> to vector<2x16xi32>
    %566 = arith.cmpi eq, %407, %565 : vector<2x16xi32>
    %567 = arith.extui %566 : vector<2x16xi1> to vector<2x16xi32>
    %568 = arith.sitofp %567 : vector<2x16xi32> to vector<2x16xf32>
    %cst_225 = arith.constant dense<0.000000e+00> : vector<2x5xf32>
    %569 = tpu.matmul %568, %400, %cst_225 {dimension_numbers = #tpu.dot_dimension_numbers<[1], [0], [0], [1], [0, 0, 1, 1], [], []>} : vector<2x16xf32>, vector<16x5xf32>, vector<2x5xf32> -> vector<2x5xf32>
    %cst_226 = arith.constant dense<0.000000e+00> : vector<2x5xf32>
    %570 = tpu.matmul %522, %402, %cst_226 {dimension_numbers = #tpu.dot_dimension_numbers<[1], [0], [0], [1], [0, 0, 1, 1], [], []>} : vector<2x5xf32>, vector<5x5xf32>, vector<2x5xf32> -> vector<2x5xf32>
    %571 = arith.addf %570, %569 : vector<2x5xf32>
    %572 = arith.mulf %571, %562 : vector<2x5xf32>
    %cst_227 = arith.constant dense<0.000000e+00> : vector<2xf32>
    %573 = vector.multi_reduction <add>, %572, %cst_227 [1] : vector<2x5xf32> to vector<2xf32>
    %574 = vector.shape_cast %573 : vector<2xf32> to vector<2x1xf32>
    %575 = arith.mulf %555, %574 : vector<2x1xf32>
    %576 = arith.addf %536, %575 : vector<2x1xf32>
    %577 = vector.shape_cast %557 : vector<2x1xi1> to vector<2x1xi1>
    %578 = vector.broadcast %577 : vector<2x1xi1> to vector<2x5xi1>
    %579 = arith.select %578, %562, %539 : vector<2x5xi1>, vector<2x5xf32>
    %cst_228 = arith.constant dense<0xFF800000> : vector<2xf32>
    %580 = vector.multi_reduction <maximumf>, %554, %cst_228 [1] : vector<2x5xf32> to vector<2xf32>
    %581 = vector.shape_cast %580 : vector<2xf32> to vector<2x1xf32>
    %582 = vector.broadcast %581 : vector<2x1xf32> to vector<2x5xf32>
    %583 = arith.subf %554, %582 : vector<2x5xf32>
    %584 = math.exp %583 : vector<2x5xf32>
    %cst_229 = arith.constant dense<0.000000e+00> : vector<2x5xf32>
    %585 = tpu.matmul %584, %415, %cst_229 {dimension_numbers = #tpu.dot_dimension_numbers<[1], [0], [0], [1], [0, 0, 1, 1], [], []>} : vector<2x5xf32>, vector<5x5xf32>, vector<2x5xf32> -> vector<2x5xf32>
    %586 = vector.broadcast %581 : vector<2x1xf32> to vector<2x5xf32>
    %587 = arith.addf %569, %586 : vector<2x5xf32>
    %588 = vector.broadcast %412 : vector<1x5xf32> to vector<2x5xf32>
    %589 = arith.addf %587, %588 : vector<2x5xf32>
    %590 = math.log %585 : vector<2x5xf32>
    %591 = arith.addf %589, %590 : vector<2x5xf32>
    %592 = vector.shape_cast %557 : vector<2x1xi1> to vector<2x1xi1>
    %593 = vector.broadcast %592 : vector<2x1xi1> to vector<2x5xi1>
    %594 = arith.select %593, %591, %554 : vector<2x5xi1>, vector<2x5xf32>
    %595 = vector.extract_strided_slice %43 {offsets = [0, 5], sizes = [2, 1], strides = [1, 1]} : vector<2x8xf32> to vector<2x1xf32>
    %cst_230 = arith.constant 0.000000e+00 : f32
    %596 = vector.broadcast %cst_230 : f32 to vector<2x1xf32>
    %597 = arith.cmpf ogt, %595, %596 : vector<2x1xf32>
    %598 = vector.extract_strided_slice %405 {offsets = [0, 5], sizes = [2, 1], strides = [1, 1]} : vector<2x8xi32> to vector<2x1xi32>
    %599 = vector.broadcast %598 : vector<2x1xi32> to vector<2x5xi32>
    %600 = arith.cmpi eq, %406, %599 : vector<2x5xi32>
    %601 = arith.extui %600 : vector<2x5xi1> to vector<2x5xi32>
    %602 = arith.sitofp %601 : vector<2x5xi32> to vector<2x5xf32>
    %c5_i32 = arith.constant 5 : i32
    %603 = vector.broadcast %c5_i32 : i32 to vector<2x1xi32>
    %604 = arith.addi %410, %603 : vector<2x1xi32>
    %605 = vector.broadcast %604 : vector<2x1xi32> to vector<2x16xi32>
    %606 = arith.cmpi eq, %407, %605 : vector<2x16xi32>
    %607 = arith.extui %606 : vector<2x16xi1> to vector<2x16xi32>
    %608 = arith.sitofp %607 : vector<2x16xi32> to vector<2x16xf32>
    %cst_231 = arith.constant dense<0.000000e+00> : vector<2x5xf32>
    %609 = tpu.matmul %608, %400, %cst_231 {dimension_numbers = #tpu.dot_dimension_numbers<[1], [0], [0], [1], [0, 0, 1, 1], [], []>} : vector<2x16xf32>, vector<16x5xf32>, vector<2x5xf32> -> vector<2x5xf32>
    %cst_232 = arith.constant dense<0.000000e+00> : vector<2x5xf32>
    %610 = tpu.matmul %562, %402, %cst_232 {dimension_numbers = #tpu.dot_dimension_numbers<[1], [0], [0], [1], [0, 0, 1, 1], [], []>} : vector<2x5xf32>, vector<5x5xf32>, vector<2x5xf32> -> vector<2x5xf32>
    %611 = arith.addf %610, %609 : vector<2x5xf32>
    %612 = arith.mulf %611, %602 : vector<2x5xf32>
    %cst_233 = arith.constant dense<0.000000e+00> : vector<2xf32>
    %613 = vector.multi_reduction <add>, %612, %cst_233 [1] : vector<2x5xf32> to vector<2xf32>
    %614 = vector.shape_cast %613 : vector<2xf32> to vector<2x1xf32>
    %615 = arith.mulf %595, %614 : vector<2x1xf32>
    %616 = arith.addf %576, %615 : vector<2x1xf32>
    %617 = vector.shape_cast %597 : vector<2x1xi1> to vector<2x1xi1>
    %618 = vector.broadcast %617 : vector<2x1xi1> to vector<2x5xi1>
    %619 = arith.select %618, %602, %579 : vector<2x5xi1>, vector<2x5xf32>
    %cst_234 = arith.constant dense<0xFF800000> : vector<2xf32>
    %620 = vector.multi_reduction <maximumf>, %594, %cst_234 [1] : vector<2x5xf32> to vector<2xf32>
    %621 = vector.shape_cast %620 : vector<2xf32> to vector<2x1xf32>
    %622 = vector.broadcast %621 : vector<2x1xf32> to vector<2x5xf32>
    %623 = arith.subf %594, %622 : vector<2x5xf32>
    %624 = math.exp %623 : vector<2x5xf32>
    %cst_235 = arith.constant dense<0.000000e+00> : vector<2x5xf32>
    %625 = tpu.matmul %624, %415, %cst_235 {dimension_numbers = #tpu.dot_dimension_numbers<[1], [0], [0], [1], [0, 0, 1, 1], [], []>} : vector<2x5xf32>, vector<5x5xf32>, vector<2x5xf32> -> vector<2x5xf32>
    %626 = vector.broadcast %621 : vector<2x1xf32> to vector<2x5xf32>
    %627 = arith.addf %609, %626 : vector<2x5xf32>
    %628 = vector.broadcast %412 : vector<1x5xf32> to vector<2x5xf32>
    %629 = arith.addf %627, %628 : vector<2x5xf32>
    %630 = math.log %625 : vector<2x5xf32>
    %631 = arith.addf %629, %630 : vector<2x5xf32>
    %632 = vector.shape_cast %597 : vector<2x1xi1> to vector<2x1xi1>
    %633 = vector.broadcast %632 : vector<2x1xi1> to vector<2x5xi1>
    %634 = arith.select %633, %631, %594 : vector<2x5xi1>, vector<2x5xf32>
    %635 = vector.extract_strided_slice %43 {offsets = [0, 6], sizes = [2, 1], strides = [1, 1]} : vector<2x8xf32> to vector<2x1xf32>
    %cst_236 = arith.constant 0.000000e+00 : f32
    %636 = vector.broadcast %cst_236 : f32 to vector<2x1xf32>
    %637 = arith.cmpf ogt, %635, %636 : vector<2x1xf32>
    %638 = vector.extract_strided_slice %405 {offsets = [0, 6], sizes = [2, 1], strides = [1, 1]} : vector<2x8xi32> to vector<2x1xi32>
    %639 = vector.broadcast %638 : vector<2x1xi32> to vector<2x5xi32>
    %640 = arith.cmpi eq, %406, %639 : vector<2x5xi32>
    %641 = arith.extui %640 : vector<2x5xi1> to vector<2x5xi32>
    %642 = arith.sitofp %641 : vector<2x5xi32> to vector<2x5xf32>
    %c6_i32 = arith.constant 6 : i32
    %643 = vector.broadcast %c6_i32 : i32 to vector<2x1xi32>
    %644 = arith.addi %410, %643 : vector<2x1xi32>
    %645 = vector.broadcast %644 : vector<2x1xi32> to vector<2x16xi32>
    %646 = arith.cmpi eq, %407, %645 : vector<2x16xi32>
    %647 = arith.extui %646 : vector<2x16xi1> to vector<2x16xi32>
    %648 = arith.sitofp %647 : vector<2x16xi32> to vector<2x16xf32>
    %cst_237 = arith.constant dense<0.000000e+00> : vector<2x5xf32>
    %649 = tpu.matmul %648, %400, %cst_237 {dimension_numbers = #tpu.dot_dimension_numbers<[1], [0], [0], [1], [0, 0, 1, 1], [], []>} : vector<2x16xf32>, vector<16x5xf32>, vector<2x5xf32> -> vector<2x5xf32>
    %cst_238 = arith.constant dense<0.000000e+00> : vector<2x5xf32>
    %650 = tpu.matmul %602, %402, %cst_238 {dimension_numbers = #tpu.dot_dimension_numbers<[1], [0], [0], [1], [0, 0, 1, 1], [], []>} : vector<2x5xf32>, vector<5x5xf32>, vector<2x5xf32> -> vector<2x5xf32>
    %651 = arith.addf %650, %649 : vector<2x5xf32>
    %652 = arith.mulf %651, %642 : vector<2x5xf32>
    %cst_239 = arith.constant dense<0.000000e+00> : vector<2xf32>
    %653 = vector.multi_reduction <add>, %652, %cst_239 [1] : vector<2x5xf32> to vector<2xf32>
    %654 = vector.shape_cast %653 : vector<2xf32> to vector<2x1xf32>
    %655 = arith.mulf %635, %654 : vector<2x1xf32>
    %656 = arith.addf %616, %655 : vector<2x1xf32>
    %657 = vector.shape_cast %637 : vector<2x1xi1> to vector<2x1xi1>
    %658 = vector.broadcast %657 : vector<2x1xi1> to vector<2x5xi1>
    %659 = arith.select %658, %642, %619 : vector<2x5xi1>, vector<2x5xf32>
    %cst_240 = arith.constant dense<0xFF800000> : vector<2xf32>
    %660 = vector.multi_reduction <maximumf>, %634, %cst_240 [1] : vector<2x5xf32> to vector<2xf32>
    %661 = vector.shape_cast %660 : vector<2xf32> to vector<2x1xf32>
    %662 = vector.broadcast %661 : vector<2x1xf32> to vector<2x5xf32>
    %663 = arith.subf %634, %662 : vector<2x5xf32>
    %664 = math.exp %663 : vector<2x5xf32>
    %cst_241 = arith.constant dense<0.000000e+00> : vector<2x5xf32>
    %665 = tpu.matmul %664, %415, %cst_241 {dimension_numbers = #tpu.dot_dimension_numbers<[1], [0], [0], [1], [0, 0, 1, 1], [], []>} : vector<2x5xf32>, vector<5x5xf32>, vector<2x5xf32> -> vector<2x5xf32>
    %666 = vector.broadcast %661 : vector<2x1xf32> to vector<2x5xf32>
    %667 = arith.addf %649, %666 : vector<2x5xf32>
    %668 = vector.broadcast %412 : vector<1x5xf32> to vector<2x5xf32>
    %669 = arith.addf %667, %668 : vector<2x5xf32>
    %670 = math.log %665 : vector<2x5xf32>
    %671 = arith.addf %669, %670 : vector<2x5xf32>
    %672 = vector.shape_cast %637 : vector<2x1xi1> to vector<2x1xi1>
    %673 = vector.broadcast %672 : vector<2x1xi1> to vector<2x5xi1>
    %674 = arith.select %673, %671, %634 : vector<2x5xi1>, vector<2x5xf32>
    %675 = vector.extract_strided_slice %43 {offsets = [0, 7], sizes = [2, 1], strides = [1, 1]} : vector<2x8xf32> to vector<2x1xf32>
    %cst_242 = arith.constant 0.000000e+00 : f32
    %676 = vector.broadcast %cst_242 : f32 to vector<2x1xf32>
    %677 = arith.cmpf ogt, %675, %676 : vector<2x1xf32>
    %678 = vector.extract_strided_slice %405 {offsets = [0, 7], sizes = [2, 1], strides = [1, 1]} : vector<2x8xi32> to vector<2x1xi32>
    %679 = vector.broadcast %678 : vector<2x1xi32> to vector<2x5xi32>
    %680 = arith.cmpi eq, %406, %679 : vector<2x5xi32>
    %681 = arith.extui %680 : vector<2x5xi1> to vector<2x5xi32>
    %682 = arith.sitofp %681 : vector<2x5xi32> to vector<2x5xf32>
    %c7_i32 = arith.constant 7 : i32
    %683 = vector.broadcast %c7_i32 : i32 to vector<2x1xi32>
    %684 = arith.addi %410, %683 : vector<2x1xi32>
    %685 = vector.broadcast %684 : vector<2x1xi32> to vector<2x16xi32>
    %686 = arith.cmpi eq, %407, %685 : vector<2x16xi32>
    %687 = arith.extui %686 : vector<2x16xi1> to vector<2x16xi32>
    %688 = arith.sitofp %687 : vector<2x16xi32> to vector<2x16xf32>
    %cst_243 = arith.constant dense<0.000000e+00> : vector<2x5xf32>
    %689 = tpu.matmul %688, %400, %cst_243 {dimension_numbers = #tpu.dot_dimension_numbers<[1], [0], [0], [1], [0, 0, 1, 1], [], []>} : vector<2x16xf32>, vector<16x5xf32>, vector<2x5xf32> -> vector<2x5xf32>
    %cst_244 = arith.constant dense<0.000000e+00> : vector<2x5xf32>
    %690 = tpu.matmul %642, %402, %cst_244 {dimension_numbers = #tpu.dot_dimension_numbers<[1], [0], [0], [1], [0, 0, 1, 1], [], []>} : vector<2x5xf32>, vector<5x5xf32>, vector<2x5xf32> -> vector<2x5xf32>
    %691 = arith.addf %690, %689 : vector<2x5xf32>
    %692 = arith.mulf %691, %682 : vector<2x5xf32>
    %cst_245 = arith.constant dense<0.000000e+00> : vector<2xf32>
    %693 = vector.multi_reduction <add>, %692, %cst_245 [1] : vector<2x5xf32> to vector<2xf32>
    %694 = vector.shape_cast %693 : vector<2xf32> to vector<2x1xf32>
    %695 = arith.mulf %675, %694 : vector<2x1xf32>
    %696 = arith.addf %656, %695 : vector<2x1xf32>
    %697 = vector.shape_cast %677 : vector<2x1xi1> to vector<2x1xi1>
    %698 = vector.broadcast %697 : vector<2x1xi1> to vector<2x5xi1>
    %699 = arith.select %698, %682, %659 : vector<2x5xi1>, vector<2x5xf32>
    %cst_246 = arith.constant dense<0xFF800000> : vector<2xf32>
    %700 = vector.multi_reduction <maximumf>, %674, %cst_246 [1] : vector<2x5xf32> to vector<2xf32>
    %701 = vector.shape_cast %700 : vector<2xf32> to vector<2x1xf32>
    %702 = vector.broadcast %701 : vector<2x1xf32> to vector<2x5xf32>
    %703 = arith.subf %674, %702 : vector<2x5xf32>
    %704 = math.exp %703 : vector<2x5xf32>
    %cst_247 = arith.constant dense<0.000000e+00> : vector<2x5xf32>
    %705 = tpu.matmul %704, %415, %cst_247 {dimension_numbers = #tpu.dot_dimension_numbers<[1], [0], [0], [1], [0, 0, 1, 1], [], []>} : vector<2x5xf32>, vector<5x5xf32>, vector<2x5xf32> -> vector<2x5xf32>
    %706 = vector.broadcast %701 : vector<2x1xf32> to vector<2x5xf32>
    %707 = arith.addf %689, %706 : vector<2x5xf32>
    %708 = vector.broadcast %412 : vector<1x5xf32> to vector<2x5xf32>
    %709 = arith.addf %707, %708 : vector<2x5xf32>
    %710 = math.log %705 : vector<2x5xf32>
    %711 = arith.addf %709, %710 : vector<2x5xf32>
    %712 = vector.shape_cast %677 : vector<2x1xi1> to vector<2x1xi1>
    %713 = vector.broadcast %712 : vector<2x1xi1> to vector<2x5xi1>
    %714 = arith.select %713, %711, %674 : vector<2x5xi1>, vector<2x5xf32>
    %715 = vector.broadcast %404 : vector<1x5xf32> to vector<2x5xf32>
    %716 = arith.mulf %715, %699 : vector<2x5xf32>
    %cst_248 = arith.constant dense<0.000000e+00> : vector<2xf32>
    %717 = vector.multi_reduction <add>, %716, %cst_248 [1] : vector<2x5xf32> to vector<2xf32>
    %718 = vector.shape_cast %717 : vector<2xf32> to vector<2x1xf32>
    %719 = arith.addf %696, %718 : vector<2x1xf32>
    %720 = vector.broadcast %404 : vector<1x5xf32> to vector<2x5xf32>
    %721 = arith.addf %714, %720 : vector<2x5xf32>
    %cst_249 = arith.constant dense<0xFF800000> : vector<2xf32>
    %722 = vector.multi_reduction <maximumf>, %721, %cst_249 [1] : vector<2x5xf32> to vector<2xf32>
    %723 = vector.shape_cast %722 : vector<2xf32> to vector<2x1xf32>
    %724 = vector.broadcast %723 : vector<2x1xf32> to vector<2x5xf32>
    %725 = arith.subf %721, %724 : vector<2x5xf32>
    %726 = math.exp %725 : vector<2x5xf32>
    %cst_250 = arith.constant dense<0.000000e+00> : vector<2xf32>
    %727 = vector.multi_reduction <add>, %726, %cst_250 [1] : vector<2x5xf32> to vector<2xf32>
    %728 = vector.shape_cast %727 : vector<2xf32> to vector<2x1xf32>
    %729 = math.log %728 : vector<2x1xf32>
    %730 = arith.addf %723, %729 : vector<2x1xf32>
    %731 = arith.subf %719, %730 : vector<2x1xf32>
    %cst_251 = arith.constant dense<0.000000e+00> : vector<1xf32>
    %732 = vector.multi_reduction <add>, %731, %cst_251 [0] : vector<2x1xf32> to vector<1xf32>
    %733 = vector.shape_cast %732 : vector<1xf32> to vector<1x1xf32>
    %cst_252 = arith.constant 0.000000e+00 : f32
    %734 = vector.broadcast %cst_252 : f32 to vector<1x1xf32>
    %735 = arith.subf %734, %733 : vector<1x1xf32>
    %cst_253 = arith.constant 2.000000e+00 : f32
    %736 = vector.broadcast %cst_253 : f32 to vector<1x1xf32>
    %737 = arith.divf %735, %736 : vector<1x1xf32>
    %c0_254 = arith.constant 0 : index
    %c0_255 = arith.constant 0 : index
    %738 = vector.load %arg27[%c0_254, %c0_255] : memref<1x1xf32, #tpu.memory_space<vmem>>, vector<1x1xf32>
    tpu.vector_store %arg27[%c0_254, %c0_255], %737 {strides = array<i32>} : memref<1x1xf32, #tpu.memory_space<vmem>>, vector<1x1xf32>,
    return
  }
}

</mosaic_0001>

<llo_original>
// kernel: bert_crf_forward.1
$region0: #{bert_crf_forward.1}
  #allocation0 [shape = 'u32[]', space=smem, size = 0x4, offset = 0x4, fixed_abs, tag = 'smem constant byte address 0x4 - core index']
  #allocation1 [shape = 'u32[144,128]{1,0:T(1,128)}', space=vmem, size = 0x12000, scoped, tag = 'internal scratch']
  #allocation2 [shape = 'f32[16,32]{1,0:T(8,128)}', space=vmem, size = 0x2000, scoped, tag = 'scratch operand']
  %s0 = inlined_call_operand.vmem [shape: s32[16,1], index: 0, kind: input, shape index: {}]
  %s1 = inlined_call_operand.vmem [shape: s32[16,1], index: 1, kind: input, shape index: {}]
  %s2 = inlined_call_operand.vmem [shape: f32[2,8], index: 2, kind: input, shape index: {}]
  %s3 = inlined_call_operand.vmem [shape: s32[2,8], index: 3, kind: input, shape index: {}]
  %s4 = inlined_call_operand.vmem [shape: f32[50,32], index: 4, kind: input, shape index: {}]
  %s5 = inlined_call_operand.vmem [shape: f32[16,32], index: 5, kind: input, shape index: {}]
  %s6 = inlined_call_operand.vmem [shape: f32[2,32], index: 6, kind: input, shape index: {}]
  %s7 = inlined_call_operand.vmem [shape: f32[1,32], index: 7, kind: input, shape index: {}]
  %s8 = inlined_call_operand.vmem [shape: f32[1,32], index: 8, kind: input, shape index: {}]
  %s9 = inlined_call_operand.vmem [shape: f32[2,32,96], index: 9, kind: input, shape index: {}]
  %s10 = inlined_call_operand.vmem [shape: f32[2,1,96], index: 10, kind: input, shape index: {}]
  %s11 = inlined_call_operand.vmem [shape: f32[2,32,32], index: 11, kind: input, shape index: {}]
  %s12 = inlined_call_operand.vmem [shape: f32[2,1,32], index: 12, kind: input, shape index: {}]
  %s13 = inlined_call_operand.vmem [shape: f32[2,1,32], index: 13, kind: input, shape index: {}]
  %s14 = inlined_call_operand.vmem [shape: f32[2,1,32], index: 14, kind: input, shape index: {}]
  %s15 = inlined_call_operand.vmem [shape: f32[2,32,64], index: 15, kind: input, shape index: {}]
  %s16 = inlined_call_operand.vmem [shape: f32[2,1,64], index: 16, kind: input, shape index: {}]
  %s17 = inlined_call_operand.vmem [shape: f32[2,64,32], index: 17, kind: input, shape index: {}]
  %s18 = inlined_call_operand.vmem [shape: f32[2,1,32], index: 18, kind: input, shape index: {}]
  %s19 = inlined_call_operand.vmem [shape: f32[2,1,32], index: 19, kind: input, shape index: {}]
  %s20 = inlined_call_operand.vmem [shape: f32[2,1,32], index: 20, kind: input, shape index: {}]
  %s21 = inlined_call_operand.vmem [shape: f32[32,5], index: 21, kind: input, shape index: {}]
  %s22 = inlined_call_operand.vmem [shape: f32[1,5], index: 22, kind: input, shape index: {}]
  %s23 = inlined_call_operand.vmem [shape: f32[5,5], index: 23, kind: input, shape index: {}]
  %s24 = inlined_call_operand.vmem [shape: f32[1,5], index: 24, kind: input, shape index: {}]
  %s25 = inlined_call_operand.vmem [shape: f32[1,5], index: 25, kind: input, shape index: {}]
  %s26 = inlined_call_operand.vmem [shape: f32[16,5], index: 26, kind: output, shape index: {0}]
  %s27 = inlined_call_operand.hbm [shape: f32[1,1], index: 27, kind: output, shape index: {1}]
  %28 = xla_tuple %s26, %s27
  %s29 = sld [smem:[#allocation0]]
  $region122: #{bert_crf_forward.1} parent=0
    _
  %s31 = ssub.s32 1, %s29
  %s32 = scalar_select 0, %s31, %s29
  $region1: #{bert_crf_forward.1} parent=0
    #allocation3 [shape = 'u8[512]{0}', space=vmem, size = 0x400, scoped, tag = 'output window, operand 1, single buffered']
    #allocation4 [shape = 's32[1]{0}', space=sflag, size = 0x4, scoped, tag = 'scoped memory for bert_crf_forward.1']
    %33 = vsyncpa [#allocation4], 0
    // Predicated region
    $region2: #{bert_crf_forward.1} parent=1 // pred_check
      _
    $region3: #{bert_crf_forward.1} parent=1 // pred_check_branch
      %35 = sbr.rel (0) target = $region5
    $region4: #{bert_crf_forward.1} parent=1 // pred_region
      _
    $region5: #{bert_crf_forward.1} parent=1 // pred_fallthru
      _
    // Predicated region
    $region6: #{bert_crf_forward.1} parent=1 // pred_check
      _
    $region7: #{bert_crf_forward.1} parent=1 // pred_check_branch
      %37 = sbr.rel (0) target = $region9
    $region8: #{bert_crf_forward.1} parent=1 // pred_region
      _
    $region9: #{bert_crf_forward.1} parent=1 // pred_fallthru
      _
    // Predicated region
    $region10: #{bert_crf_forward.1} parent=1 // pred_check
      _
    $region11: #{bert_crf_forward.1} parent=1 // pred_check_branch
      %39 = sbr.rel (0) target = $region13
    $region12: #{bert_crf_forward.1} parent=1 // pred_region
      _
    $region13: #{bert_crf_forward.1} parent=1 // pred_fallthru
      _
    // Predicated region
    $region14: #{bert_crf_forward.1} parent=1 // pred_check
      _
    $region15: #{bert_crf_forward.1} parent=1 // pred_check_branch
      %41 = sbr.rel (0) target = $region17
    $region16: #{bert_crf_forward.1} parent=1 // pred_region
      _
    $region17: #{bert_crf_forward.1} parent=1 // pred_fallthru
      _
    // Predicated region
    $region18: #{bert_crf_forward.1} parent=1 // pred_check
      _
    $region19: #{bert_crf_forward.1} parent=1 // pred_check_branch
      %43 = sbr.rel (0) target = $region21
    $region20: #{bert_crf_forward.1} parent=1 // pred_region
      _
    $region21: #{bert_crf_forward.1} parent=1 // pred_fallthru
      _
    // Predicated region
    $region22: #{bert_crf_forward.1} parent=1 // pred_check
      _
    $region23: #{bert_crf_forward.1} parent=1 // pred_check_branch
      %45 = sbr.rel (0) target = $region25
    $region24: #{bert_crf_forward.1} parent=1 // pred_region
      _
    $region25: #{bert_crf_forward.1} parent=1 // pred_fallthru
      _
    // Predicated region
    $region26: #{bert_crf_forward.1} parent=1 // pred_check
      _
    $region27: #{bert_crf_forward.1} parent=1 // pred_check_branch
      %47 = sbr.rel (0) target = $region29
    $region28: #{bert_crf_forward.1} parent=1 // pred_region
      _
    $region29: #{bert_crf_forward.1} parent=1 // pred_fallthru
      _
    // Predicated region
    $region30: #{bert_crf_forward.1} parent=1 // pred_check
      _
    $region31: #{bert_crf_forward.1} parent=1 // pred_check_branch
      %49 = sbr.rel (0) target = $region33
    $region32: #{bert_crf_forward.1} parent=1 // pred_region
      _
    $region33: #{bert_crf_forward.1} parent=1 // pred_fallthru
      _
    // Predicated region
    $region34: #{bert_crf_forward.1} parent=1 // pred_check
      _
    $region35: #{bert_crf_forward.1} parent=1 // pred_check_branch
      %51 = sbr.rel (0) target = $region37
    $region36: #{bert_crf_forward.1} parent=1 // pred_region
      _
    $region37: #{bert_crf_forward.1} parent=1 // pred_fallthru
      _
    // Predicated region
    $region38: #{bert_crf_forward.1} parent=1 // pred_check
      _
    $region39: #{bert_crf_forward.1} parent=1 // pred_check_branch
      %53 = sbr.rel (0) target = $region41
    $region40: #{bert_crf_forward.1} parent=1 // pred_region
      _
    $region41: #{bert_crf_forward.1} parent=1 // pred_fallthru
      _
    // Predicated region
    $region42: #{bert_crf_forward.1} parent=1 // pred_check
      _
    $region43: #{bert_crf_forward.1} parent=1 // pred_check_branch
      %55 = sbr.rel (0) target = $region45
    $region44: #{bert_crf_forward.1} parent=1 // pred_region
      _
    $region45: #{bert_crf_forward.1} parent=1 // pred_fallthru
      _
    // Predicated region
    $region46: #{bert_crf_forward.1} parent=1 // pred_check
      _
    $region47: #{bert_crf_forward.1} parent=1 // pred_check_branch
      %57 = sbr.rel (0) target = $region49
    $region48: #{bert_crf_forward.1} parent=1 // pred_region
      _
    $region49: #{bert_crf_forward.1} parent=1 // pred_fallthru
      _
    // Predicated region
    $region50: #{bert_crf_forward.1} parent=1 // pred_check
      _
    $region51: #{bert_crf_forward.1} parent=1 // pred_check_branch
      %59 = sbr.rel (0) target = $region53
    $region52: #{bert_crf_forward.1} parent=1 // pred_region
      _
    $region53: #{bert_crf_forward.1} parent=1 // pred_fallthru
      _
    // Predicated region
    $region54: #{bert_crf_forward.1} parent=1 // pred_check
      _
    $region55: #{bert_crf_forward.1} parent=1 // pred_check_branch
      %61 = sbr.rel (0) target = $region57
    $region56: #{bert_crf_forward.1} parent=1 // pred_region
      _
    $region57: #{bert_crf_forward.1} parent=1 // pred_fallthru
      _
    // Predicated region
    $region58: #{bert_crf_forward.1} parent=1 // pred_check
      _
    $region59: #{bert_crf_forward.1} parent=1 // pred_check_branch
      %63 = sbr.rel (0) target = $region61
    $region60: #{bert_crf_forward.1} parent=1 // pred_region
      _
    $region61: #{bert_crf_forward.1} parent=1 // pred_fallthru
      _
    // Predicated region
    $region62: #{bert_crf_forward.1} parent=1 // pred_check
      _
    $region63: #{bert_crf_forward.1} parent=1 // pred_check_branch
      %65 = sbr.rel (0) target = $region65
    $region64: #{bert_crf_forward.1} parent=1 // pred_region
      _
    $region65: #{bert_crf_forward.1} parent=1 // pred_fallthru
      _
    // Predicated region
    $region66: #{bert_crf_forward.1} parent=1 // pred_check
      _
    $region67: #{bert_crf_forward.1} parent=1 // pred_check_branch
      %67 = sbr.rel (0) target = $region69
    $region68: #{bert_crf_forward.1} parent=1 // pred_region
      _
    $region69: #{bert_crf_forward.1} parent=1 // pred_fallthru
      _
    // Predicated region
    $region70: #{bert_crf_forward.1} parent=1 // pred_check
      _
    $region71: #{bert_crf_forward.1} parent=1 // pred_check_branch
      %69 = sbr.rel (0) target = $region73
    $region72: #{bert_crf_forward.1} parent=1 // pred_region
      _
    $region73: #{bert_crf_forward.1} parent=1 // pred_fallthru
      _
    // Predicated region
    $region74: #{bert_crf_forward.1} parent=1 // pred_check
      _
    $region75: #{bert_crf_forward.1} parent=1 // pred_check_branch
      %71 = sbr.rel (0) target = $region77
    $region76: #{bert_crf_forward.1} parent=1 // pred_region
      _
    $region77: #{bert_crf_forward.1} parent=1 // pred_fallthru
      _
    // Predicated region
    $region78: #{bert_crf_forward.1} parent=1 // pred_check
      _
    $region79: #{bert_crf_forward.1} parent=1 // pred_check_branch
      %73 = sbr.rel (0) target = $region81
    $region80: #{bert_crf_forward.1} parent=1 // pred_region
      _
    $region81: #{bert_crf_forward.1} parent=1 // pred_fallthru
      _
    // Predicated region
    $region82: #{bert_crf_forward.1} parent=1 // pred_check
      _
    $region83: #{bert_crf_forward.1} parent=1 // pred_check_branch
      %75 = sbr.rel (0) target = $region85
    $region84: #{bert_crf_forward.1} parent=1 // pred_region
      _
    $region85: #{bert_crf_forward.1} parent=1 // pred_fallthru
      _
    // Predicated region
    $region86: #{bert_crf_forward.1} parent=1 // pred_check
      _
    $region87: #{bert_crf_forward.1} parent=1 // pred_check_branch
      %77 = sbr.rel (0) target = $region89
    $region88: #{bert_crf_forward.1} parent=1 // pred_region
      _
    $region89: #{bert_crf_forward.1} parent=1 // pred_fallthru
      _
    // Predicated region
    $region90: #{bert_crf_forward.1} parent=1 // pred_check
      _
    $region91: #{bert_crf_forward.1} parent=1 // pred_check_branch
      %79 = sbr.rel (0) target = $region93
    $region92: #{bert_crf_forward.1} parent=1 // pred_region
      _
    $region93: #{bert_crf_forward.1} parent=1 // pred_fallthru
      _
    // Predicated region
    $region94: #{bert_crf_forward.1} parent=1 // pred_check
      _
    $region95: #{bert_crf_forward.1} parent=1 // pred_check_branch
      %81 = sbr.rel (0) target = $region97
    $region96: #{bert_crf_forward.1} parent=1 // pred_region
      _
    $region97: #{bert_crf_forward.1} parent=1 // pred_fallthru
      _
    // Predicated region
    $region98: #{bert_crf_forward.1} parent=1 // pred_check
      _
    $region99: #{bert_crf_forward.1} parent=1 // pred_check_branch
      %83 = sbr.rel (0) target = $region101
    $region100: #{bert_crf_forward.1} parent=1 // pred_region
      _
    $region101: #{bert_crf_forward.1} parent=1 // pred_fallthru
      _
    // Predicated region
    $region102: #{bert_crf_forward.1} parent=1 // pred_check
      _
    $region103: #{bert_crf_forward.1} parent=1 // pred_check_branch
      %85 = sbr.rel (0) target = $region105
    $region104: #{bert_crf_forward.1} parent=1 // pred_region
      _
    $region105: #{bert_crf_forward.1} parent=1 // pred_fallthru
      _
    %v86 = vld [vmem:[%s0] sm:$0xff]
    %v87 = vld [vmem:[%s0 + $0x8] sm:$0xff]
    %v88 = vld [vmem:[%s1] sm:$0xff]
    %v89 = vld [vmem:[%s1 + $0x8] sm:$0xff]
    %v90 = vlaneseq
    %v91 = vand.u32 %v90, 127
    %92 = vset.pattern.permute.xlu0 0
    %93 = vperm.xlu0 %92, %v86
    %v94 = vpop.permute.xlu0 %93
    %95 = vset.pattern.permute.xlu0 0
    %96 = vperm.xlu0 %95, %v87
    %v97 = vpop.permute.xlu0 %96
    %vm98 = vcmp.eq.s32.totalorder %v91, %v94
    %vm99 = vcmp.eq.s32.totalorder %v91, %v97
    %v100 = vsel %vm98, 1, 0
    %v101 = vsel %vm99, 1, 0
    %v102 = vcvt.s32.f32 %v100
    %v103 = vcvt.s32.f32 %v101
    %v104 = vld [vmem:[%s4] sm:$0xff]
    %v105 = vld [vmem:[%s4 + $0x8] sm:$0xff]
    %v106 = vld [vmem:[%s4 + $0x10] sm:$0xff]
    %v107 = vld [vmem:[%s4 + $0x18] sm:$0xff]
    %v108 = vld [vmem:[%s4 + $0x20] sm:$0xff]
    %v109 = vld [vmem:[%s4 + $0x28] sm:$0xff]
    %v110 = vld [vmem:[%s4 + $0x30] sm:$0x3]
    %111 = vset.pattern.permute.xlu0 0
    %112 = vperm.xlu0 %111, %v88
    %v113 = vpop.permute.xlu0 %112
    %114 = vset.pattern.permute.xlu0 0
    %115 = vperm.xlu0 %114, %v89
    %v116 = vpop.permute.xlu0 %115
    %vm117 = vcmp.eq.s32.totalorder %v91, %v113
    %vm118 = vcmp.eq.s32.totalorder %v91, %v116
    %v119 = vsel %vm117, 1, 0
    %v120 = vsel %vm118, 1, 0
    %v121 = vcvt.s32.f32 %v119
    %v122 = vcvt.s32.f32 %v120
    %v123 = vld [vmem:[%s6] sm:$0x3]
    %vm124 = vcmask 15360
    %v126 = vsel %vm124, %v121, 0
    %v129 = vsel %vm124, %v122, 0
    %vm131 = vcmask 1041408
    %v133 = vsel %vm131, %v123, 0
    %135 = vmatprep.subr.mxu0 0.0
    %136 = vmatpush1.msra.mxu0 %v133
    %137 = vmatprep.subr.mxu0 0.0
    %138 = vmatpush1.msra.mxu0 0.0
    %139 = vmatprep.subr.mxu0 0.0
    %140 = vmatpush1.msra.mxu0 0.0
    %141 = vmatprep.subr.mxu0 0.0
    %142 = vmatpush1.msra.mxu0 0.0
    %143 = vmatprep.subr.mxu0 0.0
    %144 = vmatpush1.msra.mxu0 0.0
    %145 = vmatprep.subr.mxu0 0.0
    %146 = vmatpush1.msra.mxu0 0.0
    %147 = vmatprep.subr.mxu0 0.0
    %148 = vmatpush1.msra.mxu0 0.0
    %149 = vmatprep.subr.mxu0 0.0
    %150 = vmatpush1.msra.mxu0 0.0
    %151 = vmatprep.subr.mxu0 0.0
    %152 = vmatpush1.msra.mxu0 0.0
    %153 = vmatprep.subr.mxu0 0.0
    %154 = vmatpush1.msra.mxu0 0.0
    %155 = vmatprep.subr.mxu0 0.0
    %156 = vmatpush1.msra.mxu0 0.0
    %157 = vmatprep.subr.mxu0 0.0
    %158 = vmatpush1.msra.mxu0 0.0
    %159 = vmatprep.subr.mxu0 0.0
    %160 = vmatpush1.msra.mxu0 0.0
    %161 = vmatprep.subr.mxu0 0.0
    %162 = vmatpush1.msra.mxu0 0.0
    %163 = vmatprep.subr.mxu0 0.0
    %164 = vmatpush1.msra.mxu0 0.0
    %165 = vmatprep.subr.mxu0 0.0
    %166 = vmatpush1.msra.mxu0 0.0
    %167 = vmatprep.subr.mxu0 0.0
    %168 = vmatpush1.msra.mxu0 0.0
    %169 = vmatprep.subr.mxu0 0.0
    %170 = vmatpush1.msra.mxu0 0.0
    %171 = vmatprep.subr.mxu0 0.0
    %172 = vmatpush1.msra.mxu0 0.0
    %173 = vmatprep.subr.mxu0 0.0
    %174 = vmatpush1.msra.mxu0 0.0
    %175 = vmatprep.subr.mxu0 0.0
    %176 = vmatpush1.msra.mxu0 0.0
    %177 = vmatprep.subr.mxu0 0.0
    %178 = vmatpush1.msra.mxu0 0.0
    %179 = vmatprep.subr.mxu0 0.0
    %180 = vmatpush1.msra.mxu0 0.0
    %181 = vmatprep.subr.mxu0 0.0
    %182 = vmatpush1.msra.mxu0 0.0
    %183 = vmatprep.subr.mxu0 0.0
    %184 = vmatpush1.msra.mxu0 0.0
    %185 = vmatprep.subr.mxu0 0.0
    %186 = vmatpush1.msra.mxu0 0.0
    %187 = vmatprep.subr.mxu0 0.0
    %188 = vmatpush1.msra.mxu0 0.0
    %189 = vmatprep.subr.mxu0 0.0
    %190 = vmatpush1.msra.mxu0 0.0
    %191 = vmatprep.subr.mxu0 0.0
    %192 = vmatpush1.msra.mxu0 0.0
    %193 = vmatprep.subr.mxu0 0.0
    %194 = vmatpush1.msra.mxu0 0.0
    %195 = vmatprep.subr.mxu0 0.0
    %196 = vmatpush1.msra.mxu0 0.0
    %197 = vmatprep.subr.mxu0 0.0
    %198 = vmatpush1.msra.mxu0 0.0
    %199 = vmatprep.mubr.f32.mxu0 0.0
    %200 = vmatmul.mubr.f32.gmra.mrb[0].mxu0 %v126
    %v201 = vpop.f32.mrb[0].mxu0
    %v202 = vadd.f32 0.0, %v201
    %v203 = vpop.f32.mrb[0].mxu0
    %204 = vmatprep.mubr.f32.mxu0 0.0
    %205 = vmatmul.mubr.f32.gmra.mrb[0].mxu0 %v129
    %v206 = vpop.f32.mrb[0].mxu0
    %v207 = vadd.f32 0.0, %v206
    %v208 = vpop.f32.mrb[0].mxu0
    %209 = vdwg.mxu0
    %vm210 = vcmask 408576
    %v212 = vsel %vm210, %v102, 0
    %v215 = vsel %vm210, %v103, 0
    %v218 = vsel %vm131, %v110, 0
    %220 = vmatprep.subr.mxu0 0.0
    %221 = vmatpush1.msra.mxu0 %v104
    %222 = vmatprep.subr.mxu0 0.0
    %223 = vmatpush1.msra.mxu0 %v105
    %224 = vmatprep.subr.mxu0 0.0
    %225 = vmatpush1.msra.mxu0 %v106
    %226 = vmatprep.subr.mxu0 0.0
    %227 = vmatpush1.msra.mxu0 %v107
    %228 = vmatprep.subr.mxu0 0.0
    %229 = vmatpush1.msra.mxu0 %v108
    %230 = vmatprep.subr.mxu0 0.0
    %231 = vmatpush1.msra.mxu0 %v109
    %232 = vmatprep.subr.mxu0 0.0
    %233 = vmatpush1.msra.mxu0 %v218
    %234 = vmatprep.subr.mxu0 0.0
    %235 = vmatpush1.msra.mxu0 0.0
    %236 = vmatprep.subr.mxu0 0.0
    %237 = vmatpush1.msra.mxu0 0.0
    %238 = vmatprep.subr.mxu0 0.0
    %239 = vmatpush1.msra.mxu0 0.0
    %240 = vmatprep.subr.mxu0 0.0
    %241 = vmatpush1.msra.mxu0 0.0
    %242 = vmatprep.subr.mxu0 0.0
    %243 = vmatpush1.msra.mxu0 0.0
    %244 = vmatprep.subr.mxu0 0.0
    %245 = vmatpush1.msra.mxu0 0.0
    %246 = vmatprep.subr.mxu0 0.0
    %247 = vmatpush1.msra.mxu0 0.0
    %248 = vmatprep.subr.mxu0 0.0
    %249 = vmatpush1.msra.mxu0 0.0
    %250 = vmatprep.subr.mxu0 0.0
    %251 = vmatpush1.msra.mxu0 0.0
    %252 = vmatprep.subr.mxu0 0.0
    %253 = vmatpush1.msra.mxu0 0.0
    %254 = vmatprep.subr.mxu0 0.0
    %255 = vmatpush1.msra.mxu0 0.0
    %256 = vmatprep.subr.mxu0 0.0
    %257 = vmatpush1.msra.mxu0 0.0
    %258 = vmatprep.subr.mxu0 0.0
    %259 = vmatpush1.msra.mxu0 0.0
    %260 = vmatprep.subr.mxu0 0.0
    %261 = vmatpush1.msra.mxu0 0.0
    %262 = vmatprep.subr.mxu0 0.0
    %263 = vmatpush1.msra.mxu0 0.0
    %264 = vmatprep.subr.mxu0 0.0
    %265 = vmatpush1.msra.mxu0 0.0
    %266 = vmatprep.subr.mxu0 0.0
    %267 = vmatpush1.msra.mxu0 0.0
    %268 = vmatprep.subr.mxu0 0.0
    %269 = vmatpush1.msra.mxu0 0.0
    %270 = vmatprep.subr.mxu0 0.0
    %271 = vmatpush1.msra.mxu0 0.0
    %272 = vmatprep.subr.mxu0 0.0
    %273 = vmatpush1.msra.mxu0 0.0
    %274 = vmatprep.subr.mxu0 0.0
    %275 = vmatpush1.msra.mxu0 0.0
    %276 = vmatprep.subr.mxu0 0.0
    %277 = vmatpush1.msra.mxu0 0.0
    %278 = vmatprep.subr.mxu0 0.0
    %279 = vmatpush1.msra.mxu0 0.0
    %280 = vmatprep.subr.mxu0 0.0
    %281 = vmatpush1.msra.mxu0 0.0
    %282 = vmatprep.subr.mxu0 0.0
    %283 = vmatpush1.msra.mxu0 0.0
    %284 = vmatprep.mubr.f32.mxu0 0.0
    %285 = vmatmul.mubr.f32.gmra.mrb[0].mxu0 %v212
    %v286 = vpop.f32.mrb[0].mxu0
    %v287 = vadd.f32 %v202, %v286
    %v288 = vpop.f32.mrb[0].mxu0
    %289 = vmatprep.mubr.f32.mxu0 0.0
    %290 = vmatmul.mubr.f32.gmra.mrb[0].mxu0 %v215
    %v291 = vpop.f32.mrb[0].mxu0
    %v292 = vadd.f32 %v207, %v291
    %v293 = vpop.f32.mrb[0].mxu0
    %294 = vdwg.mxu0
    %v295 = vld [vmem:[%s5] sm:$0xff]
    %v296 = vld [vmem:[%s5 + $0x8] sm:$0xff]
    %v297 = vadd.f32 %v287, %v295
    %v298 = vadd.f32 %v292, %v296
    %v299 = vld [vmem:[%s7] sm:$0x1]
    %v300 = vld [vmem:[%s8] sm:$0x1]
    %vm301 = vcmask 261120
    %v302 = vsel %vm301, %v297, 0.0
    %303 = vadd.xlane.f32.xlu0 %v302
    %v304 = vpop.xlane.xlu0 %303
    %v305 = vsel %vm301, %v298, 0.0
    %306 = vadd.xlane.f32.xlu0 %v305
    %v307 = vpop.xlane.xlu0 %306
    %v308 = vrcp.pop 32.0
    %v309 = vmul.f32 %v304, %v308
    %v310 = vmul.f32 %v307, %v308
    %v311 = vsub.f32 %v297, %v309
    %v312 = vsub.f32 %v298, %v310
    %v313 = vmul.f32 %v311, %v311
    %v314 = vmul.f32 %v312, %v312
    %v315 = vsel %vm301, %v313, 0.0
    %316 = vadd.xlane.f32.xlu0 %v315
    %v317 = vpop.xlane.xlu0 %316
    %v318 = vsel %vm301, %v314, 0.0
    %319 = vadd.xlane.f32.xlu0 %v318
    %v320 = vpop.xlane.xlu0 %319
    %v321 = vmul.f32 %v317, %v308
    %v322 = vmul.f32 %v320, %v308
    %v323 = vadd.f32 %v321, 1e-12
    %v324 = vadd.f32 %v322, 1e-12
    %v325 = vrsqrt.pop %v323
    %v326 = vrsqrt.pop %v324
    %v327 = vmul.f32 %v311, %v325
    %v328 = vmul.f32 %v312, %v326
    %v330 = vlaneseq
    %v331 = vshrl.u32 %v330, 7
    %v332 = vsub.s32 0, %v331
    %v333 = vrot.slane %v299, %v332
    %v335 = vmul.f32 %v327, %v333
    %v336 = vmul.f32 %v328, %v333
    %v338 = vlaneseq
    %v339 = vshrl.u32 %v338, 7
    %v340 = vsub.s32 0, %v339
    %v341 = vrot.slane %v300, %v340
    %v343 = vadd.f32 %v335, %v341
    %v344 = vadd.f32 %v336, %v341
    %v345 = vld [vmem:[%s2] sm:$0x3]
    %v346 = vsub.f32 1.0, %v345
    %v347 = vmul.f32 %v346, -1e+09
    %v348 = vld [vmem:[%s9] sm:$0xff]
    %v349 = vld [vmem:[%s9 + $0x8] sm:$0xff]
    %v350 = vld [vmem:[%s9 + $0x10] sm:$0xff]
    %v351 = vld [vmem:[%s9 + $0x18] sm:$0xff]
    %v352 = vld [vmem:[%s10] sm:$0x1]
    %v354 = vlaneseq
    %v355 = vshrl.u32 %v354, 7
    %v356 = vsub.s32 0, %v355
    %v357 = vrot.slane %v352, %v356
    %v360 = vsel %vm301, %v343, 0
    %v363 = vsel %vm301, %v344, 0
    %365 = vmatprep.subr.mxu0 0.0
    %366 = vmatpush1.msra.mxu0 %v348
    %367 = vmatprep.subr.mxu0 0.0
    %368 = vmatpush1.msra.mxu0 %v349
    %369 = vmatprep.subr.mxu0 0.0
    %370 = vmatpush1.msra.mxu0 %v350
    %371 = vmatprep.subr.mxu0 0.0
    %372 = vmatpush1.msra.mxu0 %v351
    %373 = vmatprep.subr.mxu0 0.0
    %374 = vmatpush1.msra.mxu0 0.0
    %375 = vmatprep.subr.mxu0 0.0
    %376 = vmatpush1.msra.mxu0 0.0
    %377 = vmatprep.subr.mxu0 0.0
    %378 = vmatpush1.msra.mxu0 0.0
    %379 = vmatprep.subr.mxu0 0.0
    %380 = vmatpush1.msra.mxu0 0.0
    %381 = vmatprep.subr.mxu0 0.0
    %382 = vmatpush1.msra.mxu0 0.0
    %383 = vmatprep.subr.mxu0 0.0
    %384 = vmatpush1.msra.mxu0 0.0
    %385 = vmatprep.subr.mxu0 0.0
    %386 = vmatpush1.msra.mxu0 0.0
    %387 = vmatprep.subr.mxu0 0.0
    %388 = vmatpush1.msra.mxu0 0.0
    %389 = vmatprep.subr.mxu0 0.0
    %390 = vmatpush1.msra.mxu0 0.0
    %391 = vmatprep.subr.mxu0 0.0
    %392 = vmatpush1.msra.mxu0 0.0
    %393 = vmatprep.subr.mxu0 0.0
    %394 = vmatpush1.msra.mxu0 0.0
    %395 = vmatprep.subr.mxu0 0.0
    %396 = vmatpush1.msra.mxu0 0.0
    %397 = vmatprep.subr.mxu0 0.0
    %398 = vmatpush1.msra.mxu0 0.0
    %399 = vmatprep.subr.mxu0 0.0
    %400 = vmatpush1.msra.mxu0 0.0
    %401 = vmatprep.subr.mxu0 0.0
    %402 = vmatpush1.msra.mxu0 0.0
    %403 = vmatprep.subr.mxu0 0.0
    %404 = vmatpush1.msra.mxu0 0.0
    %405 = vmatprep.subr.mxu0 0.0
    %406 = vmatpush1.msra.mxu0 0.0
    %407 = vmatprep.subr.mxu0 0.0
    %408 = vmatpush1.msra.mxu0 0.0
    %409 = vmatprep.subr.mxu0 0.0
    %410 = vmatpush1.msra.mxu0 0.0
    %411 = vmatprep.subr.mxu0 0.0
    %412 = vmatpush1.msra.mxu0 0.0
    %413 = vmatprep.subr.mxu0 0.0
    %414 = vmatpush1.msra.mxu0 0.0
    %415 = vmatprep.subr.mxu0 0.0
    %416 = vmatpush1.msra.mxu0 0.0
    %417 = vmatprep.subr.mxu0 0.0
    %418 = vmatpush1.msra.mxu0 0.0
    %419 = vmatprep.subr.mxu0 0.0
    %420 = vmatpush1.msra.mxu0 0.0
    %421 = vmatprep.subr.mxu0 0.0
    %422 = vmatpush1.msra.mxu0 0.0
    %423 = vmatprep.subr.mxu0 0.0
    %424 = vmatpush1.msra.mxu0 0.0
    %425 = vmatprep.subr.mxu0 0.0
    %426 = vmatpush1.msra.mxu0 0.0
    %427 = vmatprep.subr.mxu0 0.0
    %428 = vmatpush1.msra.mxu0 0.0
    %429 = vmatprep.mubr.f32.mxu0 0.0
    %430 = vmatmul.mubr.f32.gmra.mrb[0].mxu0 %v360
    %v431 = vpop.f32.mrb[0].mxu0
    %v432 = vadd.f32 %v357, %v431
    %v433 = vpop.f32.mrb[0].mxu0
    %434 = vmatprep.mubr.f32.mxu0 0.0
    %435 = vmatmul.mubr.f32.gmra.mrb[0].mxu0 %v363
    %v436 = vpop.f32.mrb[0].mxu0
    %v437 = vadd.f32 %v357, %v436
    %v438 = vpop.f32.mrb[0].mxu0
    %439 = vdwg.mxu0
    %441 = vrot.lane.b32.xlu0 %v432, 96
    %v442 = vpop.permute.xlu0 %441
    %vm443 = vcmask 130048
    %v444 = vsel %vm443, %v432, 0
    %v446 = vsel %vm443, %v442, 0
    %448 = vmatprep.subr.mxu0 0.0
    %449 = vmatpush1.xpose.msra.mxu0 %v446
    %450 = vmatprep.subr.mxu0 0.0
    %451 = vmatpush1.xpose.msra.mxu0 0.0
    %452 = vmatprep.subr.mxu0 0.0
    %453 = vmatpush1.xpose.msra.mxu0 0.0
    %454 = vmatprep.subr.mxu0 0.0
    %455 = vmatpush1.xpose.msra.mxu0 0.0
    %456 = vmatprep.subr.mxu0 0.0
    %457 = vmatpush1.xpose.msra.mxu0 0.0
    %458 = vmatprep.subr.mxu0 0.0
    %459 = vmatpush1.xpose.msra.mxu0 0.0
    %460 = vmatprep.subr.mxu0 0.0
    %461 = vmatpush1.xpose.msra.mxu0 0.0
    %462 = vmatprep.subr.mxu0 0.0
    %463 = vmatpush1.xpose.msra.mxu0 0.0
    %464 = vmatprep.subr.mxu0 0.0
    %465 = vmatpush1.xpose.msra.mxu0 0.0
    %466 = vmatprep.subr.mxu0 0.0
    %467 = vmatpush1.xpose.msra.mxu0 0.0
    %468 = vmatprep.subr.mxu0 0.0
    %469 = vmatpush1.xpose.msra.mxu0 0.0
    %470 = vmatprep.subr.mxu0 0.0
    %471 = vmatpush1.xpose.msra.mxu0 0.0
    %472 = vmatprep.subr.mxu0 0.0
    %473 = vmatpush1.xpose.msra.mxu0 0.0
    %474 = vmatprep.subr.mxu0 0.0
    %475 = vmatpush1.xpose.msra.mxu0 0.0
    %476 = vmatprep.subr.mxu0 0.0
    %477 = vmatpush1.xpose.msra.mxu0 0.0
    %478 = vmatprep.subr.mxu0 0.0
    %479 = vmatpush1.xpose.msra.mxu0 0.0
    %480 = vmatprep.subr.mxu0 0.0
    %481 = vmatpush1.xpose.msra.mxu0 0.0
    %482 = vmatprep.subr.mxu0 0.0
    %483 = vmatpush1.xpose.msra.mxu0 0.0
    %484 = vmatprep.subr.mxu0 0.0
    %485 = vmatpush1.xpose.msra.mxu0 0.0
    %486 = vmatprep.subr.mxu0 0.0
    %487 = vmatpush1.xpose.msra.mxu0 0.0
    %488 = vmatprep.subr.mxu0 0.0
    %489 = vmatpush1.xpose.msra.mxu0 0.0
    %490 = vmatprep.subr.mxu0 0.0
    %491 = vmatpush1.xpose.msra.mxu0 0.0
    %492 = vmatprep.subr.mxu0 0.0
    %493 = vmatpush1.xpose.msra.mxu0 0.0
    %494 = vmatprep.subr.mxu0 0.0
    %495 = vmatpush1.xpose.msra.mxu0 0.0
    %496 = vmatprep.subr.mxu0 0.0
    %497 = vmatpush1.xpose.msra.mxu0 0.0
    %498 = vmatprep.subr.mxu0 0.0
    %499 = vmatpush1.xpose.msra.mxu0 0.0
    %500 = vmatprep.subr.mxu0 0.0
    %501 = vmatpush1.xpose.msra.mxu0 0.0
    %502 = vmatprep.subr.mxu0 0.0
    %503 = vmatpush1.xpose.msra.mxu0 0.0
    %504 = vmatprep.subr.mxu0 0.0
    %505 = vmatpush1.xpose.msra.mxu0 0.0
    %506 = vmatprep.subr.mxu0 0.0
    %507 = vmatpush1.xpose.msra.mxu0 0.0
    %508 = vmatprep.subr.mxu0 0.0
    %509 = vmatpush1.xpose.msra.mxu0 0.0
    %510 = vmatprep.subr.mxu0 0.0
    %511 = vmatpush1.xpose.msra.mxu0 0.0
    %512 = vmatprep.mubr.f32.mxu0 0.0
    %513 = vmatmul.mubr.f32.gmra.mrb[0].mxu0 %v444
    %v514 = vpop.f32.mrb[0].mxu0
    %v515 = vadd.f32 0.0, %v514
    %v516 = vpop.f32.mrb[0].mxu0
    %517 = vdwg.mxu0
    %v518 = vmul.f32 %v515, 0.25
    %v519 = vlaneseq
    %v520 = vshrl.u32 %v519, 7
    %v521 = vsub.s32 0, %v520
    %v522 = vrot.slane %v347, %v521
    %v523 = vadd.f32 %v518, %v522
    %vm524 = vcmask 64512
    %v525 = vsel %vm524, %v523, -inf
    %526 = vmax.xlane.f32.xlu0 %v525
    %v527 = vpop.xlane.xlu0 %526
    %v528 = vsub.f32 %v523, %v527
    %v529 = vmul.f32 %v528, 1.442695
    %v530 = vpow.pop %v529
    %v531 = vsel %vm524, %v530, 0.0
    %532 = vadd.xlane.f32.xlu0 %v531
    %v533 = vpop.xlane.xlu0 %532
    %v534 = vrcp.pop %v533
    %v535 = vmul.f32 %v530, %v534
    %536 = vrot.lane.b32.xlu0 %v432, 64
    %v537 = vpop.permute.xlu0 %536
    %v540 = vsel %vm524, %v535, 0
    %542 = vmatprep.subr.mxu0 0.0
    %543 = vmatpush1.msra.mxu0 %v537
    %544 = vmatprep.subr.mxu0 0.0
    %545 = vmatpush1.msra.mxu0 0.0
    %546 = vmatprep.subr.mxu0 0.0
    %547 = vmatpush1.msra.mxu0 0.0
    %548 = vmatprep.subr.mxu0 0.0
    %549 = vmatpush1.msra.mxu0 0.0
    %550 = vmatprep.subr.mxu0 0.0
    %551 = vmatpush1.msra.mxu0 0.0
    %552 = vmatprep.subr.mxu0 0.0
    %553 = vmatpush1.msra.mxu0 0.0
    %554 = vmatprep.subr.mxu0 0.0
    %555 = vmatpush1.msra.mxu0 0.0
    %556 = vmatprep.subr.mxu0 0.0
    %557 = vmatpush1.msra.mxu0 0.0
    %558 = vmatprep.subr.mxu0 0.0
    %559 = vmatpush1.msra.mxu0 0.0
    %560 = vmatprep.subr.mxu0 0.0
    %561 = vmatpush1.msra.mxu0 0.0
    %562 = vmatprep.subr.mxu0 0.0
    %563 = vmatpush1.msra.mxu0 0.0
    %564 = vmatprep.subr.mxu0 0.0
    %565 = vmatpush1.msra.mxu0 0.0
    %566 = vmatprep.subr.mxu0 0.0
    %567 = vmatpush1.msra.mxu0 0.0
    %568 = vmatprep.subr.mxu0 0.0
    %569 = vmatpush1.msra.mxu0 0.0
    %570 = vmatprep.subr.mxu0 0.0
    %571 = vmatpush1.msra.mxu0 0.0
    %572 = vmatprep.subr.mxu0 0.0
    %573 = vmatpush1.msra.mxu0 0.0
    %574 = vmatprep.subr.mxu0 0.0
    %575 = vmatpush1.msra.mxu0 0.0
    %576 = vmatprep.subr.mxu0 0.0
    %577 = vmatpush1.msra.mxu0 0.0
    %578 = vmatprep.subr.mxu0 0.0
    %579 = vmatpush1.msra.mxu0 0.0
    %580 = vmatprep.subr.mxu0 0.0
    %581 = vmatpush1.msra.mxu0 0.0
    %582 = vmatprep.subr.mxu0 0.0
    %583 = vmatpush1.msra.mxu0 0.0
    %584 = vmatprep.subr.mxu0 0.0
    %585 = vmatpush1.msra.mxu0 0.0
    %586 = vmatprep.subr.mxu0 0.0
    %587 = vmatpush1.msra.mxu0 0.0
    %588 = vmatprep.subr.mxu0 0.0
    %589 = vmatpush1.msra.mxu0 0.0
    %590 = vmatprep.subr.mxu0 0.0
    %591 = vmatpush1.msra.mxu0 0.0
    %592 = vmatprep.subr.mxu0 0.0
    %593 = vmatpush1.msra.mxu0 0.0
    %594 = vmatprep.subr.mxu0 0.0
    %595 = vmatpush1.msra.mxu0 0.0
    %596 = vmatprep.subr.mxu0 0.0
    %597 = vmatpush1.msra.mxu0 0.0
    %598 = vmatprep.subr.mxu0 0.0
    %599 = vmatpush1.msra.mxu0 0.0
    %600 = vmatprep.subr.mxu0 0.0
    %601 = vmatpush1.msra.mxu0 0.0
    %602 = vmatprep.subr.mxu0 0.0
    %603 = vmatpush1.msra.mxu0 0.0
    %604 = vmatprep.subr.mxu0 0.0
    %605 = vmatpush1.msra.mxu0 0.0
    %606 = vmatprep.mubr.f32.mxu0 0.0
    %607 = vmatmul.mubr.f32.gmra.mrb[0].mxu0 %v540
    %v608 = vpop.f32.mrb[0].mxu0
    %v609 = vadd.f32 0.0, %v608
    %v610 = vpop.f32.mrb[0].mxu0
    %611 = vdwg.mxu0
    %612 = vst.msk [vmem:[#allocation2] sm:$0xff] %vm443, %v609
    %613 = vrot.lane.b32.xlu0 %v432, 112
    %v614 = vpop.permute.xlu0 %613
    %615 = vrot.lane.b32.xlu0 %v432, 80
    %v616 = vpop.permute.xlu0 %615
    %v617 = vsel %vm443, %v614, 0
    %v619 = vsel %vm443, %v616, 0
    %621 = vmatprep.subr.mxu0 0.0
    %622 = vmatpush1.xpose.msra.mxu0 %v619
    %623 = vmatprep.subr.mxu0 0.0
    %624 = vmatpush1.xpose.msra.mxu0 0.0
    %625 = vmatprep.subr.mxu0 0.0
    %626 = vmatpush1.xpose.msra.mxu0 0.0
    %627 = vmatprep.subr.mxu0 0.0
    %628 = vmatpush1.xpose.msra.mxu0 0.0
    %629 = vmatprep.subr.mxu0 0.0
    %630 = vmatpush1.xpose.msra.mxu0 0.0
    %631 = vmatprep.subr.mxu0 0.0
    %632 = vmatpush1.xpose.msra.mxu0 0.0
    %633 = vmatprep.subr.mxu0 0.0
    %634 = vmatpush1.xpose.msra.mxu0 0.0
    %635 = vmatprep.subr.mxu0 0.0
    %636 = vmatpush1.xpose.msra.mxu0 0.0
    %637 = vmatprep.subr.mxu0 0.0
    %638 = vmatpush1.xpose.msra.mxu0 0.0
    %639 = vmatprep.subr.mxu0 0.0
    %640 = vmatpush1.xpose.msra.mxu0 0.0
    %641 = vmatprep.subr.mxu0 0.0
    %642 = vmatpush1.xpose.msra.mxu0 0.0
    %643 = vmatprep.subr.mxu0 0.0
    %644 = vmatpush1.xpose.msra.mxu0 0.0
    %645 = vmatprep.subr.mxu0 0.0
    %646 = vmatpush1.xpose.msra.mxu0 0.0
    %647 = vmatprep.subr.mxu0 0.0
    %648 = vmatpush1.xpose.msra.mxu0 0.0
    %649 = vmatprep.subr.mxu0 0.0
    %650 = vmatpush1.xpose.msra.mxu0 0.0
    %651 = vmatprep.subr.mxu0 0.0
    %652 = vmatpush1.xpose.msra.mxu0 0.0
    %653 = vmatprep.subr.mxu0 0.0
    %654 = vmatpush1.xpose.msra.mxu0 0.0
    %655 = vmatprep.subr.mxu0 0.0
    %656 = vmatpush1.xpose.msra.mxu0 0.0
    %657 = vmatprep.subr.mxu0 0.0
    %658 = vmatpush1.xpose.msra.mxu0 0.0
    %659 = vmatprep.subr.mxu0 0.0
    %660 = vmatpush1.xpose.msra.mxu0 0.0
    %661 = vmatprep.subr.mxu0 0.0
    %662 = vmatpush1.xpose.msra.mxu0 0.0
    %663 = vmatprep.subr.mxu0 0.0
    %664 = vmatpush1.xpose.msra.mxu0 0.0
    %665 = vmatprep.subr.mxu0 0.0
    %666 = vmatpush1.xpose.msra.mxu0 0.0
    %667 = vmatprep.subr.mxu0 0.0
    %668 = vmatpush1.xpose.msra.mxu0 0.0
    %669 = vmatprep.subr.mxu0 0.0
    %670 = vmatpush1.xpose.msra.mxu0 0.0
    %671 = vmatprep.subr.mxu0 0.0
    %672 = vmatpush1.xpose.msra.mxu0 0.0
    %673 = vmatprep.subr.mxu0 0.0
    %674 = vmatpush1.xpose.msra.mxu0 0.0
    %675 = vmatprep.subr.mxu0 0.0
    %676 = vmatpush1.xpose.msra.mxu0 0.0
    %677 = vmatprep.subr.mxu0 0.0
    %678 = vmatpush1.xpose.msra.mxu0 0.0
    %679 = vmatprep.subr.mxu0 0.0
    %680 = vmatpush1.xpose.msra.mxu0 0.0
    %681 = vmatprep.subr.mxu0 0.0
    %682 = vmatpush1.xpose.msra.mxu0 0.0
    %683 = vmatprep.subr.mxu0 0.0
    %684 = vmatpush1.xpose.msra.mxu0 0.0
    %685 = vmatprep.mubr.f32.mxu0 0.0
    %686 = vmatmul.mubr.f32.gmra.mrb[0].mxu0 %v617
    %v687 = vpop.f32.mrb[0].mxu0
    %v688 = vadd.f32 0.0, %v687
    %v689 = vpop.f32.mrb[0].mxu0
    %690 = vdwg.mxu0
    %v691 = vmul.f32 %v688, 0.25
    %v692 = vadd.f32 %v691, %v522
    %v693 = vsel %vm524, %v692, -inf
    %694 = vmax.xlane.f32.xlu0 %v693
    %v695 = vpop.xlane.xlu0 %694
    %v696 = vsub.f32 %v692, %v695
    %v697 = vmul.f32 %v696, 1.442695
    %v698 = vpow.pop %v697
    %v699 = vsel %vm524, %v698, 0.0
    %700 = vadd.xlane.f32.xlu0 %v699
    %v701 = vpop.xlane.xlu0 %700
    %v702 = vrcp.pop %v701
    %v703 = vmul.f32 %v698, %v702
    %704 = vrot.lane.b32.xlu0 %v432, 48
    %v705 = vpop.permute.xlu0 %704
    %v708 = vsel %vm524, %v703, 0
    %710 = vmatprep.subr.mxu0 0.0
    %711 = vmatpush1.msra.mxu0 %v705
    %712 = vmatprep.subr.mxu0 0.0
    %713 = vmatpush1.msra.mxu0 0.0
    %714 = vmatprep.subr.mxu0 0.0
    %715 = vmatpush1.msra.mxu0 0.0
    %716 = vmatprep.subr.mxu0 0.0
    %717 = vmatpush1.msra.mxu0 0.0
    %718 = vmatprep.subr.mxu0 0.0
    %719 = vmatpush1.msra.mxu0 0.0
    %720 = vmatprep.subr.mxu0 0.0
    %721 = vmatpush1.msra.mxu0 0.0
    %722 = vmatprep.subr.mxu0 0.0
    %723 = vmatpush1.msra.mxu0 0.0
    %724 = vmatprep.subr.mxu0 0.0
    %725 = vmatpush1.msra.mxu0 0.0
    %726 = vmatprep.subr.mxu0 0.0
    %727 = vmatpush1.msra.mxu0 0.0
    %728 = vmatprep.subr.mxu0 0.0
    %729 = vmatpush1.msra.mxu0 0.0
    %730 = vmatprep.subr.mxu0 0.0
    %731 = vmatpush1.msra.mxu0 0.0
    %732 = vmatprep.subr.mxu0 0.0
    %733 = vmatpush1.msra.mxu0 0.0
    %734 = vmatprep.subr.mxu0 0.0
    %735 = vmatpush1.msra.mxu0 0.0
    %736 = vmatprep.subr.mxu0 0.0
    %737 = vmatpush1.msra.mxu0 0.0
    %738 = vmatprep.subr.mxu0 0.0
    %739 = vmatpush1.msra.mxu0 0.0
    %740 = vmatprep.subr.mxu0 0.0
    %741 = vmatpush1.msra.mxu0 0.0
    %742 = vmatprep.subr.mxu0 0.0
    %743 = vmatpush1.msra.mxu0 0.0
    %744 = vmatprep.subr.mxu0 0.0
    %745 = vmatpush1.msra.mxu0 0.0
    %746 = vmatprep.subr.mxu0 0.0
    %747 = vmatpush1.msra.mxu0 0.0
    %748 = vmatprep.subr.mxu0 0.0
    %749 = vmatpush1.msra.mxu0 0.0
    %750 = vmatprep.subr.mxu0 0.0
    %751 = vmatpush1.msra.mxu0 0.0
    %752 = vmatprep.subr.mxu0 0.0
    %753 = vmatpush1.msra.mxu0 0.0
    %754 = vmatprep.subr.mxu0 0.0
    %755 = vmatpush1.msra.mxu0 0.0
    %756 = vmatprep.subr.mxu0 0.0
    %757 = vmatpush1.msra.mxu0 0.0
    %758 = vmatprep.subr.mxu0 0.0
    %759 = vmatpush1.msra.mxu0 0.0
    %760 = vmatprep.subr.mxu0 0.0
    %761 = vmatpush1.msra.mxu0 0.0
    %762 = vmatprep.subr.mxu0 0.0
    %763 = vmatpush1.msra.mxu0 0.0
    %764 = vmatprep.subr.mxu0 0.0
    %765 = vmatpush1.msra.mxu0 0.0
    %766 = vmatprep.subr.mxu0 0.0
    %767 = vmatpush1.msra.mxu0 0.0
    %768 = vmatprep.subr.mxu0 0.0
    %769 = vmatpush1.msra.mxu0 0.0
    %770 = vmatprep.subr.mxu0 0.0
    %771 = vmatpush1.msra.mxu0 0.0
    %772 = vmatprep.subr.mxu0 0.0
    %773 = vmatpush1.msra.mxu0 0.0
    %774 = vmatprep.mubr.f32.mxu0 0.0
    %775 = vmatmul.mubr.f32.gmra.mrb[0].mxu0 %v708
    %v776 = vpop.f32.mrb[0].mxu0
    %v777 = vadd.f32 0.0, %v776
    %v778 = vpop.f32.mrb[0].mxu0
    %779 = vdwg.mxu0
    %781 = vrot.lane.b32.xlu0 %v777, 16
    %v782 = vpop.permute.xlu0 %781
    %vm784 = vcmask 261248
    %785 = vst.msk [vmem:[#allocation2] sm:$0xff] %vm784, %v782
    %787 = vrot.lane.b32.xlu0 %v437, 96
    %v788 = vpop.permute.xlu0 %787
    %v789 = vsel %vm443, %v437, 0
    %v791 = vsel %vm443, %v788, 0
    %793 = vmatprep.subr.mxu0 0.0
    %794 = vmatpush1.xpose.msra.mxu0 %v791
    %795 = vmatprep.subr.mxu0 0.0
    %796 = vmatpush1.xpose.msra.mxu0 0.0
    %797 = vmatprep.subr.mxu0 0.0
    %798 = vmatpush1.xpose.msra.mxu0 0.0
    %799 = vmatprep.subr.mxu0 0.0
    %800 = vmatpush1.xpose.msra.mxu0 0.0
    %801 = vmatprep.subr.mxu0 0.0
    %802 = vmatpush1.xpose.msra.mxu0 0.0
    %803 = vmatprep.subr.mxu0 0.0
    %804 = vmatpush1.xpose.msra.mxu0 0.0
    %805 = vmatprep.subr.mxu0 0.0
    %806 = vmatpush1.xpose.msra.mxu0 0.0
    %807 = vmatprep.subr.mxu0 0.0
    %808 = vmatpush1.xpose.msra.mxu0 0.0
    %809 = vmatprep.subr.mxu0 0.0
    %810 = vmatpush1.xpose.msra.mxu0 0.0
    %811 = vmatprep.subr.mxu0 0.0
    %812 = vmatpush1.xpose.msra.mxu0 0.0
    %813 = vmatprep.subr.mxu0 0.0
    %814 = vmatpush1.xpose.msra.mxu0 0.0
    %815 = vmatprep.subr.mxu0 0.0
    %816 = vmatpush1.xpose.msra.mxu0 0.0
    %817 = vmatprep.subr.mxu0 0.0
    %818 = vmatpush1.xpose.msra.mxu0 0.0
    %819 = vmatprep.subr.mxu0 0.0
    %820 = vmatpush1.xpose.msra.mxu0 0.0
    %821 = vmatprep.subr.mxu0 0.0
    %822 = vmatpush1.xpose.msra.mxu0 0.0
    %823 = vmatprep.subr.mxu0 0.0
    %824 = vmatpush1.xpose.msra.mxu0 0.0
    %825 = vmatprep.subr.mxu0 0.0
    %826 = vmatpush1.xpose.msra.mxu0 0.0
    %827 = vmatprep.subr.mxu0 0.0
    %828 = vmatpush1.xpose.msra.mxu0 0.0
    %829 = vmatprep.subr.mxu0 0.0
    %830 = vmatpush1.xpose.msra.mxu0 0.0
    %831 = vmatprep.subr.mxu0 0.0
    %832 = vmatpush1.xpose.msra.mxu0 0.0
    %833 = vmatprep.subr.mxu0 0.0
    %834 = vmatpush1.xpose.msra.mxu0 0.0
    %835 = vmatprep.subr.mxu0 0.0
    %836 = vmatpush1.xpose.msra.mxu0 0.0
    %837 = vmatprep.subr.mxu0 0.0
    %838 = vmatpush1.xpose.msra.mxu0 0.0
    %839 = vmatprep.subr.mxu0 0.0
    %840 = vmatpush1.xpose.msra.mxu0 0.0
    %841 = vmatprep.subr.mxu0 0.0
    %842 = vmatpush1.xpose.msra.mxu0 0.0
    %843 = vmatprep.subr.mxu0 0.0
    %844 = vmatpush1.xpose.msra.mxu0 0.0
    %845 = vmatprep.subr.mxu0 0.0
    %846 = vmatpush1.xpose.msra.mxu0 0.0
    %847 = vmatprep.subr.mxu0 0.0
    %848 = vmatpush1.xpose.msra.mxu0 0.0
    %849 = vmatprep.subr.mxu0 0.0
    %850 = vmatpush1.xpose.msra.mxu0 0.0
    %851 = vmatprep.subr.mxu0 0.0
    %852 = vmatpush1.xpose.msra.mxu0 0.0
    %853 = vmatprep.subr.mxu0 0.0
    %854 = vmatpush1.xpose.msra.mxu0 0.0
    %855 = vmatprep.subr.mxu0 0.0
    %856 = vmatpush1.xpose.msra.mxu0 0.0
    %857 = vmatprep.mubr.f32.mxu0 0.0
    %858 = vmatmul.mubr.f32.gmra.mrb[0].mxu0 %v789
    %v859 = vpop.f32.mrb[0].mxu0
    %v860 = vadd.f32 0.0, %v859
    %v861 = vpop.f32.mrb[0].mxu0
    %862 = vdwg.mxu0
    %v863 = vmul.f32 %v860, 0.25
    %v864 = vlaneseq
    %v865 = vshrl.u32 %v864, 7
    %v866 = vsub.s32 1, %v865
    %v867 = vrot.slane %v347, %v866
    %v868 = vadd.f32 %v863, %v867
    %v869 = vsel %vm524, %v868, -inf
    %870 = vmax.xlane.f32.xlu0 %v869
    %v871 = vpop.xlane.xlu0 %870
    %v872 = vsub.f32 %v868, %v871
    %v873 = vmul.f32 %v872, 1.442695
    %v874 = vpow.pop %v873
    %v875 = vsel %vm524, %v874, 0.0
    %876 = vadd.xlane.f32.xlu0 %v875
    %v877 = vpop.xlane.xlu0 %876
    %v878 = vrcp.pop %v877
    %v879 = vmul.f32 %v874, %v878
    %880 = vrot.lane.b32.xlu0 %v437, 64
    %v881 = vpop.permute.xlu0 %880
    %v884 = vsel %vm524, %v879, 0
    %886 = vmatprep.subr.mxu0 0.0
    %887 = vmatpush1.msra.mxu0 %v881
    %888 = vmatprep.subr.mxu0 0.0
    %889 = vmatpush1.msra.mxu0 0.0
    %890 = vmatprep.subr.mxu0 0.0
    %891 = vmatpush1.msra.mxu0 0.0
    %892 = vmatprep.subr.mxu0 0.0
    %893 = vmatpush1.msra.mxu0 0.0
    %894 = vmatprep.subr.mxu0 0.0
    %895 = vmatpush1.msra.mxu0 0.0
    %896 = vmatprep.subr.mxu0 0.0
    %897 = vmatpush1.msra.mxu0 0.0
    %898 = vmatprep.subr.mxu0 0.0
    %899 = vmatpush1.msra.mxu0 0.0
    %900 = vmatprep.subr.mxu0 0.0
    %901 = vmatpush1.msra.mxu0 0.0
    %902 = vmatprep.subr.mxu0 0.0
    %903 = vmatpush1.msra.mxu0 0.0
    %904 = vmatprep.subr.mxu0 0.0
    %905 = vmatpush1.msra.mxu0 0.0
    %906 = vmatprep.subr.mxu0 0.0
    %907 = vmatpush1.msra.mxu0 0.0
    %908 = vmatprep.subr.mxu0 0.0
    %909 = vmatpush1.msra.mxu0 0.0
    %910 = vmatprep.subr.mxu0 0.0
    %911 = vmatpush1.msra.mxu0 0.0
    %912 = vmatprep.subr.mxu0 0.0
    %913 = vmatpush1.msra.mxu0 0.0
    %914 = vmatprep.subr.mxu0 0.0
    %915 = vmatpush1.msra.mxu0 0.0
    %916 = vmatprep.subr.mxu0 0.0
    %917 = vmatpush1.msra.mxu0 0.0
    %918 = vmatprep.subr.mxu0 0.0
    %919 = vmatpush1.msra.mxu0 0.0
    %920 = vmatprep.subr.mxu0 0.0
    %921 = vmatpush1.msra.mxu0 0.0
    %922 = vmatprep.subr.mxu0 0.0
    %923 = vmatpush1.msra.mxu0 0.0
    %924 = vmatprep.subr.mxu0 0.0
    %925 = vmatpush1.msra.mxu0 0.0
    %926 = vmatprep.subr.mxu0 0.0
    %927 = vmatpush1.msra.mxu0 0.0
    %928 = vmatprep.subr.mxu0 0.0
    %929 = vmatpush1.msra.mxu0 0.0
    %930 = vmatprep.subr.mxu0 0.0
    %931 = vmatpush1.msra.mxu0 0.0
    %932 = vmatprep.subr.mxu0 0.0
    %933 = vmatpush1.msra.mxu0 0.0
    %934 = vmatprep.subr.mxu0 0.0
    %935 = vmatpush1.msra.mxu0 0.0
    %936 = vmatprep.subr.mxu0 0.0
    %937 = vmatpush1.msra.mxu0 0.0
    %938 = vmatprep.subr.mxu0 0.0
    %939 = vmatpush1.msra.mxu0 0.0
    %940 = vmatprep.subr.mxu0 0.0
    %941 = vmatpush1.msra.mxu0 0.0
    %942 = vmatprep.subr.mxu0 0.0
    %943 = vmatpush1.msra.mxu0 0.0
    %944 = vmatprep.subr.mxu0 0.0
    %945 = vmatpush1.msra.mxu0 0.0
    %946 = vmatprep.subr.mxu0 0.0
    %947 = vmatpush1.msra.mxu0 0.0
    %948 = vmatprep.subr.mxu0 0.0
    %949 = vmatpush1.msra.mxu0 0.0
    %950 = vmatprep.mubr.f32.mxu0 0.0
    %951 = vmatmul.mubr.f32.gmra.mrb[0].mxu0 %v884
    %v952 = vpop.f32.mrb[0].mxu0
    %v953 = vadd.f32 0.0, %v952
    %v954 = vpop.f32.mrb[0].mxu0
    %955 = vdwg.mxu0
    %956 = vst.msk [vmem:[#allocation2 + $0x8] sm:$0xff] %vm443, %v953
    %957 = vrot.lane.b32.xlu0 %v437, 112
    %v958 = vpop.permute.xlu0 %957
    %959 = vrot.lane.b32.xlu0 %v437, 80
    %v960 = vpop.permute.xlu0 %959
    %v961 = vsel %vm443, %v958, 0
    %v963 = vsel %vm443, %v960, 0
    %965 = vmatprep.subr.mxu0 0.0
    %966 = vmatpush1.xpose.msra.mxu0 %v963
    %967 = vmatprep.subr.mxu0 0.0
    %968 = vmatpush1.xpose.msra.mxu0 0.0
    %969 = vmatprep.subr.mxu0 0.0
    %970 = vmatpush1.xpose.msra.mxu0 0.0
    %971 = vmatprep.subr.mxu0 0.0
    %972 = vmatpush1.xpose.msra.mxu0 0.0
    %973 = vmatprep.subr.mxu0 0.0
    %974 = vmatpush1.xpose.msra.mxu0 0.0
    %975 = vmatprep.subr.mxu0 0.0
    %976 = vmatpush1.xpose.msra.mxu0 0.0
    %977 = vmatprep.subr.mxu0 0.0
    %978 = vmatpush1.xpose.msra.mxu0 0.0
    %979 = vmatprep.subr.mxu0 0.0
    %980 = vmatpush1.xpose.msra.mxu0 0.0
    %981 = vmatprep.subr.mxu0 0.0
    %982 = vmatpush1.xpose.msra.mxu0 0.0
    %983 = vmatprep.subr.mxu0 0.0
    %984 = vmatpush1.xpose.msra.mxu0 0.0
    %985 = vmatprep.subr.mxu0 0.0
    %986 = vmatpush1.xpose.msra.mxu0 0.0
    %987 = vmatprep.subr.mxu0 0.0
    %988 = vmatpush1.xpose.msra.mxu0 0.0
    %989 = vmatprep.subr.mxu0 0.0
    %990 = vmatpush1.xpose.msra.mxu0 0.0
    %991 = vmatprep.subr.mxu0 0.0
    %992 = vmatpush1.xpose.msra.mxu0 0.0
    %993 = vmatprep.subr.mxu0 0.0
    %994 = vmatpush1.xpose.msra.mxu0 0.0
    %995 = vmatprep.subr.mxu0 0.0
    %996 = vmatpush1.xpose.msra.mxu0 0.0
    %997 = vmatprep.subr.mxu0 0.0
    %998 = vmatpush1.xpose.msra.mxu0 0.0
    %999 = vmatprep.subr.mxu0 0.0
    %1000 = vmatpush1.xpose.msra.mxu0 0.0
    %1001 = vmatprep.subr.mxu0 0.0
    %1002 = vmatpush1.xpose.msra.mxu0 0.0
    %1003 = vmatprep.subr.mxu0 0.0
    %1004 = vmatpush1.xpose.msra.mxu0 0.0
    %1005 = vmatprep.subr.mxu0 0.0
    %1006 = vmatpush1.xpose.msra.mxu0 0.0
    %1007 = vmatprep.subr.mxu0 0.0
    %1008 = vmatpush1.xpose.msra.mxu0 0.0
    %1009 = vmatprep.subr.mxu0 0.0
    %1010 = vmatpush1.xpose.msra.mxu0 0.0
    %1011 = vmatprep.subr.mxu0 0.0
    %1012 = vmatpush1.xpose.msra.mxu0 0.0
    %1013 = vmatprep.subr.mxu0 0.0
    %1014 = vmatpush1.xpose.msra.mxu0 0.0
    %1015 = vmatprep.subr.mxu0 0.0
    %1016 = vmatpush1.xpose.msra.mxu0 0.0
    %1017 = vmatprep.subr.mxu0 0.0
    %1018 = vmatpush1.xpose.msra.mxu0 0.0
    %1019 = vmatprep.subr.mxu0 0.0
    %1020 = vmatpush1.xpose.msra.mxu0 0.0
    %1021 = vmatprep.subr.mxu0 0.0
    %1022 = vmatpush1.xpose.msra.mxu0 0.0
    %1023 = vmatprep.subr.mxu0 0.0
    %1024 = vmatpush1.xpose.msra.mxu0 0.0
    %1025 = vmatprep.subr.mxu0 0.0
    %1026 = vmatpush1.xpose.msra.mxu0 0.0
    %1027 = vmatprep.subr.mxu0 0.0
    %1028 = vmatpush1.xpose.msra.mxu0 0.0
    %1029 = vmatprep.mubr.f32.mxu0 0.0
    %1030 = vmatmul.mubr.f32.gmra.mrb[0].mxu0 %v961
    %v1031 = vpop.f32.mrb[0].mxu0
    %v1032 = vadd.f32 0.0, %v1031
    %v1033 = vpop.f32.mrb[0].mxu0
    %1034 = vdwg.mxu0
    %v1035 = vmul.f32 %v1032, 0.25
    %v1036 = vadd.f32 %v1035, %v867
    %v1037 = vsel %vm524, %v1036, -inf
    %1038 = vmax.xlane.f32.xlu0 %v1037
    %v1039 = vpop.xlane.xlu0 %1038
    %v1040 = vsub.f32 %v1036, %v1039
    %v1041 = vmul.f32 %v1040, 1.442695
    %v1042 = vpow.pop %v1041
    %v1043 = vsel %vm524, %v1042, 0.0
    %1044 = vadd.xlane.f32.xlu0 %v1043
    %v1045 = vpop.xlane.xlu0 %1044
    %v1046 = vrcp.pop %v1045
    %v1047 = vmul.f32 %v1042, %v1046
    %1048 = vrot.lane.b32.xlu0 %v437, 48
    %v1049 = vpop.permute.xlu0 %1048
    %v1052 = vsel %vm524, %v1047, 0
    %1054 = vmatprep.subr.mxu0 0.0
    %1055 = vmatpush1.msra.mxu0 %v1049
    %1056 = vmatprep.subr.mxu0 0.0
    %1057 = vmatpush1.msra.mxu0 0.0
    %1058 = vmatprep.subr.mxu0 0.0
    %1059 = vmatpush1.msra.mxu0 0.0
    %1060 = vmatprep.subr.mxu0 0.0
    %1061 = vmatpush1.msra.mxu0 0.0
    %1062 = vmatprep.subr.mxu0 0.0
    %1063 = vmatpush1.msra.mxu0 0.0
    %1064 = vmatprep.subr.mxu0 0.0
    %1065 = vmatpush1.msra.mxu0 0.0
    %1066 = vmatprep.subr.mxu0 0.0
    %1067 = vmatpush1.msra.mxu0 0.0
    %1068 = vmatprep.subr.mxu0 0.0
    %1069 = vmatpush1.msra.mxu0 0.0
    %1070 = vmatprep.subr.mxu0 0.0
    %1071 = vmatpush1.msra.mxu0 0.0
    %1072 = vmatprep.subr.mxu0 0.0
    %1073 = vmatpush1.msra.mxu0 0.0
    %1074 = vmatprep.subr.mxu0 0.0
    %1075 = vmatpush1.msra.mxu0 0.0
    %1076 = vmatprep.subr.mxu0 0.0
    %1077 = vmatpush1.msra.mxu0 0.0
    %1078 = vmatprep.subr.mxu0 0.0
    %1079 = vmatpush1.msra.mxu0 0.0
    %1080 = vmatprep.subr.mxu0 0.0
    %1081 = vmatpush1.msra.mxu0 0.0
    %1082 = vmatprep.subr.mxu0 0.0
    %1083 = vmatpush1.msra.mxu0 0.0
    %1084 = vmatprep.subr.mxu0 0.0
    %1085 = vmatpush1.msra.mxu0 0.0
    %1086 = vmatprep.subr.mxu0 0.0
    %1087 = vmatpush1.msra.mxu0 0.0
    %1088 = vmatprep.subr.mxu0 0.0
    %1089 = vmatpush1.msra.mxu0 0.0
    %1090 = vmatprep.subr.mxu0 0.0
    %1091 = vmatpush1.msra.mxu0 0.0
    %1092 = vmatprep.subr.mxu0 0.0
    %1093 = vmatpush1.msra.mxu0 0.0
    %1094 = vmatprep.subr.mxu0 0.0
    %1095 = vmatpush1.msra.mxu0 0.0
    %1096 = vmatprep.subr.mxu0 0.0
    %1097 = vmatpush1.msra.mxu0 0.0
    %1098 = vmatprep.subr.mxu0 0.0
    %1099 = vmatpush1.msra.mxu0 0.0
    %1100 = vmatprep.subr.mxu0 0.0
    %1101 = vmatpush1.msra.mxu0 0.0
    %1102 = vmatprep.subr.mxu0 0.0
    %1103 = vmatpush1.msra.mxu0 0.0
    %1104 = vmatprep.subr.mxu0 0.0
    %1105 = vmatpush1.msra.mxu0 0.0
    %1106 = vmatprep.subr.mxu0 0.0
    %1107 = vmatpush1.msra.mxu0 0.0
    %1108 = vmatprep.subr.mxu0 0.0
    %1109 = vmatpush1.msra.mxu0 0.0
    %1110 = vmatprep.subr.mxu0 0.0
    %1111 = vmatpush1.msra.mxu0 0.0
    %1112 = vmatprep.subr.mxu0 0.0
    %1113 = vmatpush1.msra.mxu0 0.0
    %1114 = vmatprep.subr.mxu0 0.0
    %1115 = vmatpush1.msra.mxu0 0.0
    %1116 = vmatprep.subr.mxu0 0.0
    %1117 = vmatpush1.msra.mxu0 0.0
    %1118 = vmatprep.mubr.f32.mxu0 0.0
    %1119 = vmatmul.mubr.f32.gmra.mrb[0].mxu0 %v1052
    %v1120 = vpop.f32.mrb[0].mxu0
    %v1121 = vadd.f32 0.0, %v1120
    %v1122 = vpop.f32.mrb[0].mxu0
    %1123 = vdwg.mxu0
    %1125 = vrot.lane.b32.xlu0 %v1121, 16
    %v1126 = vpop.permute.xlu0 %1125
    %1128 = vst.msk [vmem:[#allocation2 + $0x8] sm:$0xff] %vm784, %v1126
    %v1129 = vld [vmem:[#allocation2] sm:$0xff]
    %v1130 = vld [vmem:[#allocation2 + $0x8] sm:$0xff]
    %v1131 = vld [vmem:[%s11] sm:$0xff]
    %v1132 = vld [vmem:[%s11 + $0x8] sm:$0xff]
    %v1133 = vld [vmem:[%s11 + $0x10] sm:$0xff]
    %v1134 = vld [vmem:[%s11 + $0x18] sm:$0xff]
    %v1135 = vld [vmem:[%s12] sm:$0x1]
    %v1137 = vlaneseq
    %v1138 = vshrl.u32 %v1137, 7
    %v1139 = vsub.s32 0, %v1138
    %v1140 = vrot.slane %v1135, %v1139
    %v1143 = vsel %vm301, %v1129, 0
    %v1146 = vsel %vm301, %v1130, 0
    %1148 = vmatprep.subr.mxu0 0.0
    %1149 = vmatpush1.msra.mxu0 %v1131
    %1150 = vmatprep.subr.mxu0 0.0
    %1151 = vmatpush1.msra.mxu0 %v1132
    %1152 = vmatprep.subr.mxu0 0.0
    %1153 = vmatpush1.msra.mxu0 %v1133
    %1154 = vmatprep.subr.mxu0 0.0
    %1155 = vmatpush1.msra.mxu0 %v1134
    %1156 = vmatprep.subr.mxu0 0.0
    %1157 = vmatpush1.msra.mxu0 0.0
    %1158 = vmatprep.subr.mxu0 0.0
    %1159 = vmatpush1.msra.mxu0 0.0
    %1160 = vmatprep.subr.mxu0 0.0
    %1161 = vmatpush1.msra.mxu0 0.0
    %1162 = vmatprep.subr.mxu0 0.0
    %1163 = vmatpush1.msra.mxu0 0.0
    %1164 = vmatprep.subr.mxu0 0.0
    %1165 = vmatpush1.msra.mxu0 0.0
    %1166 = vmatprep.subr.mxu0 0.0
    %1167 = vmatpush1.msra.mxu0 0.0
    %1168 = vmatprep.subr.mxu0 0.0
    %1169 = vmatpush1.msra.mxu0 0.0
    %1170 = vmatprep.subr.mxu0 0.0
    %1171 = vmatpush1.msra.mxu0 0.0
    %1172 = vmatprep.subr.mxu0 0.0
    %1173 = vmatpush1.msra.mxu0 0.0
    %1174 = vmatprep.subr.mxu0 0.0
    %1175 = vmatpush1.msra.mxu0 0.0
    %1176 = vmatprep.subr.mxu0 0.0
    %1177 = vmatpush1.msra.mxu0 0.0
    %1178 = vmatprep.subr.mxu0 0.0
    %1179 = vmatpush1.msra.mxu0 0.0
    %1180 = vmatprep.subr.mxu0 0.0
    %1181 = vmatpush1.msra.mxu0 0.0
    %1182 = vmatprep.subr.mxu0 0.0
    %1183 = vmatpush1.msra.mxu0 0.0
    %1184 = vmatprep.subr.mxu0 0.0
    %1185 = vmatpush1.msra.mxu0 0.0
    %1186 = vmatprep.subr.mxu0 0.0
    %1187 = vmatpush1.msra.mxu0 0.0
    %1188 = vmatprep.subr.mxu0 0.0
    %1189 = vmatpush1.msra.mxu0 0.0
    %1190 = vmatprep.subr.mxu0 0.0
    %1191 = vmatpush1.msra.mxu0 0.0
    %1192 = vmatprep.subr.mxu0 0.0
    %1193 = vmatpush1.msra.mxu0 0.0
    %1194 = vmatprep.subr.mxu0 0.0
    %1195 = vmatpush1.msra.mxu0 0.0
    %1196 = vmatprep.subr.mxu0 0.0
    %1197 = vmatpush1.msra.mxu0 0.0
    %1198 = vmatprep.subr.mxu0 0.0
    %1199 = vmatpush1.msra.mxu0 0.0
    %1200 = vmatprep.subr.mxu0 0.0
    %1201 = vmatpush1.msra.mxu0 0.0
    %1202 = vmatprep.subr.mxu0 0.0
    %1203 = vmatpush1.msra.mxu0 0.0
    %1204 = vmatprep.subr.mxu0 0.0
    %1205 = vmatpush1.msra.mxu0 0.0
    %1206 = vmatprep.subr.mxu0 0.0
    %1207 = vmatpush1.msra.mxu0 0.0
    %1208 = vmatprep.subr.mxu0 0.0
    %1209 = vmatpush1.msra.mxu0 0.0
    %1210 = vmatprep.subr.mxu0 0.0
    %1211 = vmatpush1.msra.mxu0 0.0
    %1212 = vmatprep.mubr.f32.mxu0 0.0
    %1213 = vmatmul.mubr.f32.gmra.mrb[0].mxu0 %v1143
    %v1214 = vpop.f32.mrb[0].mxu0
    %v1215 = vadd.f32 %v1140, %v1214
    %v1216 = vpop.f32.mrb[0].mxu0
    %1217 = vmatprep.mubr.f32.mxu0 0.0
    %1218 = vmatmul.mubr.f32.gmra.mrb[0].mxu0 %v1146
    %v1219 = vpop.f32.mrb[0].mxu0
    %v1220 = vadd.f32 %v1140, %v1219
    %v1221 = vpop.f32.mrb[0].mxu0
    %1222 = vdwg.mxu0
    %v1223 = vadd.f32 %v1215, %v343
    %v1224 = vadd.f32 %v1220, %v344
    %v1225 = vld [vmem:[%s13] sm:$0x1]
    %v1226 = vld [vmem:[%s14] sm:$0x1]
    %v1227 = vsel %vm301, %v1223, 0.0
    %1228 = vadd.xlane.f32.xlu0 %v1227
    %v1229 = vpop.xlane.xlu0 %1228
    %v1230 = vsel %vm301, %v1224, 0.0
    %1231 = vadd.xlane.f32.xlu0 %v1230
    %v1232 = vpop.xlane.xlu0 %1231
    %v1233 = vmul.f32 %v1229, %v308
    %v1234 = vmul.f32 %v1232, %v308
    %v1235 = vsub.f32 %v1223, %v1233
    %v1236 = vsub.f32 %v1224, %v1234
    %v1237 = vmul.f32 %v1235, %v1235
    %v1238 = vmul.f32 %v1236, %v1236
    %v1239 = vsel %vm301, %v1237, 0.0
    %1240 = vadd.xlane.f32.xlu0 %v1239
    %v1241 = vpop.xlane.xlu0 %1240
    %v1242 = vsel %vm301, %v1238, 0.0
    %1243 = vadd.xlane.f32.xlu0 %v1242
    %v1244 = vpop.xlane.xlu0 %1243
    %v1245 = vmul.f32 %v1241, %v308
    %v1246 = vmul.f32 %v1244, %v308
    %v1247 = vadd.f32 %v1245, 1e-12
    %v1248 = vadd.f32 %v1246, 1e-12
    %v1249 = vrsqrt.pop %v1247
    %v1250 = vrsqrt.pop %v1248
    %v1251 = vmul.f32 %v1235, %v1249
    %v1252 = vmul.f32 %v1236, %v1250
    %v1254 = vlaneseq
    %v1255 = vshrl.u32 %v1254, 7
    %v1256 = vsub.s32 0, %v1255
    %v1257 = vrot.slane %v1225, %v1256
    %v1259 = vmul.f32 %v1251, %v1257
    %v1260 = vmul.f32 %v1252, %v1257
    %v1262 = vlaneseq
    %v1263 = vshrl.u32 %v1262, 7
    %v1264 = vsub.s32 0, %v1263
    %v1265 = vrot.slane %v1226, %v1264
    %v1267 = vadd.f32 %v1259, %v1265
    %v1268 = vadd.f32 %v1260, %v1265
    %v1269 = vld [vmem:[%s15] sm:$0xff]
    %v1270 = vld [vmem:[%s15 + $0x8] sm:$0xff]
    %v1271 = vld [vmem:[%s15 + $0x10] sm:$0xff]
    %v1272 = vld [vmem:[%s15 + $0x18] sm:$0xff]
    %v1273 = vld [vmem:[%s16] sm:$0x1]
    %v1275 = vlaneseq
    %v1276 = vshrl.u32 %v1275, 7
    %v1277 = vsub.s32 0, %v1276
    %v1278 = vrot.slane %v1273, %v1277
    %v1281 = vsel %vm301, %v1267, 0
    %v1284 = vsel %vm301, %v1268, 0
    %1286 = vmatprep.subr.mxu0 0.0
    %1287 = vmatpush1.msra.mxu0 %v1269
    %1288 = vmatprep.subr.mxu0 0.0
    %1289 = vmatpush1.msra.mxu0 %v1270
    %1290 = vmatprep.subr.mxu0 0.0
    %1291 = vmatpush1.msra.mxu0 %v1271
    %1292 = vmatprep.subr.mxu0 0.0
    %1293 = vmatpush1.msra.mxu0 %v1272
    %1294 = vmatprep.subr.mxu0 0.0
    %1295 = vmatpush1.msra.mxu0 0.0
    %1296 = vmatprep.subr.mxu0 0.0
    %1297 = vmatpush1.msra.mxu0 0.0
    %1298 = vmatprep.subr.mxu0 0.0
    %1299 = vmatpush1.msra.mxu0 0.0
    %1300 = vmatprep.subr.mxu0 0.0
    %1301 = vmatpush1.msra.mxu0 0.0
    %1302 = vmatprep.subr.mxu0 0.0
    %1303 = vmatpush1.msra.mxu0 0.0
    %1304 = vmatprep.subr.mxu0 0.0
    %1305 = vmatpush1.msra.mxu0 0.0
    %1306 = vmatprep.subr.mxu0 0.0
    %1307 = vmatpush1.msra.mxu0 0.0
    %1308 = vmatprep.subr.mxu0 0.0
    %1309 = vmatpush1.msra.mxu0 0.0
    %1310 = vmatprep.subr.mxu0 0.0
    %1311 = vmatpush1.msra.mxu0 0.0
    %1312 = vmatprep.subr.mxu0 0.0
    %1313 = vmatpush1.msra.mxu0 0.0
    %1314 = vmatprep.subr.mxu0 0.0
    %1315 = vmatpush1.msra.mxu0 0.0
    %1316 = vmatprep.subr.mxu0 0.0
    %1317 = vmatpush1.msra.mxu0 0.0
    %1318 = vmatprep.subr.mxu0 0.0
    %1319 = vmatpush1.msra.mxu0 0.0
    %1320 = vmatprep.subr.mxu0 0.0
    %1321 = vmatpush1.msra.mxu0 0.0
    %1322 = vmatprep.subr.mxu0 0.0
    %1323 = vmatpush1.msra.mxu0 0.0
    %1324 = vmatprep.subr.mxu0 0.0
    %1325 = vmatpush1.msra.mxu0 0.0
    %1326 = vmatprep.subr.mxu0 0.0
    %1327 = vmatpush1.msra.mxu0 0.0
    %1328 = vmatprep.subr.mxu0 0.0
    %1329 = vmatpush1.msra.mxu0 0.0
    %1330 = vmatprep.subr.mxu0 0.0
    %1331 = vmatpush1.msra.mxu0 0.0
    %1332 = vmatprep.subr.mxu0 0.0
    %1333 = vmatpush1.msra.mxu0 0.0
    %1334 = vmatprep.subr.mxu0 0.0
    %1335 = vmatpush1.msra.mxu0 0.0
    %1336 = vmatprep.subr.mxu0 0.0
    %1337 = vmatpush1.msra.mxu0 0.0
    %1338 = vmatprep.subr.mxu0 0.0
    %1339 = vmatpush1.msra.mxu0 0.0
    %1340 = vmatprep.subr.mxu0 0.0
    %1341 = vmatpush1.msra.mxu0 0.0
    %1342 = vmatprep.subr.mxu0 0.0
    %1343 = vmatpush1.msra.mxu0 0.0
    %1344 = vmatprep.subr.mxu0 0.0
    %1345 = vmatpush1.msra.mxu0 0.0
    %1346 = vmatprep.subr.mxu0 0.0
    %1347 = vmatpush1.msra.mxu0 0.0
    %1348 = vmatprep.subr.mxu0 0.0
    %1349 = vmatpush1.msra.mxu0 0.0
    %1350 = vmatprep.mubr.f32.mxu0 0.0
    %1351 = vmatmul.mubr.f32.gmra.mrb[0].mxu0 %v1281
    %v1352 = vpop.f32.mrb[0].mxu0
    %v1353 = vadd.f32 %v1278, %v1352
    %v1354 = vpop.f32.mrb[0].mxu0
    %1355 = vmatprep.mubr.f32.mxu0 0.0
    %1356 = vmatmul.mubr.f32.gmra.mrb[0].mxu0 %v1284
    %v1357 = vpop.f32.mrb[0].mxu0
    %v1358 = vadd.f32 %v1278, %v1357
    %v1359 = vpop.f32.mrb[0].mxu0
    %1360 = vdwg.mxu0
    %v1361 = vmul.f32 %v1353, %v1353
    %v1362 = vmul.f32 %v1358, %v1358
    %v1363 = vmul.f32 %v1353, %v1361
    %v1364 = vmul.f32 %v1358, %v1362
    %v1365 = vmul.f32 %v1363, 0.044715
    %v1366 = vmul.f32 %v1364, 0.044715
    %v1367 = vadd.f32 %v1353, %v1365
    %v1368 = vadd.f32 %v1358, %v1366
    %v1369 = vmul.f32 %v1367, 0.7978846
    %v1370 = vmul.f32 %v1368, 0.7978846
    %v1371 = vtanh.pop %v1369
    %v1372 = vtanh.pop %v1370
    %v1373 = vadd.f32 %v1371, 1.0
    %v1374 = vadd.f32 %v1372, 1.0
    %v1375 = vmul.f32 %v1373, 0.5
    %v1376 = vmul.f32 %v1374, 0.5
    %v1377 = vmul.f32 %v1353, %v1375
    %v1378 = vmul.f32 %v1358, %v1376
    %v1379 = vld [vmem:[%s17] sm:$0xff]
    %v1380 = vld [vmem:[%s17 + $0x8] sm:$0xff]
    %v1381 = vld [vmem:[%s17 + $0x10] sm:$0xff]
    %v1382 = vld [vmem:[%s17 + $0x18] sm:$0xff]
    %v1383 = vld [vmem:[%s17 + $0x20] sm:$0xff]
    %v1384 = vld [vmem:[%s17 + $0x28] sm:$0xff]
    %v1385 = vld [vmem:[%s17 + $0x30] sm:$0xff]
    %v1386 = vld [vmem:[%s17 + $0x38] sm:$0xff]
    %v1387 = vld [vmem:[%s18] sm:$0x1]
    %v1389 = vlaneseq
    %v1390 = vshrl.u32 %v1389, 7
    %v1391 = vsub.s32 0, %v1390
    %v1392 = vrot.slane %v1387, %v1391
    %vm1394 = vcmask 523264
    %v1396 = vsel %vm1394, %v1377, 0
    %v1399 = vsel %vm1394, %v1378, 0
    %1401 = vmatprep.subr.mxu0 0.0
    %1402 = vmatpush1.msra.mxu0 %v1379
    %1403 = vmatprep.subr.mxu0 0.0
    %1404 = vmatpush1.msra.mxu0 %v1380
    %1405 = vmatprep.subr.mxu0 0.0
    %1406 = vmatpush1.msra.mxu0 %v1381
    %1407 = vmatprep.subr.mxu0 0.0
    %1408 = vmatpush1.msra.mxu0 %v1382
    %1409 = vmatprep.subr.mxu0 0.0
    %1410 = vmatpush1.msra.mxu0 %v1383
    %1411 = vmatprep.subr.mxu0 0.0
    %1412 = vmatpush1.msra.mxu0 %v1384
    %1413 = vmatprep.subr.mxu0 0.0
    %1414 = vmatpush1.msra.mxu0 %v1385
    %1415 = vmatprep.subr.mxu0 0.0
    %1416 = vmatpush1.msra.mxu0 %v1386
    %1417 = vmatprep.subr.mxu0 0.0
    %1418 = vmatpush1.msra.mxu0 0.0
    %1419 = vmatprep.subr.mxu0 0.0
    %1420 = vmatpush1.msra.mxu0 0.0
    %1421 = vmatprep.subr.mxu0 0.0
    %1422 = vmatpush1.msra.mxu0 0.0
    %1423 = vmatprep.subr.mxu0 0.0
    %1424 = vmatpush1.msra.mxu0 0.0
    %1425 = vmatprep.subr.mxu0 0.0
    %1426 = vmatpush1.msra.mxu0 0.0
    %1427 = vmatprep.subr.mxu0 0.0
    %1428 = vmatpush1.msra.mxu0 0.0
    %1429 = vmatprep.subr.mxu0 0.0
    %1430 = vmatpush1.msra.mxu0 0.0
    %1431 = vmatprep.subr.mxu0 0.0
    %1432 = vmatpush1.msra.mxu0 0.0
    %1433 = vmatprep.subr.mxu0 0.0
    %1434 = vmatpush1.msra.mxu0 0.0
    %1435 = vmatprep.subr.mxu0 0.0
    %1436 = vmatpush1.msra.mxu0 0.0
    %1437 = vmatprep.subr.mxu0 0.0
    %1438 = vmatpush1.msra.mxu0 0.0
    %1439 = vmatprep.subr.mxu0 0.0
    %1440 = vmatpush1.msra.mxu0 0.0
    %1441 = vmatprep.subr.mxu0 0.0
    %1442 = vmatpush1.msra.mxu0 0.0
    %1443 = vmatprep.subr.mxu0 0.0
    %1444 = vmatpush1.msra.mxu0 0.0
    %1445 = vmatprep.subr.mxu0 0.0
    %1446 = vmatpush1.msra.mxu0 0.0
    %1447 = vmatprep.subr.mxu0 0.0
    %1448 = vmatpush1.msra.mxu0 0.0
    %1449 = vmatprep.subr.mxu0 0.0
    %1450 = vmatpush1.msra.mxu0 0.0
    %1451 = vmatprep.subr.mxu0 0.0
    %1452 = vmatpush1.msra.mxu0 0.0
    %1453 = vmatprep.subr.mxu0 0.0
    %1454 = vmatpush1.msra.mxu0 0.0
    %1455 = vmatprep.subr.mxu0 0.0
    %1456 = vmatpush1.msra.mxu0 0.0
    %1457 = vmatprep.subr.mxu0 0.0
    %1458 = vmatpush1.msra.mxu0 0.0
    %1459 = vmatprep.subr.mxu0 0.0
    %1460 = vmatpush1.msra.mxu0 0.0
    %1461 = vmatprep.subr.mxu0 0.0
    %1462 = vmatpush1.msra.mxu0 0.0
    %1463 = vmatprep.subr.mxu0 0.0
    %1464 = vmatpush1.msra.mxu0 0.0
    %1465 = vmatprep.mubr.f32.mxu0 0.0
    %1466 = vmatmul.mubr.f32.gmra.mrb[0].mxu0 %v1396
    %v1467 = vpop.f32.mrb[0].mxu0
    %v1468 = vadd.f32 %v1392, %v1467
    %v1469 = vpop.f32.mrb[0].mxu0
    %1470 = vmatprep.mubr.f32.mxu0 0.0
    %1471 = vmatmul.mubr.f32.gmra.mrb[0].mxu0 %v1399
    %v1472 = vpop.f32.mrb[0].mxu0
    %v1473 = vadd.f32 %v1392, %v1472
    %v1474 = vpop.f32.mrb[0].mxu0
    %1475 = vdwg.mxu0
    %v1476 = vadd.f32 %v1468, %v1267
    %v1477 = vadd.f32 %v1473, %v1268
    %v1478 = vld [vmem:[%s19] sm:$0x1]
    %v1479 = vld [vmem:[%s20] sm:$0x1]
    %v1480 = vsel %vm301, %v1476, 0.0
    %1481 = vadd.xlane.f32.xlu0 %v1480
    %v1482 = vpop.xlane.xlu0 %1481
    %v1483 = vsel %vm301, %v1477, 0.0
    %1484 = vadd.xlane.f32.xlu0 %v1483
    %v1485 = vpop.xlane.xlu0 %1484
    %v1486 = vmul.f32 %v1482, %v308
    %v1487 = vmul.f32 %v1485, %v308
    %v1488 = vsub.f32 %v1476, %v1486
    %v1489 = vsub.f32 %v1477, %v1487
    %v1490 = vmul.f32 %v1488, %v1488
    %v1491 = vmul.f32 %v1489, %v1489
    %v1492 = vsel %vm301, %v1490, 0.0
    %1493 = vadd.xlane.f32.xlu0 %v1492
    %v1494 = vpop.xlane.xlu0 %1493
    %v1495 = vsel %vm301, %v1491, 0.0
    %1496 = vadd.xlane.f32.xlu0 %v1495
    %v1497 = vpop.xlane.xlu0 %1496
    %v1498 = vmul.f32 %v1494, %v308
    %v1499 = vmul.f32 %v1497, %v308
    %v1500 = vadd.f32 %v1498, 1e-12
    %v1501 = vadd.f32 %v1499, 1e-12
    %v1502 = vrsqrt.pop %v1500
    %v1503 = vrsqrt.pop %v1501
    %v1504 = vmul.f32 %v1488, %v1502
    %v1505 = vmul.f32 %v1489, %v1503
    %v1507 = vlaneseq
    %v1508 = vshrl.u32 %v1507, 7
    %v1509 = vsub.s32 0, %v1508
    %v1510 = vrot.slane %v1478, %v1509
    %v1512 = vmul.f32 %v1504, %v1510
    %v1513 = vmul.f32 %v1505, %v1510
    %v1515 = vlaneseq
    %v1516 = vshrl.u32 %v1515, 7
    %v1517 = vsub.s32 0, %v1516
    %v1518 = vrot.slane %v1479, %v1517
    %v1520 = vadd.f32 %v1512, %v1518
    %v1521 = vadd.f32 %v1513, %v1518
    %s1522 = scalar_lea.vmem %s9, 32
    %v1523 = vld [vmem:[%s1522] sm:$0xff]
    %v1524 = vld [vmem:[%s1522 + $0x8] sm:$0xff]
    %v1525 = vld [vmem:[%s1522 + $0x10] sm:$0xff]
    %v1526 = vld [vmem:[%s1522 + $0x18] sm:$0xff]
    %s1527 = scalar_lea.vmem %s10, 1
    %v1528 = vld [vmem:[%s1527] sm:$0x1]
    %v1530 = vlaneseq
    %v1531 = vshrl.u32 %v1530, 7
    %v1532 = vsub.s32 0, %v1531
    %v1533 = vrot.slane %v1528, %v1532
    %v1536 = vsel %vm301, %v1520, 0
    %v1539 = vsel %vm301, %v1521, 0
    %1541 = vmatprep.subr.mxu0 0.0
    %1542 = vmatpush1.msra.mxu0 %v1523
    %1543 = vmatprep.subr.mxu0 0.0
    %1544 = vmatpush1.msra.mxu0 %v1524
    %1545 = vmatprep.subr.mxu0 0.0
    %1546 = vmatpush1.msra.mxu0 %v1525
    %1547 = vmatprep.subr.mxu0 0.0
    %1548 = vmatpush1.msra.mxu0 %v1526
    %1549 = vmatprep.subr.mxu0 0.0
    %1550 = vmatpush1.msra.mxu0 0.0
    %1551 = vmatprep.subr.mxu0 0.0
    %1552 = vmatpush1.msra.mxu0 0.0
    %1553 = vmatprep.subr.mxu0 0.0
    %1554 = vmatpush1.msra.mxu0 0.0
    %1555 = vmatprep.subr.mxu0 0.0
    %1556 = vmatpush1.msra.mxu0 0.0
    %1557 = vmatprep.subr.mxu0 0.0
    %1558 = vmatpush1.msra.mxu0 0.0
    %1559 = vmatprep.subr.mxu0 0.0
    %1560 = vmatpush1.msra.mxu0 0.0
    %1561 = vmatprep.subr.mxu0 0.0
    %1562 = vmatpush1.msra.mxu0 0.0
    %1563 = vmatprep.subr.mxu0 0.0
    %1564 = vmatpush1.msra.mxu0 0.0
    %1565 = vmatprep.subr.mxu0 0.0
    %1566 = vmatpush1.msra.mxu0 0.0
    %1567 = vmatprep.subr.mxu0 0.0
    %1568 = vmatpush1.msra.mxu0 0.0
    %1569 = vmatprep.subr.mxu0 0.0
    %1570 = vmatpush1.msra.mxu0 0.0
    %1571 = vmatprep.subr.mxu0 0.0
    %1572 = vmatpush1.msra.mxu0 0.0
    %1573 = vmatprep.subr.mxu0 0.0
    %1574 = vmatpush1.msra.mxu0 0.0
    %1575 = vmatprep.subr.mxu0 0.0
    %1576 = vmatpush1.msra.mxu0 0.0
    %1577 = vmatprep.subr.mxu0 0.0
    %1578 = vmatpush1.msra.mxu0 0.0
    %1579 = vmatprep.subr.mxu0 0.0
    %1580 = vmatpush1.msra.mxu0 0.0
    %1581 = vmatprep.subr.mxu0 0.0
    %1582 = vmatpush1.msra.mxu0 0.0
    %1583 = vmatprep.subr.mxu0 0.0
    %1584 = vmatpush1.msra.mxu0 0.0
    %1585 = vmatprep.subr.mxu0 0.0
    %1586 = vmatpush1.msra.mxu0 0.0
    %1587 = vmatprep.subr.mxu0 0.0
    %1588 = vmatpush1.msra.mxu0 0.0
    %1589 = vmatprep.subr.mxu0 0.0
    %1590 = vmatpush1.msra.mxu0 0.0
    %1591 = vmatprep.subr.mxu0 0.0
    %1592 = vmatpush1.msra.mxu0 0.0
    %1593 = vmatprep.subr.mxu0 0.0
    %1594 = vmatpush1.msra.mxu0 0.0
    %1595 = vmatprep.subr.mxu0 0.0
    %1596 = vmatpush1.msra.mxu0 0.0
    %1597 = vmatprep.subr.mxu0 0.0
    %1598 = vmatpush1.msra.mxu0 0.0
    %1599 = vmatprep.subr.mxu0 0.0
    %1600 = vmatpush1.msra.mxu0 0.0
    %1601 = vmatprep.subr.mxu0 0.0
    %1602 = vmatpush1.msra.mxu0 0.0
    %1603 = vmatprep.subr.mxu0 0.0
    %1604 = vmatpush1.msra.mxu0 0.0
    %1605 = vmatprep.mubr.f32.mxu0 0.0
    %1606 = vmatmul.mubr.f32.gmra.mrb[0].mxu0 %v1536
    %v1607 = vpop.f32.mrb[0].mxu0
    %v1608 = vadd.f32 %v1533, %v1607
    %v1609 = vpop.f32.mrb[0].mxu0
    %1610 = vmatprep.mubr.f32.mxu0 0.0
    %1611 = vmatmul.mubr.f32.gmra.mrb[0].mxu0 %v1539
    %v1612 = vpop.f32.mrb[0].mxu0
    %v1613 = vadd.f32 %v1533, %v1612
    %v1614 = vpop.f32.mrb[0].mxu0
    %1615 = vdwg.mxu0
    %1617 = vrot.lane.b32.xlu0 %v1608, 96
    %v1618 = vpop.permute.xlu0 %1617
    %v1619 = vsel %vm443, %v1608, 0
    %v1621 = vsel %vm443, %v1618, 0
    %1623 = vmatprep.subr.mxu0 0.0
    %1624 = vmatpush1.xpose.msra.mxu0 %v1621
    %1625 = vmatprep.subr.mxu0 0.0
    %1626 = vmatpush1.xpose.msra.mxu0 0.0
    %1627 = vmatprep.subr.mxu0 0.0
    %1628 = vmatpush1.xpose.msra.mxu0 0.0
    %1629 = vmatprep.subr.mxu0 0.0
    %1630 = vmatpush1.xpose.msra.mxu0 0.0
    %1631 = vmatprep.subr.mxu0 0.0
    %1632 = vmatpush1.xpose.msra.mxu0 0.0
    %1633 = vmatprep.subr.mxu0 0.0
    %1634 = vmatpush1.xpose.msra.mxu0 0.0
    %1635 = vmatprep.subr.mxu0 0.0
    %1636 = vmatpush1.xpose.msra.mxu0 0.0
    %1637 = vmatprep.subr.mxu0 0.0
    %1638 = vmatpush1.xpose.msra.mxu0 0.0
    %1639 = vmatprep.subr.mxu0 0.0
    %1640 = vmatpush1.xpose.msra.mxu0 0.0
    %1641 = vmatprep.subr.mxu0 0.0
    %1642 = vmatpush1.xpose.msra.mxu0 0.0
    %1643 = vmatprep.subr.mxu0 0.0
    %1644 = vmatpush1.xpose.msra.mxu0 0.0
    %1645 = vmatprep.subr.mxu0 0.0
    %1646 = vmatpush1.xpose.msra.mxu0 0.0
    %1647 = vmatprep.subr.mxu0 0.0
    %1648 = vmatpush1.xpose.msra.mxu0 0.0
    %1649 = vmatprep.subr.mxu0 0.0
    %1650 = vmatpush1.xpose.msra.mxu0 0.0
    %1651 = vmatprep.subr.mxu0 0.0
    %1652 = vmatpush1.xpose.msra.mxu0 0.0
    %1653 = vmatprep.subr.mxu0 0.0
    %1654 = vmatpush1.xpose.msra.mxu0 0.0
    %1655 = vmatprep.subr.mxu0 0.0
    %1656 = vmatpush1.xpose.msra.mxu0 0.0
    %1657 = vmatprep.subr.mxu0 0.0
    %1658 = vmatpush1.xpose.msra.mxu0 0.0
    %1659 = vmatprep.subr.mxu0 0.0
    %1660 = vmatpush1.xpose.msra.mxu0 0.0
    %1661 = vmatprep.subr.mxu0 0.0
    %1662 = vmatpush1.xpose.msra.mxu0 0.0
    %1663 = vmatprep.subr.mxu0 0.0
    %1664 = vmatpush1.xpose.msra.mxu0 0.0
    %1665 = vmatprep.subr.mxu0 0.0
    %1666 = vmatpush1.xpose.msra.mxu0 0.0
    %1667 = vmatprep.subr.mxu0 0.0
    %1668 = vmatpush1.xpose.msra.mxu0 0.0
    %1669 = vmatprep.subr.mxu0 0.0
    %1670 = vmatpush1.xpose.msra.mxu0 0.0
    %1671 = vmatprep.subr.mxu0 0.0
    %1672 = vmatpush1.xpose.msra.mxu0 0.0
    %1673 = vmatprep.subr.mxu0 0.0
    %1674 = vmatpush1.xpose.msra.mxu0 0.0
    %1675 = vmatprep.subr.mxu0 0.0
    %1676 = vmatpush1.xpose.msra.mxu0 0.0
    %1677 = vmatprep.subr.mxu0 0.0
    %1678 = vmatpush1.xpose.msra.mxu0 0.0
    %1679 = vmatprep.subr.mxu0 0.0
    %1680 = vmatpush1.xpose.msra.mxu0 0.0
    %1681 = vmatprep.subr.mxu0 0.0
    %1682 = vmatpush1.xpose.msra.mxu0 0.0
    %1683 = vmatprep.subr.mxu0 0.0
    %1684 = vmatpush1.xpose.msra.mxu0 0.0
    %1685 = vmatprep.subr.mxu0 0.0
    %1686 = vmatpush1.xpose.msra.mxu0 0.0
    %1687 = vmatprep.mubr.f32.mxu0 0.0
    %1688 = vmatmul.mubr.f32.gmra.mrb[0].mxu0 %v1619
    %v1689 = vpop.f32.mrb[0].mxu0
    %v1690 = vadd.f32 0.0, %v1689
    %v1691 = vpop.f32.mrb[0].mxu0
    %1692 = vdwg.mxu0
    %v1693 = vmul.f32 %v1690, 0.25
    %v1694 = vadd.f32 %v1693, %v522
    %v1695 = vsel %vm524, %v1694, -inf
    %1696 = vmax.xlane.f32.xlu0 %v1695
    %v1697 = vpop.xlane.xlu0 %1696
    %v1698 = vsub.f32 %v1694, %v1697
    %v1699 = vmul.f32 %v1698, 1.442695
    %v1700 = vpow.pop %v1699
    %v1701 = vsel %vm524, %v1700, 0.0
    %1702 = vadd.xlane.f32.xlu0 %v1701
    %v1703 = vpop.xlane.xlu0 %1702
    %v1704 = vrcp.pop %v1703
    %v1705 = vmul.f32 %v1700, %v1704
    %1706 = vrot.lane.b32.xlu0 %v1608, 64
    %v1707 = vpop.permute.xlu0 %1706
    %v1710 = vsel %vm524, %v1705, 0
    %1712 = vmatprep.subr.mxu0 0.0
    %1713 = vmatpush1.msra.mxu0 %v1707
    %1714 = vmatprep.subr.mxu0 0.0
    %1715 = vmatpush1.msra.mxu0 0.0
    %1716 = vmatprep.subr.mxu0 0.0
    %1717 = vmatpush1.msra.mxu0 0.0
    %1718 = vmatprep.subr.mxu0 0.0
    %1719 = vmatpush1.msra.mxu0 0.0
    %1720 = vmatprep.subr.mxu0 0.0
    %1721 = vmatpush1.msra.mxu0 0.0
    %1722 = vmatprep.subr.mxu0 0.0
    %1723 = vmatpush1.msra.mxu0 0.0
    %1724 = vmatprep.subr.mxu0 0.0
    %1725 = vmatpush1.msra.mxu0 0.0
    %1726 = vmatprep.subr.mxu0 0.0
    %1727 = vmatpush1.msra.mxu0 0.0
    %1728 = vmatprep.subr.mxu0 0.0
    %1729 = vmatpush1.msra.mxu0 0.0
    %1730 = vmatprep.subr.mxu0 0.0
    %1731 = vmatpush1.msra.mxu0 0.0
    %1732 = vmatprep.subr.mxu0 0.0
    %1733 = vmatpush1.msra.mxu0 0.0
    %1734 = vmatprep.subr.mxu0 0.0
    %1735 = vmatpush1.msra.mxu0 0.0
    %1736 = vmatprep.subr.mxu0 0.0
    %1737 = vmatpush1.msra.mxu0 0.0
    %1738 = vmatprep.subr.mxu0 0.0
    %1739 = vmatpush1.msra.mxu0 0.0
    %1740 = vmatprep.subr.mxu0 0.0
    %1741 = vmatpush1.msra.mxu0 0.0
    %1742 = vmatprep.subr.mxu0 0.0
    %1743 = vmatpush1.msra.mxu0 0.0
    %1744 = vmatprep.subr.mxu0 0.0
    %1745 = vmatpush1.msra.mxu0 0.0
    %1746 = vmatprep.subr.mxu0 0.0
    %1747 = vmatpush1.msra.mxu0 0.0
    %1748 = vmatprep.subr.mxu0 0.0
    %1749 = vmatpush1.msra.mxu0 0.0
    %1750 = vmatprep.subr.mxu0 0.0
    %1751 = vmatpush1.msra.mxu0 0.0
    %1752 = vmatprep.subr.mxu0 0.0
    %1753 = vmatpush1.msra.mxu0 0.0
    %1754 = vmatprep.subr.mxu0 0.0
    %1755 = vmatpush1.msra.mxu0 0.0
    %1756 = vmatprep.subr.mxu0 0.0
    %1757 = vmatpush1.msra.mxu0 0.0
    %1758 = vmatprep.subr.mxu0 0.0
    %1759 = vmatpush1.msra.mxu0 0.0
    %1760 = vmatprep.subr.mxu0 0.0
    %1761 = vmatpush1.msra.mxu0 0.0
    %1762 = vmatprep.subr.mxu0 0.0
    %1763 = vmatpush1.msra.mxu0 0.0
    %1764 = vmatprep.subr.mxu0 0.0
    %1765 = vmatpush1.msra.mxu0 0.0
    %1766 = vmatprep.subr.mxu0 0.0
    %1767 = vmatpush1.msra.mxu0 0.0
    %1768 = vmatprep.subr.mxu0 0.0
    %1769 = vmatpush1.msra.mxu0 0.0
    %1770 = vmatprep.subr.mxu0 0.0
    %1771 = vmatpush1.msra.mxu0 0.0
    %1772 = vmatprep.subr.mxu0 0.0
    %1773 = vmatpush1.msra.mxu0 0.0
    %1774 = vmatprep.subr.mxu0 0.0
    %1775 = vmatpush1.msra.mxu0 0.0
    %1776 = vmatprep.mubr.f32.mxu0 0.0
    %1777 = vmatmul.mubr.f32.gmra.mrb[0].mxu0 %v1710
    %v1778 = vpop.f32.mrb[0].mxu0
    %v1779 = vadd.f32 0.0, %v1778
    %v1780 = vpop.f32.mrb[0].mxu0
    %1781 = vdwg.mxu0
    %1782 = vst.msk [vmem:[#allocation2] sm:$0xff] %vm443, %v1779
    %1783 = vrot.lane.b32.xlu0 %v1608, 112
    %v1784 = vpop.permute.xlu0 %1783
    %1785 = vrot.lane.b32.xlu0 %v1608, 80
    %v1786 = vpop.permute.xlu0 %1785
    %v1787 = vsel %vm443, %v1784, 0
    %v1789 = vsel %vm443, %v1786, 0
    %1791 = vmatprep.subr.mxu0 0.0
    %1792 = vmatpush1.xpose.msra.mxu0 %v1789
    %1793 = vmatprep.subr.mxu0 0.0
    %1794 = vmatpush1.xpose.msra.mxu0 0.0
    %1795 = vmatprep.subr.mxu0 0.0
    %1796 = vmatpush1.xpose.msra.mxu0 0.0
    %1797 = vmatprep.subr.mxu0 0.0
    %1798 = vmatpush1.xpose.msra.mxu0 0.0
    %1799 = vmatprep.subr.mxu0 0.0
    %1800 = vmatpush1.xpose.msra.mxu0 0.0
    %1801 = vmatprep.subr.mxu0 0.0
    %1802 = vmatpush1.xpose.msra.mxu0 0.0
    %1803 = vmatprep.subr.mxu0 0.0
    %1804 = vmatpush1.xpose.msra.mxu0 0.0
    %1805 = vmatprep.subr.mxu0 0.0
    %1806 = vmatpush1.xpose.msra.mxu0 0.0
    %1807 = vmatprep.subr.mxu0 0.0
    %1808 = vmatpush1.xpose.msra.mxu0 0.0
    %1809 = vmatprep.subr.mxu0 0.0
    %1810 = vmatpush1.xpose.msra.mxu0 0.0
    %1811 = vmatprep.subr.mxu0 0.0
    %1812 = vmatpush1.xpose.msra.mxu0 0.0
    %1813 = vmatprep.subr.mxu0 0.0
    %1814 = vmatpush1.xpose.msra.mxu0 0.0
    %1815 = vmatprep.subr.mxu0 0.0
    %1816 = vmatpush1.xpose.msra.mxu0 0.0
    %1817 = vmatprep.subr.mxu0 0.0
    %1818 = vmatpush1.xpose.msra.mxu0 0.0
    %1819 = vmatprep.subr.mxu0 0.0
    %1820 = vmatpush1.xpose.msra.mxu0 0.0
    %1821 = vmatprep.subr.mxu0 0.0
    %1822 = vmatpush1.xpose.msra.mxu0 0.0
    %1823 = vmatprep.subr.mxu0 0.0
    %1824 = vmatpush1.xpose.msra.mxu0 0.0
    %1825 = vmatprep.subr.mxu0 0.0
    %1826 = vmatpush1.xpose.msra.mxu0 0.0
    %1827 = vmatprep.subr.mxu0 0.0
    %1828 = vmatpush1.xpose.msra.mxu0 0.0
    %1829 = vmatprep.subr.mxu0 0.0
    %1830 = vmatpush1.xpose.msra.mxu0 0.0
    %1831 = vmatprep.subr.mxu0 0.0
    %1832 = vmatpush1.xpose.msra.mxu0 0.0
    %1833 = vmatprep.subr.mxu0 0.0
    %1834 = vmatpush1.xpose.msra.mxu0 0.0
    %1835 = vmatprep.subr.mxu0 0.0
    %1836 = vmatpush1.xpose.msra.mxu0 0.0
    %1837 = vmatprep.subr.mxu0 0.0
    %1838 = vmatpush1.xpose.msra.mxu0 0.0
    %1839 = vmatprep.subr.mxu0 0.0
    %1840 = vmatpush1.xpose.msra.mxu0 0.0
    %1841 = vmatprep.subr.mxu0 0.0
    %1842 = vmatpush1.xpose.msra.mxu0 0.0
    %1843 = vmatprep.subr.mxu0 0.0
    %1844 = vmatpush1.xpose.msra.mxu0 0.0
    %1845 = vmatprep.subr.mxu0 0.0
    %1846 = vmatpush1.xpose.msra.mxu0 0.0
    %1847 = vmatprep.subr.mxu0 0.0
    %1848 = vmatpush1.xpose.msra.mxu0 0.0
    %1849 = vmatprep.subr.mxu0 0.0
    %1850 = vmatpush1.xpose.msra.mxu0 0.0
    %1851 = vmatprep.subr.mxu0 0.0
    %1852 = vmatpush1.xpose.msra.mxu0 0.0
    %1853 = vmatprep.subr.mxu0 0.0
    %1854 = vmatpush1.xpose.msra.mxu0 0.0
    %1855 = vmatprep.mubr.f32.mxu0 0.0
    %1856 = vmatmul.mubr.f32.gmra.mrb[0].mxu0 %v1787
    %v1857 = vpop.f32.mrb[0].mxu0
    %v1858 = vadd.f32 0.0, %v1857
    %v1859 = vpop.f32.mrb[0].mxu0
    %1860 = vdwg.mxu0
    %v1861 = vmul.f32 %v1858, 0.25
    %v1862 = vadd.f32 %v1861, %v522
    %v1863 = vsel %vm524, %v1862, -inf
    %1864 = vmax.xlane.f32.xlu0 %v1863
    %v1865 = vpop.xlane.xlu0 %1864
    %v1866 = vsub.f32 %v1862, %v1865
    %v1867 = vmul.f32 %v1866, 1.442695
    %v1868 = vpow.pop %v1867
    %v1869 = vsel %vm524, %v1868, 0.0
    %1870 = vadd.xlane.f32.xlu0 %v1869
    %v1871 = vpop.xlane.xlu0 %1870
    %v1872 = vrcp.pop %v1871
    %v1873 = vmul.f32 %v1868, %v1872
    %1874 = vrot.lane.b32.xlu0 %v1608, 48
    %v1875 = vpop.permute.xlu0 %1874
    %v1878 = vsel %vm524, %v1873, 0
    %1880 = vmatprep.subr.mxu0 0.0
    %1881 = vmatpush1.msra.mxu0 %v1875
    %1882 = vmatprep.subr.mxu0 0.0
    %1883 = vmatpush1.msra.mxu0 0.0
    %1884 = vmatprep.subr.mxu0 0.0
    %1885 = vmatpush1.msra.mxu0 0.0
    %1886 = vmatprep.subr.mxu0 0.0
    %1887 = vmatpush1.msra.mxu0 0.0
    %1888 = vmatprep.subr.mxu0 0.0
    %1889 = vmatpush1.msra.mxu0 0.0
    %1890 = vmatprep.subr.mxu0 0.0
    %1891 = vmatpush1.msra.mxu0 0.0
    %1892 = vmatprep.subr.mxu0 0.0
    %1893 = vmatpush1.msra.mxu0 0.0
    %1894 = vmatprep.subr.mxu0 0.0
    %1895 = vmatpush1.msra.mxu0 0.0
    %1896 = vmatprep.subr.mxu0 0.0
    %1897 = vmatpush1.msra.mxu0 0.0
    %1898 = vmatprep.subr.mxu0 0.0
    %1899 = vmatpush1.msra.mxu0 0.0
    %1900 = vmatprep.subr.mxu0 0.0
    %1901 = vmatpush1.msra.mxu0 0.0
    %1902 = vmatprep.subr.mxu0 0.0
    %1903 = vmatpush1.msra.mxu0 0.0
    %1904 = vmatprep.subr.mxu0 0.0
    %1905 = vmatpush1.msra.mxu0 0.0
    %1906 = vmatprep.subr.mxu0 0.0
    %1907 = vmatpush1.msra.mxu0 0.0
    %1908 = vmatprep.subr.mxu0 0.0
    %1909 = vmatpush1.msra.mxu0 0.0
    %1910 = vmatprep.subr.mxu0 0.0
    %1911 = vmatpush1.msra.mxu0 0.0
    %1912 = vmatprep.subr.mxu0 0.0
    %1913 = vmatpush1.msra.mxu0 0.0
    %1914 = vmatprep.subr.mxu0 0.0
    %1915 = vmatpush1.msra.mxu0 0.0
    %1916 = vmatprep.subr.mxu0 0.0
    %1917 = vmatpush1.msra.mxu0 0.0
    %1918 = vmatprep.subr.mxu0 0.0
    %1919 = vmatpush1.msra.mxu0 0.0
    %1920 = vmatprep.subr.mxu0 0.0
    %1921 = vmatpush1.msra.mxu0 0.0
    %1922 = vmatprep.subr.mxu0 0.0
    %1923 = vmatpush1.msra.mxu0 0.0
    %1924 = vmatprep.subr.mxu0 0.0
    %1925 = vmatpush1.msra.mxu0 0.0
    %1926 = vmatprep.subr.mxu0 0.0
    %1927 = vmatpush1.msra.mxu0 0.0
    %1928 = vmatprep.subr.mxu0 0.0
    %1929 = vmatpush1.msra.mxu0 0.0
    %1930 = vmatprep.subr.mxu0 0.0
    %1931 = vmatpush1.msra.mxu0 0.0
    %1932 = vmatprep.subr.mxu0 0.0
    %1933 = vmatpush1.msra.mxu0 0.0
    %1934 = vmatprep.subr.mxu0 0.0
    %1935 = vmatpush1.msra.mxu0 0.0
    %1936 = vmatprep.subr.mxu0 0.0
    %1937 = vmatpush1.msra.mxu0 0.0
    %1938 = vmatprep.subr.mxu0 0.0
    %1939 = vmatpush1.msra.mxu0 0.0
    %1940 = vmatprep.subr.mxu0 0.0
    %1941 = vmatpush1.msra.mxu0 0.0
    %1942 = vmatprep.subr.mxu0 0.0
    %1943 = vmatpush1.msra.mxu0 0.0
    %1944 = vmatprep.mubr.f32.mxu0 0.0
    %1945 = vmatmul.mubr.f32.gmra.mrb[0].mxu0 %v1878
    %v1946 = vpop.f32.mrb[0].mxu0
    %v1947 = vadd.f32 0.0, %v1946
    %v1948 = vpop.f32.mrb[0].mxu0
    %1949 = vdwg.mxu0
    %1951 = vrot.lane.b32.xlu0 %v1947, 16
    %v1952 = vpop.permute.xlu0 %1951
    %1954 = vst.msk [vmem:[#allocation2] sm:$0xff] %vm784, %v1952
    %1956 = vrot.lane.b32.xlu0 %v1613, 96
    %v1957 = vpop.permute.xlu0 %1956
    %v1958 = vsel %vm443, %v1613, 0
    %v1960 = vsel %vm443, %v1957, 0
    %1962 = vmatprep.subr.mxu0 0.0
    %1963 = vmatpush1.xpose.msra.mxu0 %v1960
    %1964 = vmatprep.subr.mxu0 0.0
    %1965 = vmatpush1.xpose.msra.mxu0 0.0
    %1966 = vmatprep.subr.mxu0 0.0
    %1967 = vmatpush1.xpose.msra.mxu0 0.0
    %1968 = vmatprep.subr.mxu0 0.0
    %1969 = vmatpush1.xpose.msra.mxu0 0.0
    %1970 = vmatprep.subr.mxu0 0.0
    %1971 = vmatpush1.xpose.msra.mxu0 0.0
    %1972 = vmatprep.subr.mxu0 0.0
    %1973 = vmatpush1.xpose.msra.mxu0 0.0
    %1974 = vmatprep.subr.mxu0 0.0
    %1975 = vmatpush1.xpose.msra.mxu0 0.0
    %1976 = vmatprep.subr.mxu0 0.0
    %1977 = vmatpush1.xpose.msra.mxu0 0.0
    %1978 = vmatprep.subr.mxu0 0.0
    %1979 = vmatpush1.xpose.msra.mxu0 0.0
    %1980 = vmatprep.subr.mxu0 0.0
    %1981 = vmatpush1.xpose.msra.mxu0 0.0
    %1982 = vmatprep.subr.mxu0 0.0
    %1983 = vmatpush1.xpose.msra.mxu0 0.0
    %1984 = vmatprep.subr.mxu0 0.0
    %1985 = vmatpush1.xpose.msra.mxu0 0.0
    %1986 = vmatprep.subr.mxu0 0.0
    %1987 = vmatpush1.xpose.msra.mxu0 0.0
    %1988 = vmatprep.subr.mxu0 0.0
    %1989 = vmatpush1.xpose.msra.mxu0 0.0
    %1990 = vmatprep.subr.mxu0 0.0
    %1991 = vmatpush1.xpose.msra.mxu0 0.0
    %1992 = vmatprep.subr.mxu0 0.0
    %1993 = vmatpush1.xpose.msra.mxu0 0.0
    %1994 = vmatprep.subr.mxu0 0.0
    %1995 = vmatpush1.xpose.msra.mxu0 0.0
    %1996 = vmatprep.subr.mxu0 0.0
    %1997 = vmatpush1.xpose.msra.mxu0 0.0
    %1998 = vmatprep.subr.mxu0 0.0
    %1999 = vmatpush1.xpose.msra.mxu0 0.0
    %2000 = vmatprep.subr.mxu0 0.0
    %2001 = vmatpush1.xpose.msra.mxu0 0.0
    %2002 = vmatprep.subr.mxu0 0.0
    %2003 = vmatpush1.xpose.msra.mxu0 0.0
    %2004 = vmatprep.subr.mxu0 0.0
    %2005 = vmatpush1.xpose.msra.mxu0 0.0
    %2006 = vmatprep.subr.mxu0 0.0
    %2007 = vmatpush1.xpose.msra.mxu0 0.0
    %2008 = vmatprep.subr.mxu0 0.0
    %2009 = vmatpush1.xpose.msra.mxu0 0.0
    %2010 = vmatprep.subr.mxu0 0.0
    %2011 = vmatpush1.xpose.msra.mxu0 0.0
    %2012 = vmatprep.subr.mxu0 0.0
    %2013 = vmatpush1.xpose.msra.mxu0 0.0
    %2014 = vmatprep.subr.mxu0 0.0
    %2015 = vmatpush1.xpose.msra.mxu0 0.0
    %2016 = vmatprep.subr.mxu0 0.0
    %2017 = vmatpush1.xpose.msra.mxu0 0.0
    %2018 = vmatprep.subr.mxu0 0.0
    %2019 = vmatpush1.xpose.msra.mxu0 0.0
    %2020 = vmatprep.subr.mxu0 0.0
    %2021 = vmatpush1.xpose.msra.mxu0 0.0
    %2022 = vmatprep.subr.mxu0 0.0
    %2023 = vmatpush1.xpose.msra.mxu0 0.0
    %2024 = vmatprep.subr.mxu0 0.0
    %2025 = vmatpush1.xpose.msra.mxu0 0.0
    %2026 = vmatprep.mubr.f32.mxu0 0.0
    %2027 = vmatmul.mubr.f32.gmra.mrb[0].mxu0 %v1958
    %v2028 = vpop.f32.mrb[0].mxu0
    %v2029 = vadd.f32 0.0, %v2028
    %v2030 = vpop.f32.mrb[0].mxu0
    %2031 = vdwg.mxu0
    %v2032 = vmul.f32 %v2029, 0.25
    %v2033 = vadd.f32 %v2032, %v867
    %v2034 = vsel %vm524, %v2033, -inf
    %2035 = vmax.xlane.f32.xlu0 %v2034
    %v2036 = vpop.xlane.xlu0 %2035
    %v2037 = vsub.f32 %v2033, %v2036
    %v2038 = vmul.f32 %v2037, 1.442695
    %v2039 = vpow.pop %v2038
    %v2040 = vsel %vm524, %v2039, 0.0
    %2041 = vadd.xlane.f32.xlu0 %v2040
    %v2042 = vpop.xlane.xlu0 %2041
    %v2043 = vrcp.pop %v2042
    %v2044 = vmul.f32 %v2039, %v2043
    %2045 = vrot.lane.b32.xlu0 %v1613, 64
    %v2046 = vpop.permute.xlu0 %2045
    %v2049 = vsel %vm524, %v2044, 0
    %2051 = vmatprep.subr.mxu0 0.0
    %2052 = vmatpush1.msra.mxu0 %v2046
    %2053 = vmatprep.subr.mxu0 0.0
    %2054 = vmatpush1.msra.mxu0 0.0
    %2055 = vmatprep.subr.mxu0 0.0
    %2056 = vmatpush1.msra.mxu0 0.0
    %2057 = vmatprep.subr.mxu0 0.0
    %2058 = vmatpush1.msra.mxu0 0.0
    %2059 = vmatprep.subr.mxu0 0.0
    %2060 = vmatpush1.msra.mxu0 0.0
    %2061 = vmatprep.subr.mxu0 0.0
    %2062 = vmatpush1.msra.mxu0 0.0
    %2063 = vmatprep.subr.mxu0 0.0
    %2064 = vmatpush1.msra.mxu0 0.0
    %2065 = vmatprep.subr.mxu0 0.0
    %2066 = vmatpush1.msra.mxu0 0.0
    %2067 = vmatprep.subr.mxu0 0.0
    %2068 = vmatpush1.msra.mxu0 0.0
    %2069 = vmatprep.subr.mxu0 0.0
    %2070 = vmatpush1.msra.mxu0 0.0
    %2071 = vmatprep.subr.mxu0 0.0
    %2072 = vmatpush1.msra.mxu0 0.0
    %2073 = vmatprep.subr.mxu0 0.0
    %2074 = vmatpush1.msra.mxu0 0.0
    %2075 = vmatprep.subr.mxu0 0.0
    %2076 = vmatpush1.msra.mxu0 0.0
    %2077 = vmatprep.subr.mxu0 0.0
    %2078 = vmatpush1.msra.mxu0 0.0
    %2079 = vmatprep.subr.mxu0 0.0
    %2080 = vmatpush1.msra.mxu0 0.0
    %2081 = vmatprep.subr.mxu0 0.0
    %2082 = vmatpush1.msra.mxu0 0.0
    %2083 = vmatprep.subr.mxu0 0.0
    %2084 = vmatpush1.msra.mxu0 0.0
    %2085 = vmatprep.subr.mxu0 0.0
    %2086 = vmatpush1.msra.mxu0 0.0
    %2087 = vmatprep.subr.mxu0 0.0
    %2088 = vmatpush1.msra.mxu0 0.0
    %2089 = vmatprep.subr.mxu0 0.0
    %2090 = vmatpush1.msra.mxu0 0.0
    %2091 = vmatprep.subr.mxu0 0.0
    %2092 = vmatpush1.msra.mxu0 0.0
    %2093 = vmatprep.subr.mxu0 0.0
    %2094 = vmatpush1.msra.mxu0 0.0
    %2095 = vmatprep.subr.mxu0 0.0
    %2096 = vmatpush1.msra.mxu0 0.0
    %2097 = vmatprep.subr.mxu0 0.0
    %2098 = vmatpush1.msra.mxu0 0.0
    %2099 = vmatprep.subr.mxu0 0.0
    %2100 = vmatpush1.msra.mxu0 0.0
    %2101 = vmatprep.subr.mxu0 0.0
    %2102 = vmatpush1.msra.mxu0 0.0
    %2103 = vmatprep.subr.mxu0 0.0
    %2104 = vmatpush1.msra.mxu0 0.0
    %2105 = vmatprep.subr.mxu0 0.0
    %2106 = vmatpush1.msra.mxu0 0.0
    %2107 = vmatprep.subr.mxu0 0.0
    %2108 = vmatpush1.msra.mxu0 0.0
    %2109 = vmatprep.subr.mxu0 0.0
    %2110 = vmatpush1.msra.mxu0 0.0
    %2111 = vmatprep.subr.mxu0 0.0
    %2112 = vmatpush1.msra.mxu0 0.0
    %2113 = vmatprep.subr.mxu0 0.0
    %2114 = vmatpush1.msra.mxu0 0.0
    %2115 = vmatprep.mubr.f32.mxu0 0.0
    %2116 = vmatmul.mubr.f32.gmra.mrb[0].mxu0 %v2049
    %v2117 = vpop.f32.mrb[0].mxu0
    %v2118 = vadd.f32 0.0, %v2117
    %v2119 = vpop.f32.mrb[0].mxu0
    %2120 = vdwg.mxu0
    %2121 = vst.msk [vmem:[#allocation2 + $0x8] sm:$0xff] %vm443, %v2118
    %2122 = vrot.lane.b32.xlu0 %v1613, 112
    %v2123 = vpop.permute.xlu0 %2122
    %2124 = vrot.lane.b32.xlu0 %v1613, 80
    %v2125 = vpop.permute.xlu0 %2124
    %v2126 = vsel %vm443, %v2123, 0
    %v2128 = vsel %vm443, %v2125, 0
    %2130 = vmatprep.subr.mxu0 0.0
    %2131 = vmatpush1.xpose.msra.mxu0 %v2128
    %2132 = vmatprep.subr.mxu0 0.0
    %2133 = vmatpush1.xpose.msra.mxu0 0.0
    %2134 = vmatprep.subr.mxu0 0.0
    %2135 = vmatpush1.xpose.msra.mxu0 0.0
    %2136 = vmatprep.subr.mxu0 0.0
    %2137 = vmatpush1.xpose.msra.mxu0 0.0
    %2138 = vmatprep.subr.mxu0 0.0
    %2139 = vmatpush1.xpose.msra.mxu0 0.0
    %2140 = vmatprep.subr.mxu0 0.0
    %2141 = vmatpush1.xpose.msra.mxu0 0.0
    %2142 = vmatprep.subr.mxu0 0.0
    %2143 = vmatpush1.xpose.msra.mxu0 0.0
    %2144 = vmatprep.subr.mxu0 0.0
    %2145 = vmatpush1.xpose.msra.mxu0 0.0
    %2146 = vmatprep.subr.mxu0 0.0
    %2147 = vmatpush1.xpose.msra.mxu0 0.0
    %2148 = vmatprep.subr.mxu0 0.0
    %2149 = vmatpush1.xpose.msra.mxu0 0.0
    %2150 = vmatprep.subr.mxu0 0.0
    %2151 = vmatpush1.xpose.msra.mxu0 0.0
    %2152 = vmatprep.subr.mxu0 0.0
    %2153 = vmatpush1.xpose.msra.mxu0 0.0
    %2154 = vmatprep.subr.mxu0 0.0
    %2155 = vmatpush1.xpose.msra.mxu0 0.0
    %2156 = vmatprep.subr.mxu0 0.0
    %2157 = vmatpush1.xpose.msra.mxu0 0.0
    %2158 = vmatprep.subr.mxu0 0.0
    %2159 = vmatpush1.xpose.msra.mxu0 0.0
    %2160 = vmatprep.subr.mxu0 0.0
    %2161 = vmatpush1.xpose.msra.mxu0 0.0
    %2162 = vmatprep.subr.mxu0 0.0
    %2163 = vmatpush1.xpose.msra.mxu0 0.0
    %2164 = vmatprep.subr.mxu0 0.0
    %2165 = vmatpush1.xpose.msra.mxu0 0.0
    %2166 = vmatprep.subr.mxu0 0.0
    %2167 = vmatpush1.xpose.msra.mxu0 0.0
    %2168 = vmatprep.subr.mxu0 0.0
    %2169 = vmatpush1.xpose.msra.mxu0 0.0
    %2170 = vmatprep.subr.mxu0 0.0
    %2171 = vmatpush1.xpose.msra.mxu0 0.0
    %2172 = vmatprep.subr.mxu0 0.0
    %2173 = vmatpush1.xpose.msra.mxu0 0.0
    %2174 = vmatprep.subr.mxu0 0.0
    %2175 = vmatpush1.xpose.msra.mxu0 0.0
    %2176 = vmatprep.subr.mxu0 0.0
    %2177 = vmatpush1.xpose.msra.mxu0 0.0
    %2178 = vmatprep.subr.mxu0 0.0
    %2179 = vmatpush1.xpose.msra.mxu0 0.0
    %2180 = vmatprep.subr.mxu0 0.0
    %2181 = vmatpush1.xpose.msra.mxu0 0.0
    %2182 = vmatprep.subr.mxu0 0.0
    %2183 = vmatpush1.xpose.msra.mxu0 0.0
    %2184 = vmatprep.subr.mxu0 0.0
    %2185 = vmatpush1.xpose.msra.mxu0 0.0
    %2186 = vmatprep.subr.mxu0 0.0
    %2187 = vmatpush1.xpose.msra.mxu0 0.0
    %2188 = vmatprep.subr.mxu0 0.0
    %2189 = vmatpush1.xpose.msra.mxu0 0.0
    %2190 = vmatprep.subr.mxu0 0.0
    %2191 = vmatpush1.xpose.msra.mxu0 0.0
    %2192 = vmatprep.subr.mxu0 0.0
    %2193 = vmatpush1.xpose.msra.mxu0 0.0
    %2194 = vmatprep.mubr.f32.mxu0 0.0
    %2195 = vmatmul.mubr.f32.gmra.mrb[0].mxu0 %v2126
    %v2196 = vpop.f32.mrb[0].mxu0
    %v2197 = vadd.f32 0.0, %v2196
    %v2198 = vpop.f32.mrb[0].mxu0
    %2199 = vdwg.mxu0
    %v2200 = vmul.f32 %v2197, 0.25
    %v2201 = vadd.f32 %v2200, %v867
    %v2202 = vsel %vm524, %v2201, -inf
    %2203 = vmax.xlane.f32.xlu0 %v2202
    %v2204 = vpop.xlane.xlu0 %2203
    %v2205 = vsub.f32 %v2201, %v2204
    %v2206 = vmul.f32 %v2205, 1.442695
    %v2207 = vpow.pop %v2206
    %v2208 = vsel %vm524, %v2207, 0.0
    %2209 = vadd.xlane.f32.xlu0 %v2208
    %v2210 = vpop.xlane.xlu0 %2209
    %v2211 = vrcp.pop %v2210
    %v2212 = vmul.f32 %v2207, %v2211
    %2213 = vrot.lane.b32.xlu0 %v1613, 48
    %v2214 = vpop.permute.xlu0 %2213
    %v2217 = vsel %vm524, %v2212, 0
    %2219 = vmatprep.subr.mxu0 0.0
    %2220 = vmatpush1.msra.mxu0 %v2214
    %2221 = vmatprep.subr.mxu0 0.0
    %2222 = vmatpush1.msra.mxu0 0.0
    %2223 = vmatprep.subr.mxu0 0.0
    %2224 = vmatpush1.msra.mxu0 0.0
    %2225 = vmatprep.subr.mxu0 0.0
    %2226 = vmatpush1.msra.mxu0 0.0
    %2227 = vmatprep.subr.mxu0 0.0
    %2228 = vmatpush1.msra.mxu0 0.0
    %2229 = vmatprep.subr.mxu0 0.0
    %2230 = vmatpush1.msra.mxu0 0.0
    %2231 = vmatprep.subr.mxu0 0.0
    %2232 = vmatpush1.msra.mxu0 0.0
    %2233 = vmatprep.subr.mxu0 0.0
    %2234 = vmatpush1.msra.mxu0 0.0
    %2235 = vmatprep.subr.mxu0 0.0
    %2236 = vmatpush1.msra.mxu0 0.0
    %2237 = vmatprep.subr.mxu0 0.0
    %2238 = vmatpush1.msra.mxu0 0.0
    %2239 = vmatprep.subr.mxu0 0.0
    %2240 = vmatpush1.msra.mxu0 0.0
    %2241 = vmatprep.subr.mxu0 0.0
    %2242 = vmatpush1.msra.mxu0 0.0
    %2243 = vmatprep.subr.mxu0 0.0
    %2244 = vmatpush1.msra.mxu0 0.0
    %2245 = vmatprep.subr.mxu0 0.0
    %2246 = vmatpush1.msra.mxu0 0.0
    %2247 = vmatprep.subr.mxu0 0.0
    %2248 = vmatpush1.msra.mxu0 0.0
    %2249 = vmatprep.subr.mxu0 0.0
    %2250 = vmatpush1.msra.mxu0 0.0
    %2251 = vmatprep.subr.mxu0 0.0
    %2252 = vmatpush1.msra.mxu0 0.0
    %2253 = vmatprep.subr.mxu0 0.0
    %2254 = vmatpush1.msra.mxu0 0.0
    %2255 = vmatprep.subr.mxu0 0.0
    %2256 = vmatpush1.msra.mxu0 0.0
    %2257 = vmatprep.subr.mxu0 0.0
    %2258 = vmatpush1.msra.mxu0 0.0
    %2259 = vmatprep.subr.mxu0 0.0
    %2260 = vmatpush1.msra.mxu0 0.0
    %2261 = vmatprep.subr.mxu0 0.0
    %2262 = vmatpush1.msra.mxu0 0.0
    %2263 = vmatprep.subr.mxu0 0.0
    %2264 = vmatpush1.msra.mxu0 0.0
    %2265 = vmatprep.subr.mxu0 0.0
    %2266 = vmatpush1.msra.mxu0 0.0
    %2267 = vmatprep.subr.mxu0 0.0
    %2268 = vmatpush1.msra.mxu0 0.0
    %2269 = vmatprep.subr.mxu0 0.0
    %2270 = vmatpush1.msra.mxu0 0.0
    %2271 = vmatprep.subr.mxu0 0.0
    %2272 = vmatpush1.msra.mxu0 0.0
    %2273 = vmatprep.subr.mxu0 0.0
    %2274 = vmatpush1.msra.mxu0 0.0
    %2275 = vmatprep.subr.mxu0 0.0
    %2276 = vmatpush1.msra.mxu0 0.0
    %2277 = vmatprep.subr.mxu0 0.0
    %2278 = vmatpush1.msra.mxu0 0.0
    %2279 = vmatprep.subr.mxu0 0.0
    %2280 = vmatpush1.msra.mxu0 0.0
    %2281 = vmatprep.subr.mxu0 0.0
    %2282 = vmatpush1.msra.mxu0 0.0
    %2283 = vmatprep.mubr.f32.mxu0 0.0
    %2284 = vmatmul.mubr.f32.gmra.mrb[0].mxu0 %v2217
    %v2285 = vpop.f32.mrb[0].mxu0
    %v2286 = vadd.f32 0.0, %v2285
    %v2287 = vpop.f32.mrb[0].mxu0
    %2288 = vdwg.mxu0
    %2290 = vrot.lane.b32.xlu0 %v2286, 16
    %v2291 = vpop.permute.xlu0 %2290
    %2293 = vst.msk [vmem:[#allocation2 + $0x8] sm:$0xff] %vm784, %v2291
    %v2294 = vld [vmem:[#allocation2] sm:$0xff]
    %v2295 = vld [vmem:[#allocation2 + $0x8] sm:$0xff]
    %s2296 = scalar_lea.vmem %s11, 32
    %v2297 = vld [vmem:[%s2296] sm:$0xff]
    %v2298 = vld [vmem:[%s2296 + $0x8] sm:$0xff]
    %v2299 = vld [vmem:[%s2296 + $0x10] sm:$0xff]
    %v2300 = vld [vmem:[%s2296 + $0x18] sm:$0xff]
    %s2301 = scalar_lea.vmem %s12, 1
    %v2302 = vld [vmem:[%s2301] sm:$0x1]
    %v2304 = vlaneseq
    %v2305 = vshrl.u32 %v2304, 7
    %v2306 = vsub.s32 0, %v2305
    %v2307 = vrot.slane %v2302, %v2306
    %v2310 = vsel %vm301, %v2294, 0
    %v2313 = vsel %vm301, %v2295, 0
    %2315 = vmatprep.subr.mxu0 0.0
    %2316 = vmatpush1.msra.mxu0 %v2297
    %2317 = vmatprep.subr.mxu0 0.0
    %2318 = vmatpush1.msra.mxu0 %v2298
    %2319 = vmatprep.subr.mxu0 0.0
    %2320 = vmatpush1.msra.mxu0 %v2299
    %2321 = vmatprep.subr.mxu0 0.0
    %2322 = vmatpush1.msra.mxu0 %v2300
    %2323 = vmatprep.subr.mxu0 0.0
    %2324 = vmatpush1.msra.mxu0 0.0
    %2325 = vmatprep.subr.mxu0 0.0
    %2326 = vmatpush1.msra.mxu0 0.0
    %2327 = vmatprep.subr.mxu0 0.0
    %2328 = vmatpush1.msra.mxu0 0.0
    %2329 = vmatprep.subr.mxu0 0.0
    %2330 = vmatpush1.msra.mxu0 0.0
    %2331 = vmatprep.subr.mxu0 0.0
    %2332 = vmatpush1.msra.mxu0 0.0
    %2333 = vmatprep.subr.mxu0 0.0
    %2334 = vmatpush1.msra.mxu0 0.0
    %2335 = vmatprep.subr.mxu0 0.0
    %2336 = vmatpush1.msra.mxu0 0.0
    %2337 = vmatprep.subr.mxu0 0.0
    %2338 = vmatpush1.msra.mxu0 0.0
    %2339 = vmatprep.subr.mxu0 0.0
    %2340 = vmatpush1.msra.mxu0 0.0
    %2341 = vmatprep.subr.mxu0 0.0
    %2342 = vmatpush1.msra.mxu0 0.0
    %2343 = vmatprep.subr.mxu0 0.0
    %2344 = vmatpush1.msra.mxu0 0.0
    %2345 = vmatprep.subr.mxu0 0.0
    %2346 = vmatpush1.msra.mxu0 0.0
    %2347 = vmatprep.subr.mxu0 0.0
    %2348 = vmatpush1.msra.mxu0 0.0
    %2349 = vmatprep.subr.mxu0 0.0
    %2350 = vmatpush1.msra.mxu0 0.0
    %2351 = vmatprep.subr.mxu0 0.0
    %2352 = vmatpush1.msra.mxu0 0.0
    %2353 = vmatprep.subr.mxu0 0.0
    %2354 = vmatpush1.msra.mxu0 0.0
    %2355 = vmatprep.subr.mxu0 0.0
    %2356 = vmatpush1.msra.mxu0 0.0
    %2357 = vmatprep.subr.mxu0 0.0
    %2358 = vmatpush1.msra.mxu0 0.0
    %2359 = vmatprep.subr.mxu0 0.0
    %2360 = vmatpush1.msra.mxu0 0.0
    %2361 = vmatprep.subr.mxu0 0.0
    %2362 = vmatpush1.msra.mxu0 0.0
    %2363 = vmatprep.subr.mxu0 0.0
    %2364 = vmatpush1.msra.mxu0 0.0
    %2365 = vmatprep.subr.mxu0 0.0
    %2366 = vmatpush1.msra.mxu0 0.0
    %2367 = vmatprep.subr.mxu0 0.0
    %2368 = vmatpush1.msra.mxu0 0.0
    %2369 = vmatprep.subr.mxu0 0.0
    %2370 = vmatpush1.msra.mxu0 0.0
    %2371 = vmatprep.subr.mxu0 0.0
    %2372 = vmatpush1.msra.mxu0 0.0
    %2373 = vmatprep.subr.mxu0 0.0
    %2374 = vmatpush1.msra.mxu0 0.0
    %2375 = vmatprep.subr.mxu0 0.0
    %2376 = vmatpush1.msra.mxu0 0.0
    %2377 = vmatprep.subr.mxu0 0.0
    %2378 = vmatpush1.msra.mxu0 0.0
    %2379 = vmatprep.mubr.f32.mxu0 0.0
    %2380 = vmatmul.mubr.f32.gmra.mrb[0].mxu0 %v2310
    %v2381 = vpop.f32.mrb[0].mxu0
    %v2382 = vadd.f32 %v2307, %v2381
    %v2383 = vpop.f32.mrb[0].mxu0
    %2384 = vmatprep.mubr.f32.mxu0 0.0
    %2385 = vmatmul.mubr.f32.gmra.mrb[0].mxu0 %v2313
    %v2386 = vpop.f32.mrb[0].mxu0
    %v2387 = vadd.f32 %v2307, %v2386
    %v2388 = vpop.f32.mrb[0].mxu0
    %2389 = vdwg.mxu0
    %v2390 = vadd.f32 %v2382, %v1520
    %v2391 = vadd.f32 %v2387, %v1521
    %s2392 = scalar_lea.vmem %s13, 1
    %v2393 = vld [vmem:[%s2392] sm:$0x1]
    %s2394 = scalar_lea.vmem %s14, 1
    %v2395 = vld [vmem:[%s2394] sm:$0x1]
    %v2396 = vsel %vm301, %v2390, 0.0
    %2397 = vadd.xlane.f32.xlu0 %v2396
    %v2398 = vpop.xlane.xlu0 %2397
    %v2399 = vsel %vm301, %v2391, 0.0
    %2400 = vadd.xlane.f32.xlu0 %v2399
    %v2401 = vpop.xlane.xlu0 %2400
    %v2402 = vmul.f32 %v2398, %v308
    %v2403 = vmul.f32 %v2401, %v308
    %v2404 = vsub.f32 %v2390, %v2402
    %v2405 = vsub.f32 %v2391, %v2403
    %v2406 = vmul.f32 %v2404, %v2404
    %v2407 = vmul.f32 %v2405, %v2405
    %v2408 = vsel %vm301, %v2406, 0.0
    %2409 = vadd.xlane.f32.xlu0 %v2408
    %v2410 = vpop.xlane.xlu0 %2409
    %v2411 = vsel %vm301, %v2407, 0.0
    %2412 = vadd.xlane.f32.xlu0 %v2411
    %v2413 = vpop.xlane.xlu0 %2412
    %v2414 = vmul.f32 %v2410, %v308
    %v2415 = vmul.f32 %v2413, %v308
    %v2416 = vadd.f32 %v2414, 1e-12
    %v2417 = vadd.f32 %v2415, 1e-12
    %v2418 = vrsqrt.pop %v2416
    %v2419 = vrsqrt.pop %v2417
    %v2420 = vmul.f32 %v2404, %v2418
    %v2421 = vmul.f32 %v2405, %v2419
    %v2423 = vlaneseq
    %v2424 = vshrl.u32 %v2423, 7
    %v2425 = vsub.s32 0, %v2424
    %v2426 = vrot.slane %v2393, %v2425
    %v2428 = vmul.f32 %v2420, %v2426
    %v2429 = vmul.f32 %v2421, %v2426
    %v2431 = vlaneseq
    %v2432 = vshrl.u32 %v2431, 7
    %v2433 = vsub.s32 0, %v2432
    %v2434 = vrot.slane %v2395, %v2433
    %v2436 = vadd.f32 %v2428, %v2434
    %v2437 = vadd.f32 %v2429, %v2434
    %s2438 = scalar_lea.vmem %s15, 32
    %v2439 = vld [vmem:[%s2438] sm:$0xff]
    %v2440 = vld [vmem:[%s2438 + $0x8] sm:$0xff]
    %v2441 = vld [vmem:[%s2438 + $0x10] sm:$0xff]
    %v2442 = vld [vmem:[%s2438 + $0x18] sm:$0xff]
    %s2443 = scalar_lea.vmem %s16, 1
    %v2444 = vld [vmem:[%s2443] sm:$0x1]
    %v2446 = vlaneseq
    %v2447 = vshrl.u32 %v2446, 7
    %v2448 = vsub.s32 0, %v2447
    %v2449 = vrot.slane %v2444, %v2448
    %v2452 = vsel %vm301, %v2436, 0
    %v2455 = vsel %vm301, %v2437, 0
    %2457 = vmatprep.subr.mxu0 0.0
    %2458 = vmatpush1.msra.mxu0 %v2439
    %2459 = vmatprep.subr.mxu0 0.0
    %2460 = vmatpush1.msra.mxu0 %v2440
    %2461 = vmatprep.subr.mxu0 0.0
    %2462 = vmatpush1.msra.mxu0 %v2441
    %2463 = vmatprep.subr.mxu0 0.0
    %2464 = vmatpush1.msra.mxu0 %v2442
    %2465 = vmatprep.subr.mxu0 0.0
    %2466 = vmatpush1.msra.mxu0 0.0
    %2467 = vmatprep.subr.mxu0 0.0
    %2468 = vmatpush1.msra.mxu0 0.0
    %2469 = vmatprep.subr.mxu0 0.0
    %2470 = vmatpush1.msra.mxu0 0.0
    %2471 = vmatprep.subr.mxu0 0.0
    %2472 = vmatpush1.msra.mxu0 0.0
    %2473 = vmatprep.subr.mxu0 0.0
    %2474 = vmatpush1.msra.mxu0 0.0
    %2475 = vmatprep.subr.mxu0 0.0
    %2476 = vmatpush1.msra.mxu0 0.0
    %2477 = vmatprep.subr.mxu0 0.0
    %2478 = vmatpush1.msra.mxu0 0.0
    %2479 = vmatprep.subr.mxu0 0.0
    %2480 = vmatpush1.msra.mxu0 0.0
    %2481 = vmatprep.subr.mxu0 0.0
    %2482 = vmatpush1.msra.mxu0 0.0
    %2483 = vmatprep.subr.mxu0 0.0
    %2484 = vmatpush1.msra.mxu0 0.0
    %2485 = vmatprep.subr.mxu0 0.0
    %2486 = vmatpush1.msra.mxu0 0.0
    %2487 = vmatprep.subr.mxu0 0.0
    %2488 = vmatpush1.msra.mxu0 0.0
    %2489 = vmatprep.subr.mxu0 0.0
    %2490 = vmatpush1.msra.mxu0 0.0
    %2491 = vmatprep.subr.mxu0 0.0
    %2492 = vmatpush1.msra.mxu0 0.0
    %2493 = vmatprep.subr.mxu0 0.0
    %2494 = vmatpush1.msra.mxu0 0.0
    %2495 = vmatprep.subr.mxu0 0.0
    %2496 = vmatpush1.msra.mxu0 0.0
    %2497 = vmatprep.subr.mxu0 0.0
    %2498 = vmatpush1.msra.mxu0 0.0
    %2499 = vmatprep.subr.mxu0 0.0
    %2500 = vmatpush1.msra.mxu0 0.0
    %2501 = vmatprep.subr.mxu0 0.0
    %2502 = vmatpush1.msra.mxu0 0.0
    %2503 = vmatprep.subr.mxu0 0.0
    %2504 = vmatpush1.msra.mxu0 0.0
    %2505 = vmatprep.subr.mxu0 0.0
    %2506 = vmatpush1.msra.mxu0 0.0
    %2507 = vmatprep.subr.mxu0 0.0
    %2508 = vmatpush1.msra.mxu0 0.0
    %2509 = vmatprep.subr.mxu0 0.0
    %2510 = vmatpush1.msra.mxu0 0.0
    %2511 = vmatprep.subr.mxu0 0.0
    %2512 = vmatpush1.msra.mxu0 0.0
    %2513 = vmatprep.subr.mxu0 0.0
    %2514 = vmatpush1.msra.mxu0 0.0
    %2515 = vmatprep.subr.mxu0 0.0
    %2516 = vmatpush1.msra.mxu0 0.0
    %2517 = vmatprep.subr.mxu0 0.0
    %2518 = vmatpush1.msra.mxu0 0.0
    %2519 = vmatprep.subr.mxu0 0.0
    %2520 = vmatpush1.msra.mxu0 0.0
    %2521 = vmatprep.mubr.f32.mxu0 0.0
    %2522 = vmatmul.mubr.f32.gmra.mrb[0].mxu0 %v2452
    %v2523 = vpop.f32.mrb[0].mxu0
    %v2524 = vadd.f32 %v2449, %v2523
    %v2525 = vpop.f32.mrb[0].mxu0
    %2526 = vmatprep.mubr.f32.mxu0 0.0
    %2527 = vmatmul.mubr.f32.gmra.mrb[0].mxu0 %v2455
    %v2528 = vpop.f32.mrb[0].mxu0
    %v2529 = vadd.f32 %v2449, %v2528
    %v2530 = vpop.f32.mrb[0].mxu0
    %2531 = vdwg.mxu0
    %v2532 = vmul.f32 %v2524, %v2524
    %v2533 = vmul.f32 %v2529, %v2529
    %v2534 = vmul.f32 %v2524, %v2532
    %v2535 = vmul.f32 %v2529, %v2533
    %v2536 = vmul.f32 %v2534, 0.044715
    %v2537 = vmul.f32 %v2535, 0.044715
    %v2538 = vadd.f32 %v2524, %v2536
    %v2539 = vadd.f32 %v2529, %v2537
    %v2540 = vmul.f32 %v2538, 0.7978846
    %v2541 = vmul.f32 %v2539, 0.7978846
    %v2542 = vtanh.pop %v2540
    %v2543 = vtanh.pop %v2541
    %v2544 = vadd.f32 %v2542, 1.0
    %v2545 = vadd.f32 %v2543, 1.0
    %v2546 = vmul.f32 %v2544, 0.5
    %v2547 = vmul.f32 %v2545, 0.5
    %v2548 = vmul.f32 %v2524, %v2546
    %v2549 = vmul.f32 %v2529, %v2547
    %s2550 = scalar_lea.vmem %s17, 64
    %v2551 = vld [vmem:[%s2550] sm:$0xff]
    %v2552 = vld [vmem:[%s2550 + $0x8] sm:$0xff]
    %v2553 = vld [vmem:[%s2550 + $0x10] sm:$0xff]
    %v2554 = vld [vmem:[%s2550 + $0x18] sm:$0xff]
    %v2555 = vld [vmem:[%s2550 + $0x20] sm:$0xff]
    %v2556 = vld [vmem:[%s2550 + $0x28] sm:$0xff]
    %v2557 = vld [vmem:[%s2550 + $0x30] sm:$0xff]
    %v2558 = vld [vmem:[%s2550 + $0x38] sm:$0xff]
    %s2559 = scalar_lea.vmem %s18, 1
    %v2560 = vld [vmem:[%s2559] sm:$0x1]
    %v2562 = vlaneseq
    %v2563 = vshrl.u32 %v2562, 7
    %v2564 = vsub.s32 0, %v2563
    %v2565 = vrot.slane %v2560, %v2564
    %v2568 = vsel %vm1394, %v2548, 0
    %v2571 = vsel %vm1394, %v2549, 0
    %2573 = vmatprep.subr.mxu0 0.0
    %2574 = vmatpush1.msra.mxu0 %v2551
    %2575 = vmatprep.subr.mxu0 0.0
    %2576 = vmatpush1.msra.mxu0 %v2552
    %2577 = vmatprep.subr.mxu0 0.0
    %2578 = vmatpush1.msra.mxu0 %v2553
    %2579 = vmatprep.subr.mxu0 0.0
    %2580 = vmatpush1.msra.mxu0 %v2554
    %2581 = vmatprep.subr.mxu0 0.0
    %2582 = vmatpush1.msra.mxu0 %v2555
    %2583 = vmatprep.subr.mxu0 0.0
    %2584 = vmatpush1.msra.mxu0 %v2556
    %2585 = vmatprep.subr.mxu0 0.0
    %2586 = vmatpush1.msra.mxu0 %v2557
    %2587 = vmatprep.subr.mxu0 0.0
    %2588 = vmatpush1.msra.mxu0 %v2558
    %2589 = vmatprep.subr.mxu0 0.0
    %2590 = vmatpush1.msra.mxu0 0.0
    %2591 = vmatprep.subr.mxu0 0.0
    %2592 = vmatpush1.msra.mxu0 0.0
    %2593 = vmatprep.subr.mxu0 0.0
    %2594 = vmatpush1.msra.mxu0 0.0
    %2595 = vmatprep.subr.mxu0 0.0
    %2596 = vmatpush1.msra.mxu0 0.0
    %2597 = vmatprep.subr.mxu0 0.0
    %2598 = vmatpush1.msra.mxu0 0.0
    %2599 = vmatprep.subr.mxu0 0.0
    %2600 = vmatpush1.msra.mxu0 0.0
    %2601 = vmatprep.subr.mxu0 0.0
    %2602 = vmatpush1.msra.mxu0 0.0
    %2603 = vmatprep.subr.mxu0 0.0
    %2604 = vmatpush1.msra.mxu0 0.0
    %2605 = vmatprep.subr.mxu0 0.0
    %2606 = vmatpush1.msra.mxu0 0.0
    %2607 = vmatprep.subr.mxu0 0.0
    %2608 = vmatpush1.msra.mxu0 0.0
    %2609 = vmatprep.subr.mxu0 0.0
    %2610 = vmatpush1.msra.mxu0 0.0
    %2611 = vmatprep.subr.mxu0 0.0
    %2612 = vmatpush1.msra.mxu0 0.0
    %2613 = vmatprep.subr.mxu0 0.0
    %2614 = vmatpush1.msra.mxu0 0.0
    %2615 = vmatprep.subr.mxu0 0.0
    %2616 = vmatpush1.msra.mxu0 0.0
    %2617 = vmatprep.subr.mxu0 0.0
    %2618 = vmatpush1.msra.mxu0 0.0
    %2619 = vmatprep.subr.mxu0 0.0
    %2620 = vmatpush1.msra.mxu0 0.0
    %2621 = vmatprep.subr.mxu0 0.0
    %2622 = vmatpush1.msra.mxu0 0.0
    %2623 = vmatprep.subr.mxu0 0.0
    %2624 = vmatpush1.msra.mxu0 0.0
    %2625 = vmatprep.subr.mxu0 0.0
    %2626 = vmatpush1.msra.mxu0 0.0
    %2627 = vmatprep.subr.mxu0 0.0
    %2628 = vmatpush1.msra.mxu0 0.0
    %2629 = vmatprep.subr.mxu0 0.0
    %2630 = vmatpush1.msra.mxu0 0.0
    %2631 = vmatprep.subr.mxu0 0.0
    %2632 = vmatpush1.msra.mxu0 0.0
    %2633 = vmatprep.subr.mxu0 0.0
    %2634 = vmatpush1.msra.mxu0 0.0
    %2635 = vmatprep.subr.mxu0 0.0
    %2636 = vmatpush1.msra.mxu0 0.0
    %2637 = vmatprep.mubr.f32.mxu0 0.0
    %2638 = vmatmul.mubr.f32.gmra.mrb[0].mxu0 %v2568
    %v2639 = vpop.f32.mrb[0].mxu0
    %v2640 = vadd.f32 %v2565, %v2639
    %v2641 = vpop.f32.mrb[0].mxu0
    %2642 = vmatprep.mubr.f32.mxu0 0.0
    %2643 = vmatmul.mubr.f32.gmra.mrb[0].mxu0 %v2571
    %v2644 = vpop.f32.mrb[0].mxu0
    %v2645 = vadd.f32 %v2565, %v2644
    %v2646 = vpop.f32.mrb[0].mxu0
    %2647 = vdwg.mxu0
    %v2648 = vadd.f32 %v2640, %v2436
    %v2649 = vadd.f32 %v2645, %v2437
    %s2650 = scalar_lea.vmem %s19, 1
    %v2651 = vld [vmem:[%s2650] sm:$0x1]
    %s2652 = scalar_lea.vmem %s20, 1
    %v2653 = vld [vmem:[%s2652] sm:$0x1]
    %v2654 = vsel %vm301, %v2648, 0.0
    %2655 = vadd.xlane.f32.xlu0 %v2654
    %v2656 = vpop.xlane.xlu0 %2655
    %v2657 = vsel %vm301, %v2649, 0.0
    %2658 = vadd.xlane.f32.xlu0 %v2657
    %v2659 = vpop.xlane.xlu0 %2658
    %v2660 = vmul.f32 %v2656, %v308
    %v2661 = vmul.f32 %v2659, %v308
    %v2662 = vsub.f32 %v2648, %v2660
    %v2663 = vsub.f32 %v2649, %v2661
    %v2664 = vmul.f32 %v2662, %v2662
    %v2665 = vmul.f32 %v2663, %v2663
    %v2666 = vsel %vm301, %v2664, 0.0
    %2667 = vadd.xlane.f32.xlu0 %v2666
    %v2668 = vpop.xlane.xlu0 %2667
    %v2669 = vsel %vm301, %v2665, 0.0
    %2670 = vadd.xlane.f32.xlu0 %v2669
    %v2671 = vpop.xlane.xlu0 %2670
    %v2672 = vmul.f32 %v2668, %v308
    %v2673 = vmul.f32 %v2671, %v308
    %v2674 = vadd.f32 %v2672, 1e-12
    %v2675 = vadd.f32 %v2673, 1e-12
    %v2676 = vrsqrt.pop %v2674
    %v2677 = vrsqrt.pop %v2675
    %v2678 = vmul.f32 %v2662, %v2676
    %v2679 = vmul.f32 %v2663, %v2677
    %v2681 = vlaneseq
    %v2682 = vshrl.u32 %v2681, 7
    %v2683 = vsub.s32 0, %v2682
    %v2684 = vrot.slane %v2651, %v2683
    %v2686 = vmul.f32 %v2678, %v2684
    %v2687 = vmul.f32 %v2679, %v2684
    %v2689 = vlaneseq
    %v2690 = vshrl.u32 %v2689, 7
    %v2691 = vsub.s32 0, %v2690
    %v2692 = vrot.slane %v2653, %v2691
    %v2694 = vadd.f32 %v2686, %v2692
    %v2695 = vadd.f32 %v2687, %v2692
    %v2696 = vld [vmem:[%s21] sm:$0xff]
    %v2697 = vld [vmem:[%s21 + $0x8] sm:$0xff]
    %v2698 = vld [vmem:[%s21 + $0x10] sm:$0xff]
    %v2699 = vld [vmem:[%s21 + $0x18] sm:$0xff]
    %v2700 = vld [vmem:[%s22] sm:$0x1]
    %v2702 = vlaneseq
    %v2703 = vshrl.u32 %v2702, 7
    %v2704 = vsub.s32 0, %v2703
    %v2705 = vrot.slane %v2700, %v2704
    %v2708 = vsel %vm301, %v2694, 0
    %v2711 = vsel %vm301, %v2695, 0
    %2713 = vmatprep.subr.mxu0 0.0
    %2714 = vmatpush1.msra.mxu0 %v2696
    %2715 = vmatprep.subr.mxu0 0.0
    %2716 = vmatpush1.msra.mxu0 %v2697
    %2717 = vmatprep.subr.mxu0 0.0
    %2718 = vmatpush1.msra.mxu0 %v2698
    %2719 = vmatprep.subr.mxu0 0.0
    %2720 = vmatpush1.msra.mxu0 %v2699
    %2721 = vmatprep.subr.mxu0 0.0
    %2722 = vmatpush1.msra.mxu0 0.0
    %2723 = vmatprep.subr.mxu0 0.0
    %2724 = vmatpush1.msra.mxu0 0.0
    %2725 = vmatprep.subr.mxu0 0.0
    %2726 = vmatpush1.msra.mxu0 0.0
    %2727 = vmatprep.subr.mxu0 0.0
    %2728 = vmatpush1.msra.mxu0 0.0
    %2729 = vmatprep.subr.mxu0 0.0
    %2730 = vmatpush1.msra.mxu0 0.0
    %2731 = vmatprep.subr.mxu0 0.0
    %2732 = vmatpush1.msra.mxu0 0.0
    %2733 = vmatprep.subr.mxu0 0.0
    %2734 = vmatpush1.msra.mxu0 0.0
    %2735 = vmatprep.subr.mxu0 0.0
    %2736 = vmatpush1.msra.mxu0 0.0
    %2737 = vmatprep.subr.mxu0 0.0
    %2738 = vmatpush1.msra.mxu0 0.0
    %2739 = vmatprep.subr.mxu0 0.0
    %2740 = vmatpush1.msra.mxu0 0.0
    %2741 = vmatprep.subr.mxu0 0.0
    %2742 = vmatpush1.msra.mxu0 0.0
    %2743 = vmatprep.subr.mxu0 0.0
    %2744 = vmatpush1.msra.mxu0 0.0
    %2745 = vmatprep.subr.mxu0 0.0
    %2746 = vmatpush1.msra.mxu0 0.0
    %2747 = vmatprep.subr.mxu0 0.0
    %2748 = vmatpush1.msra.mxu0 0.0
    %2749 = vmatprep.subr.mxu0 0.0
    %2750 = vmatpush1.msra.mxu0 0.0
    %2751 = vmatprep.subr.mxu0 0.0
    %2752 = vmatpush1.msra.mxu0 0.0
    %2753 = vmatprep.subr.mxu0 0.0
    %2754 = vmatpush1.msra.mxu0 0.0
    %2755 = vmatprep.subr.mxu0 0.0
    %2756 = vmatpush1.msra.mxu0 0.0
    %2757 = vmatprep.subr.mxu0 0.0
    %2758 = vmatpush1.msra.mxu0 0.0
    %2759 = vmatprep.subr.mxu0 0.0
    %2760 = vmatpush1.msra.mxu0 0.0
    %2761 = vmatprep.subr.mxu0 0.0
    %2762 = vmatpush1.msra.mxu0 0.0
    %2763 = vmatprep.subr.mxu0 0.0
    %2764 = vmatpush1.msra.mxu0 0.0
    %2765 = vmatprep.subr.mxu0 0.0
    %2766 = vmatpush1.msra.mxu0 0.0
    %2767 = vmatprep.subr.mxu0 0.0
    %2768 = vmatpush1.msra.mxu0 0.0
    %2769 = vmatprep.subr.mxu0 0.0
    %2770 = vmatpush1.msra.mxu0 0.0
    %2771 = vmatprep.subr.mxu0 0.0
    %2772 = vmatpush1.msra.mxu0 0.0
    %2773 = vmatprep.subr.mxu0 0.0
    %2774 = vmatpush1.msra.mxu0 0.0
    %2775 = vmatprep.subr.mxu0 0.0
    %2776 = vmatpush1.msra.mxu0 0.0
    %2777 = vmatprep.mubr.f32.mxu0 0.0
    %2778 = vmatmul.mubr.f32.gmra.mrb[0].mxu0 %v2708
    %v2779 = vpop.f32.mrb[0].mxu0
    %v2780 = vadd.f32 %v2705, %v2779
    %v2781 = vpop.f32.mrb[0].mxu0
    %2782 = vmatprep.mubr.f32.mxu0 0.0
    %2783 = vmatmul.mubr.f32.gmra.mrb[0].mxu0 %v2711
    %v2784 = vpop.f32.mrb[0].mxu0
    %v2785 = vadd.f32 %v2705, %v2784
    %v2786 = vpop.f32.mrb[0].mxu0
    %2787 = vdwg.mxu0
    %vm2788 = vcmask 39936
    %2789 = vst.msk [vmem:[%s26] sm:$0xff] %vm2788, %v2780
    %2790 = vst.msk [vmem:[%s26 + $0x8] sm:$0xff] %vm2788, %v2785
    %v2791 = vld [vmem:[%s23] sm:$0x1f]
    %v2792 = vld [vmem:[%s24] sm:$0x1]
    %v2793 = vld [vmem:[%s25] sm:$0x1]
    %v2794 = vld [vmem:[%s3] sm:$0x3]
    %v2795 = vlaneseq
    %v2796 = vshrl.u32 %v2795, 7
    %v2797 = vmul.u32 %v2796, 8
    %vm2798 = vcmask 36864
    %v2799 = vsel %vm2798, %v2791, -inf
    %v2800 = vrot.slane %v2799, 4
    %v2801 = vmax.f32 %v2799, %v2800
    %v2802 = vrot.slane %v2801, 2
    %v2803 = vmax.f32 %v2801, %v2802
    %v2804 = vrot.slane %v2803, 1
    %v2805 = vmax.f32 %v2803, %v2804
    %v2806 = vsub.f32 %v2791, %v2805
    %v2807 = vmul.f32 %v2806, 1.442695
    %v2808 = vpow.pop %v2807
    %vm2809 = vcmp.eq.s32.totalorder %v91, %v2797
    %v2810 = vsel %vm2809, 1, 0
    %v2811 = vcvt.s32.f32 %v2810
    %v2813 = vsel %vm443, %v2811, 0
    %2815 = vmatprep.subr.mxu0 0.0
    %2816 = vmatpush1.msra.mxu0 %v2780
    %2817 = vmatprep.subr.mxu0 0.0
    %2818 = vmatpush1.msra.mxu0 %v2785
    %2819 = vmatprep.subr.mxu0 0.0
    %2820 = vmatpush1.msra.mxu0 0.0
    %2821 = vmatprep.subr.mxu0 0.0
    %2822 = vmatpush1.msra.mxu0 0.0
    %2823 = vmatprep.subr.mxu0 0.0
    %2824 = vmatpush1.msra.mxu0 0.0
    %2825 = vmatprep.subr.mxu0 0.0
    %2826 = vmatpush1.msra.mxu0 0.0
    %2827 = vmatprep.subr.mxu0 0.0
    %2828 = vmatpush1.msra.mxu0 0.0
    %2829 = vmatprep.subr.mxu0 0.0
    %2830 = vmatpush1.msra.mxu0 0.0
    %2831 = vmatprep.subr.mxu0 0.0
    %2832 = vmatpush1.msra.mxu0 0.0
    %2833 = vmatprep.subr.mxu0 0.0
    %2834 = vmatpush1.msra.mxu0 0.0
    %2835 = vmatprep.subr.mxu0 0.0
    %2836 = vmatpush1.msra.mxu0 0.0
    %2837 = vmatprep.subr.mxu0 0.0
    %2838 = vmatpush1.msra.mxu0 0.0
    %2839 = vmatprep.subr.mxu0 0.0
    %2840 = vmatpush1.msra.mxu0 0.0
    %2841 = vmatprep.subr.mxu0 0.0
    %2842 = vmatpush1.msra.mxu0 0.0
    %2843 = vmatprep.subr.mxu0 0.0
    %2844 = vmatpush1.msra.mxu0 0.0
    %2845 = vmatprep.subr.mxu0 0.0
    %2846 = vmatpush1.msra.mxu0 0.0
    %2847 = vmatprep.subr.mxu0 0.0
    %2848 = vmatpush1.msra.mxu0 0.0
    %2849 = vmatprep.subr.mxu0 0.0
    %2850 = vmatpush1.msra.mxu0 0.0
    %2851 = vmatprep.subr.mxu0 0.0
    %2852 = vmatpush1.msra.mxu0 0.0
    %2853 = vmatprep.subr.mxu0 0.0
    %2854 = vmatpush1.msra.mxu0 0.0
    %2855 = vmatprep.subr.mxu0 0.0
    %2856 = vmatpush1.msra.mxu0 0.0
    %2857 = vmatprep.subr.mxu0 0.0
    %2858 = vmatpush1.msra.mxu0 0.0
    %2859 = vmatprep.subr.mxu0 0.0
    %2860 = vmatpush1.msra.mxu0 0.0
    %2861 = vmatprep.subr.mxu0 0.0
    %2862 = vmatpush1.msra.mxu0 0.0
    %2863 = vmatprep.subr.mxu0 0.0
    %2864 = vmatpush1.msra.mxu0 0.0
    %2865 = vmatprep.subr.mxu0 0.0
    %2866 = vmatpush1.msra.mxu0 0.0
    %2867 = vmatprep.subr.mxu0 0.0
    %2868 = vmatpush1.msra.mxu0 0.0
    %2869 = vmatprep.subr.mxu0 0.0
    %2870 = vmatpush1.msra.mxu0 0.0
    %2871 = vmatprep.subr.mxu0 0.0
    %2872 = vmatpush1.msra.mxu0 0.0
    %2873 = vmatprep.subr.mxu0 0.0
    %2874 = vmatpush1.msra.mxu0 0.0
    %2875 = vmatprep.subr.mxu0 0.0
    %2876 = vmatpush1.msra.mxu0 0.0
    %2877 = vmatprep.subr.mxu0 0.0
    %2878 = vmatpush1.msra.mxu0 0.0
    %2879 = vmatprep.mubr.f32.mxu0 0.0
    %2880 = vmatmul.mubr.f32.gmra.mrb[0].mxu0 %v2813
    %v2881 = vpop.f32.mrb[0].mxu0
    %v2882 = vadd.f32 0.0, %v2881
    %v2883 = vpop.f32.mrb[0].mxu0
    %2884 = vdwg.mxu0
    %2885 = vset.pattern.permute.xlu0 0
    %2886 = vperm.xlu0 %2885, %v2794
    %v2887 = vpop.permute.xlu0 %2886
    %vm2888 = vcmp.eq.s32.totalorder %v91, %v2887
    %v2889 = vsel %vm2888, 1, 0
    %v2890 = vcvt.s32.f32 %v2889
    %v2892 = vlaneseq
    %v2893 = vshrl.u32 %v2892, 7
    %v2894 = vsub.s32 0, %v2893
    %v2895 = vrot.slane %v2792, %v2894
    %v2897 = vadd.f32 %v2895, %v2882
    %v2898 = vmul.f32 %v2897, %v2890
    %vm2899 = vcmask 33792
    %v2900 = vsel %vm2899, %v2898, 0.0
    %2901 = vadd.xlane.f32.xlu0 %v2900
    %v2902 = vpop.xlane.xlu0 %2901
    %vm2903 = vcmp.gt.f32.partialorder %v345, 0.0
    %2904 = vset.pattern.permute.xlu0 1
    %2905 = vperm.xlu0 %2904, %v2794
    %v2906 = vpop.permute.xlu0 %2905
    %vm2907 = vcmp.eq.s32.totalorder %v91, %v2906
    %v2908 = vsel %vm2907, 1, 0
    %v2909 = vcvt.s32.f32 %v2908
    %v2910 = vadd.s32 %v2797, 1
    %vm2911 = vcmp.eq.s32.totalorder %v91, %v2910
    %v2912 = vsel %vm2911, 1, 0
    %v2913 = vcvt.s32.f32 %v2912
    %v2915 = vsel %vm443, %v2913, 0
    %2917 = vmatprep.subr.mxu0 0.0
    %2918 = vmatpush1.msra.mxu0 %v2780
    %2919 = vmatprep.subr.mxu0 0.0
    %2920 = vmatpush1.msra.mxu0 %v2785
    %2921 = vmatprep.subr.mxu0 0.0
    %2922 = vmatpush1.msra.mxu0 0.0
    %2923 = vmatprep.subr.mxu0 0.0
    %2924 = vmatpush1.msra.mxu0 0.0
    %2925 = vmatprep.subr.mxu0 0.0
    %2926 = vmatpush1.msra.mxu0 0.0
    %2927 = vmatprep.subr.mxu0 0.0
    %2928 = vmatpush1.msra.mxu0 0.0
    %2929 = vmatprep.subr.mxu0 0.0
    %2930 = vmatpush1.msra.mxu0 0.0
    %2931 = vmatprep.subr.mxu0 0.0
    %2932 = vmatpush1.msra.mxu0 0.0
    %2933 = vmatprep.subr.mxu0 0.0
    %2934 = vmatpush1.msra.mxu0 0.0
    %2935 = vmatprep.subr.mxu0 0.0
    %2936 = vmatpush1.msra.mxu0 0.0
    %2937 = vmatprep.subr.mxu0 0.0
    %2938 = vmatpush1.msra.mxu0 0.0
    %2939 = vmatprep.subr.mxu0 0.0
    %2940 = vmatpush1.msra.mxu0 0.0
    %2941 = vmatprep.subr.mxu0 0.0
    %2942 = vmatpush1.msra.mxu0 0.0
    %2943 = vmatprep.subr.mxu0 0.0
    %2944 = vmatpush1.msra.mxu0 0.0
    %2945 = vmatprep.subr.mxu0 0.0
    %2946 = vmatpush1.msra.mxu0 0.0
    %2947 = vmatprep.subr.mxu0 0.0
    %2948 = vmatpush1.msra.mxu0 0.0
    %2949 = vmatprep.subr.mxu0 0.0
    %2950 = vmatpush1.msra.mxu0 0.0
    %2951 = vmatprep.subr.mxu0 0.0
    %2952 = vmatpush1.msra.mxu0 0.0
    %2953 = vmatprep.subr.mxu0 0.0
    %2954 = vmatpush1.msra.mxu0 0.0
    %2955 = vmatprep.subr.mxu0 0.0
    %2956 = vmatpush1.msra.mxu0 0.0
    %2957 = vmatprep.subr.mxu0 0.0
    %2958 = vmatpush1.msra.mxu0 0.0
    %2959 = vmatprep.subr.mxu0 0.0
    %2960 = vmatpush1.msra.mxu0 0.0
    %2961 = vmatprep.subr.mxu0 0.0
    %2962 = vmatpush1.msra.mxu0 0.0
    %2963 = vmatprep.subr.mxu0 0.0
    %2964 = vmatpush1.msra.mxu0 0.0
    %2965 = vmatprep.subr.mxu0 0.0
    %2966 = vmatpush1.msra.mxu0 0.0
    %2967 = vmatprep.subr.mxu0 0.0
    %2968 = vmatpush1.msra.mxu0 0.0
    %2969 = vmatprep.subr.mxu0 0.0
    %2970 = vmatpush1.msra.mxu0 0.0
    %2971 = vmatprep.subr.mxu0 0.0
    %2972 = vmatpush1.msra.mxu0 0.0
    %2973 = vmatprep.subr.mxu0 0.0
    %2974 = vmatpush1.msra.mxu0 0.0
    %2975 = vmatprep.subr.mxu0 0.0
    %2976 = vmatpush1.msra.mxu0 0.0
    %2977 = vmatprep.subr.mxu0 0.0
    %2978 = vmatpush1.msra.mxu0 0.0
    %2979 = vmatprep.subr.mxu0 0.0
    %2980 = vmatpush1.msra.mxu0 0.0
    %2981 = vmatprep.mubr.f32.mxu0 0.0
    %2982 = vmatmul.mubr.f32.gmra.mrb[0].mxu0 %v2915
    %v2983 = vpop.f32.mrb[0].mxu0
    %v2984 = vadd.f32 0.0, %v2983
    %v2985 = vpop.f32.mrb[0].mxu0
    %2986 = vdwg.mxu0
    %v2988 = vsel %vm2788, %v2890, 0
    %vm2990 = vcmask 1044480
    %v2992 = vsel %vm2990, %v2791, 0
    %2994 = vmatprep.subr.mxu0 0.0
    %2995 = vmatpush1.msra.mxu0 %v2992
    %2996 = vmatprep.subr.mxu0 0.0
    %2997 = vmatpush1.msra.mxu0 0.0
    %2998 = vmatprep.subr.mxu0 0.0
    %2999 = vmatpush1.msra.mxu0 0.0
    %3000 = vmatprep.subr.mxu0 0.0
    %3001 = vmatpush1.msra.mxu0 0.0
    %3002 = vmatprep.subr.mxu0 0.0
    %3003 = vmatpush1.msra.mxu0 0.0
    %3004 = vmatprep.subr.mxu0 0.0
    %3005 = vmatpush1.msra.mxu0 0.0
    %3006 = vmatprep.subr.mxu0 0.0
    %3007 = vmatpush1.msra.mxu0 0.0
    %3008 = vmatprep.subr.mxu0 0.0
    %3009 = vmatpush1.msra.mxu0 0.0
    %3010 = vmatprep.subr.mxu0 0.0
    %3011 = vmatpush1.msra.mxu0 0.0
    %3012 = vmatprep.subr.mxu0 0.0
    %3013 = vmatpush1.msra.mxu0 0.0
    %3014 = vmatprep.subr.mxu0 0.0
    %3015 = vmatpush1.msra.mxu0 0.0
    %3016 = vmatprep.subr.mxu0 0.0
    %3017 = vmatpush1.msra.mxu0 0.0
    %3018 = vmatprep.subr.mxu0 0.0
    %3019 = vmatpush1.msra.mxu0 0.0
    %3020 = vmatprep.subr.mxu0 0.0
    %3021 = vmatpush1.msra.mxu0 0.0
    %3022 = vmatprep.subr.mxu0 0.0
    %3023 = vmatpush1.msra.mxu0 0.0
    %3024 = vmatprep.subr.mxu0 0.0
    %3025 = vmatpush1.msra.mxu0 0.0
    %3026 = vmatprep.subr.mxu0 0.0
    %3027 = vmatpush1.msra.mxu0 0.0
    %3028 = vmatprep.subr.mxu0 0.0
    %3029 = vmatpush1.msra.mxu0 0.0
    %3030 = vmatprep.subr.mxu0 0.0
    %3031 = vmatpush1.msra.mxu0 0.0
    %3032 = vmatprep.subr.mxu0 0.0
    %3033 = vmatpush1.msra.mxu0 0.0
    %3034 = vmatprep.subr.mxu0 0.0
    %3035 = vmatpush1.msra.mxu0 0.0
    %3036 = vmatprep.subr.mxu0 0.0
    %3037 = vmatpush1.msra.mxu0 0.0
    %3038 = vmatprep.subr.mxu0 0.0
    %3039 = vmatpush1.msra.mxu0 0.0
    %3040 = vmatprep.subr.mxu0 0.0
    %3041 = vmatpush1.msra.mxu0 0.0
    %3042 = vmatprep.subr.mxu0 0.0
    %3043 = vmatpush1.msra.mxu0 0.0
    %3044 = vmatprep.subr.mxu0 0.0
    %3045 = vmatpush1.msra.mxu0 0.0
    %3046 = vmatprep.subr.mxu0 0.0
    %3047 = vmatpush1.msra.mxu0 0.0
    %3048 = vmatprep.subr.mxu0 0.0
    %3049 = vmatpush1.msra.mxu0 0.0
    %3050 = vmatprep.subr.mxu0 0.0
    %3051 = vmatpush1.msra.mxu0 0.0
    %3052 = vmatprep.subr.mxu0 0.0
    %3053 = vmatpush1.msra.mxu0 0.0
    %3054 = vmatprep.subr.mxu0 0.0
    %3055 = vmatpush1.msra.mxu0 0.0
    %3056 = vmatprep.subr.mxu0 0.0
    %3057 = vmatpush1.msra.mxu0 0.0
    %3058 = vmatprep.mubr.f32.mxu0 0.0
    %3059 = vmatmul.mubr.f32.gmra.mrb[0].mxu0 %v2988
    %v3060 = vpop.f32.mrb[0].mxu0
    %v3061 = vadd.f32 %v2984, %v3060
    %v3062 = vpop.f32.mrb[0].mxu0
    %3063 = vdwg.mxu0
    %v3064 = vmul.f32 %v3061, %v2909
    %v3065 = vsel %vm2899, %v3064, 0.0
    %3066 = vadd.xlane.f32.xlu0 %v3065
    %v3067 = vpop.xlane.xlu0 %3066
    %v3068 = vmul.f32 %v345, %v3067
    %v3069 = vadd.f32 %v2902, %v3068
    %v3070 = vsel %vm2903, 1, 0
    %3071 = vset.pattern.permute.xlu0 1
    %3072 = vperm.xlu0 %3071, %v3070
    %v3073 = vpop.permute.xlu0 %3072
    %vm3074 = vcmp.eq.s32.totalorder %v3073, 1
    %v3075 = vsel %vm3074, %v2909, %v2890
    %v3076 = vsel %vm2899, %v2897, -inf
    %3077 = vmax.xlane.f32.xlu0 %v3076
    %v3078 = vpop.xlane.xlu0 %3077
    %v3079 = vsub.f32 %v2897, %v3078
    %v3080 = vmul.f32 %v3079, 1.442695
    %v3081 = vpow.pop %v3080
    %v3083 = vsel %vm2788, %v3081, 0
    %v3086 = vsel %vm2990, %v2808, 0
    %3088 = vmatprep.subr.mxu0 0.0
    %3089 = vmatpush1.msra.mxu0 %v3086
    %3090 = vmatprep.subr.mxu0 0.0
    %3091 = vmatpush1.msra.mxu0 0.0
    %3092 = vmatprep.subr.mxu0 0.0
    %3093 = vmatpush1.msra.mxu0 0.0
    %3094 = vmatprep.subr.mxu0 0.0
    %3095 = vmatpush1.msra.mxu0 0.0
    %3096 = vmatprep.subr.mxu0 0.0
    %3097 = vmatpush1.msra.mxu0 0.0
    %3098 = vmatprep.subr.mxu0 0.0
    %3099 = vmatpush1.msra.mxu0 0.0
    %3100 = vmatprep.subr.mxu0 0.0
    %3101 = vmatpush1.msra.mxu0 0.0
    %3102 = vmatprep.subr.mxu0 0.0
    %3103 = vmatpush1.msra.mxu0 0.0
    %3104 = vmatprep.subr.mxu0 0.0
    %3105 = vmatpush1.msra.mxu0 0.0
    %3106 = vmatprep.subr.mxu0 0.0
    %3107 = vmatpush1.msra.mxu0 0.0
    %3108 = vmatprep.subr.mxu0 0.0
    %3109 = vmatpush1.msra.mxu0 0.0
    %3110 = vmatprep.subr.mxu0 0.0
    %3111 = vmatpush1.msra.mxu0 0.0
    %3112 = vmatprep.subr.mxu0 0.0
    %3113 = vmatpush1.msra.mxu0 0.0
    %3114 = vmatprep.subr.mxu0 0.0
    %3115 = vmatpush1.msra.mxu0 0.0
    %3116 = vmatprep.subr.mxu0 0.0
    %3117 = vmatpush1.msra.mxu0 0.0
    %3118 = vmatprep.subr.mxu0 0.0
    %3119 = vmatpush1.msra.mxu0 0.0
    %3120 = vmatprep.subr.mxu0 0.0
    %3121 = vmatpush1.msra.mxu0 0.0
    %3122 = vmatprep.subr.mxu0 0.0
    %3123 = vmatpush1.msra.mxu0 0.0
    %3124 = vmatprep.subr.mxu0 0.0
    %3125 = vmatpush1.msra.mxu0 0.0
    %3126 = vmatprep.subr.mxu0 0.0
    %3127 = vmatpush1.msra.mxu0 0.0
    %3128 = vmatprep.subr.mxu0 0.0
    %3129 = vmatpush1.msra.mxu0 0.0
    %3130 = vmatprep.subr.mxu0 0.0
    %3131 = vmatpush1.msra.mxu0 0.0
    %3132 = vmatprep.subr.mxu0 0.0
    %3133 = vmatpush1.msra.mxu0 0.0
    %3134 = vmatprep.subr.mxu0 0.0
    %3135 = vmatpush1.msra.mxu0 0.0
    %3136 = vmatprep.subr.mxu0 0.0
    %3137 = vmatpush1.msra.mxu0 0.0
    %3138 = vmatprep.subr.mxu0 0.0
    %3139 = vmatpush1.msra.mxu0 0.0
    %3140 = vmatprep.subr.mxu0 0.0
    %3141 = vmatpush1.msra.mxu0 0.0
    %3142 = vmatprep.subr.mxu0 0.0
    %3143 = vmatpush1.msra.mxu0 0.0
    %3144 = vmatprep.subr.mxu0 0.0
    %3145 = vmatpush1.msra.mxu0 0.0
    %3146 = vmatprep.subr.mxu0 0.0
    %3147 = vmatpush1.msra.mxu0 0.0
    %3148 = vmatprep.subr.mxu0 0.0
    %3149 = vmatpush1.msra.mxu0 0.0
    %3150 = vmatprep.subr.mxu0 0.0
    %3151 = vmatpush1.msra.mxu0 0.0
    %3152 = vmatprep.mubr.f32.mxu0 0.0
    %3153 = vmatmul.mubr.f32.gmra.mrb[0].mxu0 %v3083
    %v3154 = vpop.f32.mrb[0].mxu0
    %v3155 = vadd.f32 0.0, %v3154
    %v3156 = vpop.f32.mrb[0].mxu0
    %3157 = vdwg.mxu0
    %v3158 = vadd.f32 %v2984, %v3078
    %v3159 = vadd.f32 %v3158, %v2805
    %v3160 = vlog2.pop %v3155
    %v3161 = vmul.f32 %v3160, 0.6931472
    %v3162 = vadd.f32 %v3159, %v3161
    %v3163 = vsel %vm3074, %v3162, %v2897
    %3164 = vset.pattern.permute.xlu0 2
    %3165 = vperm.xlu0 %3164, %v2794
    %v3166 = vpop.permute.xlu0 %3165
    %vm3167 = vcmp.eq.s32.totalorder %v91, %v3166
    %v3168 = vsel %vm3167, 1, 0
    %v3169 = vcvt.s32.f32 %v3168
    %v3170 = vadd.s32 %v2797, 2
    %vm3171 = vcmp.eq.s32.totalorder %v91, %v3170
    %v3172 = vsel %vm3171, 1, 0
    %v3173 = vcvt.s32.f32 %v3172
    %v3175 = vsel %vm443, %v3173, 0
    %3177 = vmatprep.subr.mxu0 0.0
    %3178 = vmatpush1.msra.mxu0 %v2780
    %3179 = vmatprep.subr.mxu0 0.0
    %3180 = vmatpush1.msra.mxu0 %v2785
    %3181 = vmatprep.subr.mxu0 0.0
    %3182 = vmatpush1.msra.mxu0 0.0
    %3183 = vmatprep.subr.mxu0 0.0
    %3184 = vmatpush1.msra.mxu0 0.0
    %3185 = vmatprep.subr.mxu0 0.0
    %3186 = vmatpush1.msra.mxu0 0.0
    %3187 = vmatprep.subr.mxu0 0.0
    %3188 = vmatpush1.msra.mxu0 0.0
    %3189 = vmatprep.subr.mxu0 0.0
    %3190 = vmatpush1.msra.mxu0 0.0
    %3191 = vmatprep.subr.mxu0 0.0
    %3192 = vmatpush1.msra.mxu0 0.0
    %3193 = vmatprep.subr.mxu0 0.0
    %3194 = vmatpush1.msra.mxu0 0.0
    %3195 = vmatprep.subr.mxu0 0.0
    %3196 = vmatpush1.msra.mxu0 0.0
    %3197 = vmatprep.subr.mxu0 0.0
    %3198 = vmatpush1.msra.mxu0 0.0
    %3199 = vmatprep.subr.mxu0 0.0
    %3200 = vmatpush1.msra.mxu0 0.0
    %3201 = vmatprep.subr.mxu0 0.0
    %3202 = vmatpush1.msra.mxu0 0.0
    %3203 = vmatprep.subr.mxu0 0.0
    %3204 = vmatpush1.msra.mxu0 0.0
    %3205 = vmatprep.subr.mxu0 0.0
    %3206 = vmatpush1.msra.mxu0 0.0
    %3207 = vmatprep.subr.mxu0 0.0
    %3208 = vmatpush1.msra.mxu0 0.0
    %3209 = vmatprep.subr.mxu0 0.0
    %3210 = vmatpush1.msra.mxu0 0.0
    %3211 = vmatprep.subr.mxu0 0.0
    %3212 = vmatpush1.msra.mxu0 0.0
    %3213 = vmatprep.subr.mxu0 0.0
    %3214 = vmatpush1.msra.mxu0 0.0
    %3215 = vmatprep.subr.mxu0 0.0
    %3216 = vmatpush1.msra.mxu0 0.0
    %3217 = vmatprep.subr.mxu0 0.0
    %3218 = vmatpush1.msra.mxu0 0.0
    %3219 = vmatprep.subr.mxu0 0.0
    %3220 = vmatpush1.msra.mxu0 0.0
    %3221 = vmatprep.subr.mxu0 0.0
    %3222 = vmatpush1.msra.mxu0 0.0
    %3223 = vmatprep.subr.mxu0 0.0
    %3224 = vmatpush1.msra.mxu0 0.0
    %3225 = vmatprep.subr.mxu0 0.0
    %3226 = vmatpush1.msra.mxu0 0.0
    %3227 = vmatprep.subr.mxu0 0.0
    %3228 = vmatpush1.msra.mxu0 0.0
    %3229 = vmatprep.subr.mxu0 0.0
    %3230 = vmatpush1.msra.mxu0 0.0
    %3231 = vmatprep.subr.mxu0 0.0
    %3232 = vmatpush1.msra.mxu0 0.0
    %3233 = vmatprep.subr.mxu0 0.0
    %3234 = vmatpush1.msra.mxu0 0.0
    %3235 = vmatprep.subr.mxu0 0.0
    %3236 = vmatpush1.msra.mxu0 0.0
    %3237 = vmatprep.subr.mxu0 0.0
    %3238 = vmatpush1.msra.mxu0 0.0
    %3239 = vmatprep.subr.mxu0 0.0
    %3240 = vmatpush1.msra.mxu0 0.0
    %3241 = vmatprep.mubr.f32.mxu0 0.0
    %3242 = vmatmul.mubr.f32.gmra.mrb[0].mxu0 %v3175
    %v3243 = vpop.f32.mrb[0].mxu0
    %v3244 = vadd.f32 0.0, %v3243
    %v3245 = vpop.f32.mrb[0].mxu0
    %3246 = vdwg.mxu0
    %v3248 = vsel %vm2788, %v2909, 0
    %3250 = vmatprep.subr.mxu0 0.0
    %3251 = vmatpush1.msra.mxu0 %v2992
    %3252 = vmatprep.subr.mxu0 0.0
    %3253 = vmatpush1.msra.mxu0 0.0
    %3254 = vmatprep.subr.mxu0 0.0
    %3255 = vmatpush1.msra.mxu0 0.0
    %3256 = vmatprep.subr.mxu0 0.0
    %3257 = vmatpush1.msra.mxu0 0.0
    %3258 = vmatprep.subr.mxu0 0.0
    %3259 = vmatpush1.msra.mxu0 0.0
    %3260 = vmatprep.subr.mxu0 0.0
    %3261 = vmatpush1.msra.mxu0 0.0
    %3262 = vmatprep.subr.mxu0 0.0
    %3263 = vmatpush1.msra.mxu0 0.0
    %3264 = vmatprep.subr.mxu0 0.0
    %3265 = vmatpush1.msra.mxu0 0.0
    %3266 = vmatprep.subr.mxu0 0.0
    %3267 = vmatpush1.msra.mxu0 0.0
    %3268 = vmatprep.subr.mxu0 0.0
    %3269 = vmatpush1.msra.mxu0 0.0
    %3270 = vmatprep.subr.mxu0 0.0
    %3271 = vmatpush1.msra.mxu0 0.0
    %3272 = vmatprep.subr.mxu0 0.0
    %3273 = vmatpush1.msra.mxu0 0.0
    %3274 = vmatprep.subr.mxu0 0.0
    %3275 = vmatpush1.msra.mxu0 0.0
    %3276 = vmatprep.subr.mxu0 0.0
    %3277 = vmatpush1.msra.mxu0 0.0
    %3278 = vmatprep.subr.mxu0 0.0
    %3279 = vmatpush1.msra.mxu0 0.0
    %3280 = vmatprep.subr.mxu0 0.0
    %3281 = vmatpush1.msra.mxu0 0.0
    %3282 = vmatprep.subr.mxu0 0.0
    %3283 = vmatpush1.msra.mxu0 0.0
    %3284 = vmatprep.subr.mxu0 0.0
    %3285 = vmatpush1.msra.mxu0 0.0
    %3286 = vmatprep.subr.mxu0 0.0
    %3287 = vmatpush1.msra.mxu0 0.0
    %3288 = vmatprep.subr.mxu0 0.0
    %3289 = vmatpush1.msra.mxu0 0.0
    %3290 = vmatprep.subr.mxu0 0.0
    %3291 = vmatpush1.msra.mxu0 0.0
    %3292 = vmatprep.subr.mxu0 0.0
    %3293 = vmatpush1.msra.mxu0 0.0
    %3294 = vmatprep.subr.mxu0 0.0
    %3295 = vmatpush1.msra.mxu0 0.0
    %3296 = vmatprep.subr.mxu0 0.0
    %3297 = vmatpush1.msra.mxu0 0.0
    %3298 = vmatprep.subr.mxu0 0.0
    %3299 = vmatpush1.msra.mxu0 0.0
    %3300 = vmatprep.subr.mxu0 0.0
    %3301 = vmatpush1.msra.mxu0 0.0
    %3302 = vmatprep.subr.mxu0 0.0
    %3303 = vmatpush1.msra.mxu0 0.0
    %3304 = vmatprep.subr.mxu0 0.0
    %3305 = vmatpush1.msra.mxu0 0.0
    %3306 = vmatprep.subr.mxu0 0.0
    %3307 = vmatpush1.msra.mxu0 0.0
    %3308 = vmatprep.subr.mxu0 0.0
    %3309 = vmatpush1.msra.mxu0 0.0
    %3310 = vmatprep.subr.mxu0 0.0
    %3311 = vmatpush1.msra.mxu0 0.0
    %3312 = vmatprep.subr.mxu0 0.0
    %3313 = vmatpush1.msra.mxu0 0.0
    %3314 = vmatprep.mubr.f32.mxu0 0.0
    %3315 = vmatmul.mubr.f32.gmra.mrb[0].mxu0 %v3248
    %v3316 = vpop.f32.mrb[0].mxu0
    %v3317 = vadd.f32 %v3244, %v3316
    %v3318 = vpop.f32.mrb[0].mxu0
    %3319 = vdwg.mxu0
    %v3320 = vmul.f32 %v3317, %v3169
    %v3321 = vsel %vm2899, %v3320, 0.0
    %3322 = vadd.xlane.f32.xlu0 %v3321
    %v3323 = vpop.xlane.xlu0 %3322
    %v3324 = vmul.f32 %v345, %v3323
    %3326 = vrot.lane.b32.xlu0 %v3324, 127
    %v3327 = vpop.permute.xlu0 %3326
    %v3329 = vadd.f32 %v3069, %v3327
    %3330 = vset.pattern.permute.xlu0 2
    %3331 = vperm.xlu0 %3330, %v3070
    %v3332 = vpop.permute.xlu0 %3331
    %vm3333 = vcmp.eq.s32.totalorder %v3332, 1
    %v3334 = vsel %vm3333, %v3169, %v3075
    %v3335 = vsel %vm2899, %v3163, -inf
    %3336 = vmax.xlane.f32.xlu0 %v3335
    %v3337 = vpop.xlane.xlu0 %3336
    %v3338 = vsub.f32 %v3163, %v3337
    %v3339 = vmul.f32 %v3338, 1.442695
    %v3340 = vpow.pop %v3339
    %v3342 = vsel %vm2788, %v3340, 0
    %3344 = vmatprep.subr.mxu0 0.0
    %3345 = vmatpush1.msra.mxu0 %v3086
    %3346 = vmatprep.subr.mxu0 0.0
    %3347 = vmatpush1.msra.mxu0 0.0
    %3348 = vmatprep.subr.mxu0 0.0
    %3349 = vmatpush1.msra.mxu0 0.0
    %3350 = vmatprep.subr.mxu0 0.0
    %3351 = vmatpush1.msra.mxu0 0.0
    %3352 = vmatprep.subr.mxu0 0.0
    %3353 = vmatpush1.msra.mxu0 0.0
    %3354 = vmatprep.subr.mxu0 0.0
    %3355 = vmatpush1.msra.mxu0 0.0
    %3356 = vmatprep.subr.mxu0 0.0
    %3357 = vmatpush1.msra.mxu0 0.0
    %3358 = vmatprep.subr.mxu0 0.0
    %3359 = vmatpush1.msra.mxu0 0.0
    %3360 = vmatprep.subr.mxu0 0.0
    %3361 = vmatpush1.msra.mxu0 0.0
    %3362 = vmatprep.subr.mxu0 0.0
    %3363 = vmatpush1.msra.mxu0 0.0
    %3364 = vmatprep.subr.mxu0 0.0
    %3365 = vmatpush1.msra.mxu0 0.0
    %3366 = vmatprep.subr.mxu0 0.0
    %3367 = vmatpush1.msra.mxu0 0.0
    %3368 = vmatprep.subr.mxu0 0.0
    %3369 = vmatpush1.msra.mxu0 0.0
    %3370 = vmatprep.subr.mxu0 0.0
    %3371 = vmatpush1.msra.mxu0 0.0
    %3372 = vmatprep.subr.mxu0 0.0
    %3373 = vmatpush1.msra.mxu0 0.0
    %3374 = vmatprep.subr.mxu0 0.0
    %3375 = vmatpush1.msra.mxu0 0.0
    %3376 = vmatprep.subr.mxu0 0.0
    %3377 = vmatpush1.msra.mxu0 0.0
    %3378 = vmatprep.subr.mxu0 0.0
    %3379 = vmatpush1.msra.mxu0 0.0
    %3380 = vmatprep.subr.mxu0 0.0
    %3381 = vmatpush1.msra.mxu0 0.0
    %3382 = vmatprep.subr.mxu0 0.0
    %3383 = vmatpush1.msra.mxu0 0.0
    %3384 = vmatprep.subr.mxu0 0.0
    %3385 = vmatpush1.msra.mxu0 0.0
    %3386 = vmatprep.subr.mxu0 0.0
    %3387 = vmatpush1.msra.mxu0 0.0
    %3388 = vmatprep.subr.mxu0 0.0
    %3389 = vmatpush1.msra.mxu0 0.0
    %3390 = vmatprep.subr.mxu0 0.0
    %3391 = vmatpush1.msra.mxu0 0.0
    %3392 = vmatprep.subr.mxu0 0.0
    %3393 = vmatpush1.msra.mxu0 0.0
    %3394 = vmatprep.subr.mxu0 0.0
    %3395 = vmatpush1.msra.mxu0 0.0
    %3396 = vmatprep.subr.mxu0 0.0
    %3397 = vmatpush1.msra.mxu0 0.0
    %3398 = vmatprep.subr.mxu0 0.0
    %3399 = vmatpush1.msra.mxu0 0.0
    %3400 = vmatprep.subr.mxu0 0.0
    %3401 = vmatpush1.msra.mxu0 0.0
    %3402 = vmatprep.subr.mxu0 0.0
    %3403 = vmatpush1.msra.mxu0 0.0
    %3404 = vmatprep.subr.mxu0 0.0
    %3405 = vmatpush1.msra.mxu0 0.0
    %3406 = vmatprep.subr.mxu0 0.0
    %3407 = vmatpush1.msra.mxu0 0.0
    %3408 = vmatprep.mubr.f32.mxu0 0.0
    %3409 = vmatmul.mubr.f32.gmra.mrb[0].mxu0 %v3342
    %v3410 = vpop.f32.mrb[0].mxu0
    %v3411 = vadd.f32 0.0, %v3410
    %v3412 = vpop.f32.mrb[0].mxu0
    %3413 = vdwg.mxu0
    %v3414 = vadd.f32 %v3244, %v3337
    %v3415 = vadd.f32 %v3414, %v2805
    %v3416 = vlog2.pop %v3411
    %v3417 = vmul.f32 %v3416, 0.6931472
    %v3418 = vadd.f32 %v3415, %v3417
    %v3419 = vsel %vm3333, %v3418, %v3163
    %3420 = vset.pattern.permute.xlu0 3
    %3421 = vperm.xlu0 %3420, %v2794
    %v3422 = vpop.permute.xlu0 %3421
    %vm3423 = vcmp.eq.s32.totalorder %v91, %v3422
    %v3424 = vsel %vm3423, 1, 0
    %v3425 = vcvt.s32.f32 %v3424
    %v3426 = vadd.s32 %v2797, 3
    %vm3427 = vcmp.eq.s32.totalorder %v91, %v3426
    %v3428 = vsel %vm3427, 1, 0
    %v3429 = vcvt.s32.f32 %v3428
    %v3431 = vsel %vm443, %v3429, 0
    %3433 = vmatprep.subr.mxu0 0.0
    %3434 = vmatpush1.msra.mxu0 %v2780
    %3435 = vmatprep.subr.mxu0 0.0
    %3436 = vmatpush1.msra.mxu0 %v2785
    %3437 = vmatprep.subr.mxu0 0.0
    %3438 = vmatpush1.msra.mxu0 0.0
    %3439 = vmatprep.subr.mxu0 0.0
    %3440 = vmatpush1.msra.mxu0 0.0
    %3441 = vmatprep.subr.mxu0 0.0
    %3442 = vmatpush1.msra.mxu0 0.0
    %3443 = vmatprep.subr.mxu0 0.0
    %3444 = vmatpush1.msra.mxu0 0.0
    %3445 = vmatprep.subr.mxu0 0.0
    %3446 = vmatpush1.msra.mxu0 0.0
    %3447 = vmatprep.subr.mxu0 0.0
    %3448 = vmatpush1.msra.mxu0 0.0
    %3449 = vmatprep.subr.mxu0 0.0
    %3450 = vmatpush1.msra.mxu0 0.0
    %3451 = vmatprep.subr.mxu0 0.0
    %3452 = vmatpush1.msra.mxu0 0.0
    %3453 = vmatprep.subr.mxu0 0.0
    %3454 = vmatpush1.msra.mxu0 0.0
    %3455 = vmatprep.subr.mxu0 0.0
    %3456 = vmatpush1.msra.mxu0 0.0
    %3457 = vmatprep.subr.mxu0 0.0
    %3458 = vmatpush1.msra.mxu0 0.0
    %3459 = vmatprep.subr.mxu0 0.0
    %3460 = vmatpush1.msra.mxu0 0.0
    %3461 = vmatprep.subr.mxu0 0.0
    %3462 = vmatpush1.msra.mxu0 0.0
    %3463 = vmatprep.subr.mxu0 0.0
    %3464 = vmatpush1.msra.mxu0 0.0
    %3465 = vmatprep.subr.mxu0 0.0
    %3466 = vmatpush1.msra.mxu0 0.0
    %3467 = vmatprep.subr.mxu0 0.0
    %3468 = vmatpush1.msra.mxu0 0.0
    %3469 = vmatprep.subr.mxu0 0.0
    %3470 = vmatpush1.msra.mxu0 0.0
    %3471 = vmatprep.subr.mxu0 0.0
    %3472 = vmatpush1.msra.mxu0 0.0
    %3473 = vmatprep.subr.mxu0 0.0
    %3474 = vmatpush1.msra.mxu0 0.0
    %3475 = vmatprep.subr.mxu0 0.0
    %3476 = vmatpush1.msra.mxu0 0.0
    %3477 = vmatprep.subr.mxu0 0.0
    %3478 = vmatpush1.msra.mxu0 0.0
    %3479 = vmatprep.subr.mxu0 0.0
    %3480 = vmatpush1.msra.mxu0 0.0
    %3481 = vmatprep.subr.mxu0 0.0
    %3482 = vmatpush1.msra.mxu0 0.0
    %3483 = vmatprep.subr.mxu0 0.0
    %3484 = vmatpush1.msra.mxu0 0.0
    %3485 = vmatprep.subr.mxu0 0.0
    %3486 = vmatpush1.msra.mxu0 0.0
    %3487 = vmatprep.subr.mxu0 0.0
    %3488 = vmatpush1.msra.mxu0 0.0
    %3489 = vmatprep.subr.mxu0 0.0
    %3490 = vmatpush1.msra.mxu0 0.0
    %3491 = vmatprep.subr.mxu0 0.0
    %3492 = vmatpush1.msra.mxu0 0.0
    %3493 = vmatprep.subr.mxu0 0.0
    %3494 = vmatpush1.msra.mxu0 0.0
    %3495 = vmatprep.subr.mxu0 0.0
    %3496 = vmatpush1.msra.mxu0 0.0
    %3497 = vmatprep.mubr.f32.mxu0 0.0
    %3498 = vmatmul.mubr.f32.gmra.mrb[0].mxu0 %v3431
    %v3499 = vpop.f32.mrb[0].mxu0
    %v3500 = vadd.f32 0.0, %v3499
    %v3501 = vpop.f32.mrb[0].mxu0
    %3502 = vdwg.mxu0
    %v3504 = vsel %vm2788, %v3169, 0
    %3506 = vmatprep.subr.mxu0 0.0
    %3507 = vmatpush1.msra.mxu0 %v2992
    %3508 = vmatprep.subr.mxu0 0.0
    %3509 = vmatpush1.msra.mxu0 0.0
    %3510 = vmatprep.subr.mxu0 0.0
    %3511 = vmatpush1.msra.mxu0 0.0
    %3512 = vmatprep.subr.mxu0 0.0
    %3513 = vmatpush1.msra.mxu0 0.0
    %3514 = vmatprep.subr.mxu0 0.0
    %3515 = vmatpush1.msra.mxu0 0.0
    %3516 = vmatprep.subr.mxu0 0.0
    %3517 = vmatpush1.msra.mxu0 0.0
    %3518 = vmatprep.subr.mxu0 0.0
    %3519 = vmatpush1.msra.mxu0 0.0
    %3520 = vmatprep.subr.mxu0 0.0
    %3521 = vmatpush1.msra.mxu0 0.0
    %3522 = vmatprep.subr.mxu0 0.0
    %3523 = vmatpush1.msra.mxu0 0.0
    %3524 = vmatprep.subr.mxu0 0.0
    %3525 = vmatpush1.msra.mxu0 0.0
    %3526 = vmatprep.subr.mxu0 0.0
    %3527 = vmatpush1.msra.mxu0 0.0
    %3528 = vmatprep.subr.mxu0 0.0
    %3529 = vmatpush1.msra.mxu0 0.0
    %3530 = vmatprep.subr.mxu0 0.0
    %3531 = vmatpush1.msra.mxu0 0.0
    %3532 = vmatprep.subr.mxu0 0.0
    %3533 = vmatpush1.msra.mxu0 0.0
    %3534 = vmatprep.subr.mxu0 0.0
    %3535 = vmatpush1.msra.mxu0 0.0
    %3536 = vmatprep.subr.mxu0 0.0
    %3537 = vmatpush1.msra.mxu0 0.0
    %3538 = vmatprep.subr.mxu0 0.0
    %3539 = vmatpush1.msra.mxu0 0.0
    %3540 = vmatprep.subr.mxu0 0.0
    %3541 = vmatpush1.msra.mxu0 0.0
    %3542 = vmatprep.subr.mxu0 0.0
    %3543 = vmatpush1.msra.mxu0 0.0
    %3544 = vmatprep.subr.mxu0 0.0
    %3545 = vmatpush1.msra.mxu0 0.0
    %3546 = vmatprep.subr.mxu0 0.0
    %3547 = vmatpush1.msra.mxu0 0.0
    %3548 = vmatprep.subr.mxu0 0.0
    %3549 = vmatpush1.msra.mxu0 0.0
    %3550 = vmatprep.subr.mxu0 0.0
    %3551 = vmatpush1.msra.mxu0 0.0
    %3552 = vmatprep.subr.mxu0 0.0
    %3553 = vmatpush1.msra.mxu0 0.0
    %3554 = vmatprep.subr.mxu0 0.0
    %3555 = vmatpush1.msra.mxu0 0.0
    %3556 = vmatprep.subr.mxu0 0.0
    %3557 = vmatpush1.msra.mxu0 0.0
    %3558 = vmatprep.subr.mxu0 0.0
    %3559 = vmatpush1.msra.mxu0 0.0
    %3560 = vmatprep.subr.mxu0 0.0
    %3561 = vmatpush1.msra.mxu0 0.0
    %3562 = vmatprep.subr.mxu0 0.0
    %3563 = vmatpush1.msra.mxu0 0.0
    %3564 = vmatprep.subr.mxu0 0.0
    %3565 = vmatpush1.msra.mxu0 0.0
    %3566 = vmatprep.subr.mxu0 0.0
    %3567 = vmatpush1.msra.mxu0 0.0
    %3568 = vmatprep.subr.mxu0 0.0
    %3569 = vmatpush1.msra.mxu0 0.0
    %3570 = vmatprep.mubr.f32.mxu0 0.0
    %3571 = vmatmul.mubr.f32.gmra.mrb[0].mxu0 %v3504
    %v3572 = vpop.f32.mrb[0].mxu0
    %v3573 = vadd.f32 %v3500, %v3572
    %v3574 = vpop.f32.mrb[0].mxu0
    %3575 = vdwg.mxu0
    %v3576 = vmul.f32 %v3573, %v3425
    %v3577 = vsel %vm2899, %v3576, 0.0
    %3578 = vadd.xlane.f32.xlu0 %v3577
    %v3579 = vpop.xlane.xlu0 %3578
    %v3580 = vmul.f32 %v345, %v3579
    %3582 = vrot.lane.b32.xlu0 %v3580, 126
    %v3583 = vpop.permute.xlu0 %3582
    %v3585 = vadd.f32 %v3329, %v3583
    %3586 = vset.pattern.permute.xlu0 3
    %3587 = vperm.xlu0 %3586, %v3070
    %v3588 = vpop.permute.xlu0 %3587
    %vm3589 = vcmp.eq.s32.totalorder %v3588, 1
    %v3590 = vsel %vm3589, %v3425, %v3334
    %v3591 = vsel %vm2899, %v3419, -inf
    %3592 = vmax.xlane.f32.xlu0 %v3591
    %v3593 = vpop.xlane.xlu0 %3592
    %v3594 = vsub.f32 %v3419, %v3593
    %v3595 = vmul.f32 %v3594, 1.442695
    %v3596 = vpow.pop %v3595
    %v3598 = vsel %vm2788, %v3596, 0
    %3600 = vmatprep.subr.mxu0 0.0
    %3601 = vmatpush1.msra.mxu0 %v3086
    %3602 = vmatprep.subr.mxu0 0.0
    %3603 = vmatpush1.msra.mxu0 0.0
    %3604 = vmatprep.subr.mxu0 0.0
    %3605 = vmatpush1.msra.mxu0 0.0
    %3606 = vmatprep.subr.mxu0 0.0
    %3607 = vmatpush1.msra.mxu0 0.0
    %3608 = vmatprep.subr.mxu0 0.0
    %3609 = vmatpush1.msra.mxu0 0.0
    %3610 = vmatprep.subr.mxu0 0.0
    %3611 = vmatpush1.msra.mxu0 0.0
    %3612 = vmatprep.subr.mxu0 0.0
    %3613 = vmatpush1.msra.mxu0 0.0
    %3614 = vmatprep.subr.mxu0 0.0
    %3615 = vmatpush1.msra.mxu0 0.0
    %3616 = vmatprep.subr.mxu0 0.0
    %3617 = vmatpush1.msra.mxu0 0.0
    %3618 = vmatprep.subr.mxu0 0.0
    %3619 = vmatpush1.msra.mxu0 0.0
    %3620 = vmatprep.subr.mxu0 0.0
    %3621 = vmatpush1.msra.mxu0 0.0
    %3622 = vmatprep.subr.mxu0 0.0
    %3623 = vmatpush1.msra.mxu0 0.0
    %3624 = vmatprep.subr.mxu0 0.0
    %3625 = vmatpush1.msra.mxu0 0.0
    %3626 = vmatprep.subr.mxu0 0.0
    %3627 = vmatpush1.msra.mxu0 0.0
    %3628 = vmatprep.subr.mxu0 0.0
    %3629 = vmatpush1.msra.mxu0 0.0
    %3630 = vmatprep.subr.mxu0 0.0
    %3631 = vmatpush1.msra.mxu0 0.0
    %3632 = vmatprep.subr.mxu0 0.0
    %3633 = vmatpush1.msra.mxu0 0.0
    %3634 = vmatprep.subr.mxu0 0.0
    %3635 = vmatpush1.msra.mxu0 0.0
    %3636 = vmatprep.subr.mxu0 0.0
    %3637 = vmatpush1.msra.mxu0 0.0
    %3638 = vmatprep.subr.mxu0 0.0
    %3639 = vmatpush1.msra.mxu0 0.0
    %3640 = vmatprep.subr.mxu0 0.0
    %3641 = vmatpush1.msra.mxu0 0.0
    %3642 = vmatprep.subr.mxu0 0.0
    %3643 = vmatpush1.msra.mxu0 0.0
    %3644 = vmatprep.subr.mxu0 0.0
    %3645 = vmatpush1.msra.mxu0 0.0
    %3646 = vmatprep.subr.mxu0 0.0
    %3647 = vmatpush1.msra.mxu0 0.0
    %3648 = vmatprep.subr.mxu0 0.0
    %3649 = vmatpush1.msra.mxu0 0.0
    %3650 = vmatprep.subr.mxu0 0.0
    %3651 = vmatpush1.msra.mxu0 0.0
    %3652 = vmatprep.subr.mxu0 0.0
    %3653 = vmatpush1.msra.mxu0 0.0
    %3654 = vmatprep.subr.mxu0 0.0
    %3655 = vmatpush1.msra.mxu0 0.0
    %3656 = vmatprep.subr.mxu0 0.0
    %3657 = vmatpush1.msra.mxu0 0.0
    %3658 = vmatprep.subr.mxu0 0.0
    %3659 = vmatpush1.msra.mxu0 0.0
    %3660 = vmatprep.subr.mxu0 0.0
    %3661 = vmatpush1.msra.mxu0 0.0
    %3662 = vmatprep.subr.mxu0 0.0
    %3663 = vmatpush1.msra.mxu0 0.0
    %3664 = vmatprep.mubr.f32.mxu0 0.0
    %3665 = vmatmul.mubr.f32.gmra.mrb[0].mxu0 %v3598
    %v3666 = vpop.f32.mrb[0].mxu0
    %v3667 = vadd.f32 0.0, %v3666
    %v3668 = vpop.f32.mrb[0].mxu0
    %3669 = vdwg.mxu0
    %v3670 = vadd.f32 %v3500, %v3593
    %v3671 = vadd.f32 %v3670, %v2805
    %v3672 = vlog2.pop %v3667
    %v3673 = vmul.f32 %v3672, 0.6931472
    %v3674 = vadd.f32 %v3671, %v3673
    %v3675 = vsel %vm3589, %v3674, %v3419
    %3676 = vset.pattern.permute.xlu0 4
    %3677 = vperm.xlu0 %3676, %v2794
    %v3678 = vpop.permute.xlu0 %3677
    %vm3679 = vcmp.eq.s32.totalorder %v91, %v3678
    %v3680 = vsel %vm3679, 1, 0
    %v3681 = vcvt.s32.f32 %v3680
    %v3682 = vadd.s32 %v2797, 4
    %vm3683 = vcmp.eq.s32.totalorder %v91, %v3682
    %v3684 = vsel %vm3683, 1, 0
    %v3685 = vcvt.s32.f32 %v3684
    %v3687 = vsel %vm443, %v3685, 0
    %3689 = vmatprep.subr.mxu0 0.0
    %3690 = vmatpush1.msra.mxu0 %v2780
    %3691 = vmatprep.subr.mxu0 0.0
    %3692 = vmatpush1.msra.mxu0 %v2785
    %3693 = vmatprep.subr.mxu0 0.0
    %3694 = vmatpush1.msra.mxu0 0.0
    %3695 = vmatprep.subr.mxu0 0.0
    %3696 = vmatpush1.msra.mxu0 0.0
    %3697 = vmatprep.subr.mxu0 0.0
    %3698 = vmatpush1.msra.mxu0 0.0
    %3699 = vmatprep.subr.mxu0 0.0
    %3700 = vmatpush1.msra.mxu0 0.0
    %3701 = vmatprep.subr.mxu0 0.0
    %3702 = vmatpush1.msra.mxu0 0.0
    %3703 = vmatprep.subr.mxu0 0.0
    %3704 = vmatpush1.msra.mxu0 0.0
    %3705 = vmatprep.subr.mxu0 0.0
    %3706 = vmatpush1.msra.mxu0 0.0
    %3707 = vmatprep.subr.mxu0 0.0
    %3708 = vmatpush1.msra.mxu0 0.0
    %3709 = vmatprep.subr.mxu0 0.0
    %3710 = vmatpush1.msra.mxu0 0.0
    %3711 = vmatprep.subr.mxu0 0.0
    %3712 = vmatpush1.msra.mxu0 0.0
    %3713 = vmatprep.subr.mxu0 0.0
    %3714 = vmatpush1.msra.mxu0 0.0
    %3715 = vmatprep.subr.mxu0 0.0
    %3716 = vmatpush1.msra.mxu0 0.0
    %3717 = vmatprep.subr.mxu0 0.0
    %3718 = vmatpush1.msra.mxu0 0.0
    %3719 = vmatprep.subr.mxu0 0.0
    %3720 = vmatpush1.msra.mxu0 0.0
    %3721 = vmatprep.subr.mxu0 0.0
    %3722 = vmatpush1.msra.mxu0 0.0
    %3723 = vmatprep.subr.mxu0 0.0
    %3724 = vmatpush1.msra.mxu0 0.0
    %3725 = vmatprep.subr.mxu0 0.0
    %3726 = vmatpush1.msra.mxu0 0.0
    %3727 = vmatprep.subr.mxu0 0.0
    %3728 = vmatpush1.msra.mxu0 0.0
    %3729 = vmatprep.subr.mxu0 0.0
    %3730 = vmatpush1.msra.mxu0 0.0
    %3731 = vmatprep.subr.mxu0 0.0
    %3732 = vmatpush1.msra.mxu0 0.0
    %3733 = vmatprep.subr.mxu0 0.0
    %3734 = vmatpush1.msra.mxu0 0.0
    %3735 = vmatprep.subr.mxu0 0.0
    %3736 = vmatpush1.msra.mxu0 0.0
    %3737 = vmatprep.subr.mxu0 0.0
    %3738 = vmatpush1.msra.mxu0 0.0
    %3739 = vmatprep.subr.mxu0 0.0
    %3740 = vmatpush1.msra.mxu0 0.0
    %3741 = vmatprep.subr.mxu0 0.0
    %3742 = vmatpush1.msra.mxu0 0.0
    %3743 = vmatprep.subr.mxu0 0.0
    %3744 = vmatpush1.msra.mxu0 0.0
    %3745 = vmatprep.subr.mxu0 0.0
    %3746 = vmatpush1.msra.mxu0 0.0
    %3747 = vmatprep.subr.mxu0 0.0
    %3748 = vmatpush1.msra.mxu0 0.0
    %3749 = vmatprep.subr.mxu0 0.0
    %3750 = vmatpush1.msra.mxu0 0.0
    %3751 = vmatprep.subr.mxu0 0.0
    %3752 = vmatpush1.msra.mxu0 0.0
    %3753 = vmatprep.mubr.f32.mxu0 0.0
    %3754 = vmatmul.mubr.f32.gmra.mrb[0].mxu0 %v3687
    %v3755 = vpop.f32.mrb[0].mxu0
    %v3756 = vadd.f32 0.0, %v3755
    %v3757 = vpop.f32.mrb[0].mxu0
    %3758 = vdwg.mxu0
    %v3760 = vsel %vm2788, %v3425, 0
    %3762 = vmatprep.subr.mxu0 0.0
    %3763 = vmatpush1.msra.mxu0 %v2992
    %3764 = vmatprep.subr.mxu0 0.0
    %3765 = vmatpush1.msra.mxu0 0.0
    %3766 = vmatprep.subr.mxu0 0.0
    %3767 = vmatpush1.msra.mxu0 0.0
    %3768 = vmatprep.subr.mxu0 0.0
    %3769 = vmatpush1.msra.mxu0 0.0
    %3770 = vmatprep.subr.mxu0 0.0
    %3771 = vmatpush1.msra.mxu0 0.0
    %3772 = vmatprep.subr.mxu0 0.0
    %3773 = vmatpush1.msra.mxu0 0.0
    %3774 = vmatprep.subr.mxu0 0.0
    %3775 = vmatpush1.msra.mxu0 0.0
    %3776 = vmatprep.subr.mxu0 0.0
    %3777 = vmatpush1.msra.mxu0 0.0
    %3778 = vmatprep.subr.mxu0 0.0
    %3779 = vmatpush1.msra.mxu0 0.0
    %3780 = vmatprep.subr.mxu0 0.0
    %3781 = vmatpush1.msra.mxu0 0.0
    %3782 = vmatprep.subr.mxu0 0.0
    %3783 = vmatpush1.msra.mxu0 0.0
    %3784 = vmatprep.subr.mxu0 0.0
    %3785 = vmatpush1.msra.mxu0 0.0
    %3786 = vmatprep.subr.mxu0 0.0
    %3787 = vmatpush1.msra.mxu0 0.0
    %3788 = vmatprep.subr.mxu0 0.0
    %3789 = vmatpush1.msra.mxu0 0.0
    %3790 = vmatprep.subr.mxu0 0.0
    %3791 = vmatpush1.msra.mxu0 0.0
    %3792 = vmatprep.subr.mxu0 0.0
    %3793 = vmatpush1.msra.mxu0 0.0
    %3794 = vmatprep.subr.mxu0 0.0
    %3795 = vmatpush1.msra.mxu0 0.0
    %3796 = vmatprep.subr.mxu0 0.0
    %3797 = vmatpush1.msra.mxu0 0.0
    %3798 = vmatprep.subr.mxu0 0.0
    %3799 = vmatpush1.msra.mxu0 0.0
    %3800 = vmatprep.subr.mxu0 0.0
    %3801 = vmatpush1.msra.mxu0 0.0
    %3802 = vmatprep.subr.mxu0 0.0
    %3803 = vmatpush1.msra.mxu0 0.0
    %3804 = vmatprep.subr.mxu0 0.0
    %3805 = vmatpush1.msra.mxu0 0.0
    %3806 = vmatprep.subr.mxu0 0.0
    %3807 = vmatpush1.msra.mxu0 0.0
    %3808 = vmatprep.subr.mxu0 0.0
    %3809 = vmatpush1.msra.mxu0 0.0
    %3810 = vmatprep.subr.mxu0 0.0
    %3811 = vmatpush1.msra.mxu0 0.0
    %3812 = vmatprep.subr.mxu0 0.0
    %3813 = vmatpush1.msra.mxu0 0.0
    %3814 = vmatprep.subr.mxu0 0.0
    %3815 = vmatpush1.msra.mxu0 0.0
    %3816 = vmatprep.subr.mxu0 0.0
    %3817 = vmatpush1.msra.mxu0 0.0
    %3818 = vmatprep.subr.mxu0 0.0
    %3819 = vmatpush1.msra.mxu0 0.0
    %3820 = vmatprep.subr.mxu0 0.0
    %3821 = vmatpush1.msra.mxu0 0.0
    %3822 = vmatprep.subr.mxu0 0.0
    %3823 = vmatpush1.msra.mxu0 0.0
    %3824 = vmatprep.subr.mxu0 0.0
    %3825 = vmatpush1.msra.mxu0 0.0
    %3826 = vmatprep.mubr.f32.mxu0 0.0
    %3827 = vmatmul.mubr.f32.gmra.mrb[0].mxu0 %v3760
    %v3828 = vpop.f32.mrb[0].mxu0
    %v3829 = vadd.f32 %v3756, %v3828
    %v3830 = vpop.f32.mrb[0].mxu0
    %3831 = vdwg.mxu0
    %v3832 = vmul.f32 %v3829, %v3681
    %v3833 = vsel %vm2899, %v3832, 0.0
    %3834 = vadd.xlane.f32.xlu0 %v3833
    %v3835 = vpop.xlane.xlu0 %3834
    %v3836 = vmul.f32 %v345, %v3835
    %3838 = vrot.lane.b32.xlu0 %v3836, 125
    %v3839 = vpop.permute.xlu0 %3838
    %v3841 = vadd.f32 %v3585, %v3839
    %3842 = vset.pattern.permute.xlu0 4
    %3843 = vperm.xlu0 %3842, %v3070
    %v3844 = vpop.permute.xlu0 %3843
    %vm3845 = vcmp.eq.s32.totalorder %v3844, 1
    %v3846 = vsel %vm3845, %v3681, %v3590
    %v3847 = vsel %vm2899, %v3675, -inf
    %3848 = vmax.xlane.f32.xlu0 %v3847
    %v3849 = vpop.xlane.xlu0 %3848
    %v3850 = vsub.f32 %v3675, %v3849
    %v3851 = vmul.f32 %v3850, 1.442695
    %v3852 = vpow.pop %v3851
    %v3854 = vsel %vm2788, %v3852, 0
    %3856 = vmatprep.subr.mxu0 0.0
    %3857 = vmatpush1.msra.mxu0 %v3086
    %3858 = vmatprep.subr.mxu0 0.0
    %3859 = vmatpush1.msra.mxu0 0.0
    %3860 = vmatprep.subr.mxu0 0.0
    %3861 = vmatpush1.msra.mxu0 0.0
    %3862 = vmatprep.subr.mxu0 0.0
    %3863 = vmatpush1.msra.mxu0 0.0
    %3864 = vmatprep.subr.mxu0 0.0
    %3865 = vmatpush1.msra.mxu0 0.0
    %3866 = vmatprep.subr.mxu0 0.0
    %3867 = vmatpush1.msra.mxu0 0.0
    %3868 = vmatprep.subr.mxu0 0.0
    %3869 = vmatpush1.msra.mxu0 0.0
    %3870 = vmatprep.subr.mxu0 0.0
    %3871 = vmatpush1.msra.mxu0 0.0
    %3872 = vmatprep.subr.mxu0 0.0
    %3873 = vmatpush1.msra.mxu0 0.0
    %3874 = vmatprep.subr.mxu0 0.0
    %3875 = vmatpush1.msra.mxu0 0.0
    %3876 = vmatprep.subr.mxu0 0.0
    %3877 = vmatpush1.msra.mxu0 0.0
    %3878 = vmatprep.subr.mxu0 0.0
    %3879 = vmatpush1.msra.mxu0 0.0
    %3880 = vmatprep.subr.mxu0 0.0
    %3881 = vmatpush1.msra.mxu0 0.0
    %3882 = vmatprep.subr.mxu0 0.0
    %3883 = vmatpush1.msra.mxu0 0.0
    %3884 = vmatprep.subr.mxu0 0.0
    %3885 = vmatpush1.msra.mxu0 0.0
    %3886 = vmatprep.subr.mxu0 0.0
    %3887 = vmatpush1.msra.mxu0 0.0
    %3888 = vmatprep.subr.mxu0 0.0
    %3889 = vmatpush1.msra.mxu0 0.0
    %3890 = vmatprep.subr.mxu0 0.0
    %3891 = vmatpush1.msra.mxu0 0.0
    %3892 = vmatprep.subr.mxu0 0.0
    %3893 = vmatpush1.msra.mxu0 0.0
    %3894 = vmatprep.subr.mxu0 0.0
    %3895 = vmatpush1.msra.mxu0 0.0
    %3896 = vmatprep.subr.mxu0 0.0
    %3897 = vmatpush1.msra.mxu0 0.0
    %3898 = vmatprep.subr.mxu0 0.0
    %3899 = vmatpush1.msra.mxu0 0.0
    %3900 = vmatprep.subr.mxu0 0.0
    %3901 = vmatpush1.msra.mxu0 0.0
    %3902 = vmatprep.subr.mxu0 0.0
    %3903 = vmatpush1.msra.mxu0 0.0
    %3904 = vmatprep.subr.mxu0 0.0
    %3905 = vmatpush1.msra.mxu0 0.0
    %3906 = vmatprep.subr.mxu0 0.0
    %3907 = vmatpush1.msra.mxu0 0.0
    %3908 = vmatprep.subr.mxu0 0.0
    %3909 = vmatpush1.msra.mxu0 0.0
    %3910 = vmatprep.subr.mxu0 0.0
    %3911 = vmatpush1.msra.mxu0 0.0
    %3912 = vmatprep.subr.mxu0 0.0
    %3913 = vmatpush1.msra.mxu0 0.0
    %3914 = vmatprep.subr.mxu0 0.0
    %3915 = vmatpush1.msra.mxu0 0.0
    %3916 = vmatprep.subr.mxu0 0.0
    %3917 = vmatpush1.msra.mxu0 0.0
    %3918 = vmatprep.subr.mxu0 0.0
    %3919 = vmatpush1.msra.mxu0 0.0
    %3920 = vmatprep.mubr.f32.mxu0 0.0
    %3921 = vmatmul.mubr.f32.gmra.mrb[0].mxu0 %v3854
    %v3922 = vpop.f32.mrb[0].mxu0
    %v3923 = vadd.f32 0.0, %v3922
    %v3924 = vpop.f32.mrb[0].mxu0
    %3925 = vdwg.mxu0
    %v3926 = vadd.f32 %v3756, %v3849
    %v3927 = vadd.f32 %v3926, %v2805
    %v3928 = vlog2.pop %v3923
    %v3929 = vmul.f32 %v3928, 0.6931472
    %v3930 = vadd.f32 %v3927, %v3929
    %v3931 = vsel %vm3845, %v3930, %v3675
    %3932 = vset.pattern.permute.xlu0 5
    %3933 = vperm.xlu0 %3932, %v2794
    %v3934 = vpop.permute.xlu0 %3933
    %vm3935 = vcmp.eq.s32.totalorder %v91, %v3934
    %v3936 = vsel %vm3935, 1, 0
    %v3937 = vcvt.s32.f32 %v3936
    %v3938 = vadd.s32 %v2797, 5
    %vm3939 = vcmp.eq.s32.totalorder %v91, %v3938
    %v3940 = vsel %vm3939, 1, 0
    %v3941 = vcvt.s32.f32 %v3940
    %v3943 = vsel %vm443, %v3941, 0
    %3945 = vmatprep.subr.mxu0 0.0
    %3946 = vmatpush1.msra.mxu0 %v2780
    %3947 = vmatprep.subr.mxu0 0.0
    %3948 = vmatpush1.msra.mxu0 %v2785
    %3949 = vmatprep.subr.mxu0 0.0
    %3950 = vmatpush1.msra.mxu0 0.0
    %3951 = vmatprep.subr.mxu0 0.0
    %3952 = vmatpush1.msra.mxu0 0.0
    %3953 = vmatprep.subr.mxu0 0.0
    %3954 = vmatpush1.msra.mxu0 0.0
    %3955 = vmatprep.subr.mxu0 0.0
    %3956 = vmatpush1.msra.mxu0 0.0
    %3957 = vmatprep.subr.mxu0 0.0
    %3958 = vmatpush1.msra.mxu0 0.0
    %3959 = vmatprep.subr.mxu0 0.0
    %3960 = vmatpush1.msra.mxu0 0.0
    %3961 = vmatprep.subr.mxu0 0.0
    %3962 = vmatpush1.msra.mxu0 0.0
    %3963 = vmatprep.subr.mxu0 0.0
    %3964 = vmatpush1.msra.mxu0 0.0
    %3965 = vmatprep.subr.mxu0 0.0
    %3966 = vmatpush1.msra.mxu0 0.0
    %3967 = vmatprep.subr.mxu0 0.0
    %3968 = vmatpush1.msra.mxu0 0.0
    %3969 = vmatprep.subr.mxu0 0.0
    %3970 = vmatpush1.msra.mxu0 0.0
    %3971 = vmatprep.subr.mxu0 0.0
    %3972 = vmatpush1.msra.mxu0 0.0
    %3973 = vmatprep.subr.mxu0 0.0
    %3974 = vmatpush1.msra.mxu0 0.0
    %3975 = vmatprep.subr.mxu0 0.0
    %3976 = vmatpush1.msra.mxu0 0.0
    %3977 = vmatprep.subr.mxu0 0.0
    %3978 = vmatpush1.msra.mxu0 0.0
    %3979 = vmatprep.subr.mxu0 0.0
    %3980 = vmatpush1.msra.mxu0 0.0
    %3981 = vmatprep.subr.mxu0 0.0
    %3982 = vmatpush1.msra.mxu0 0.0
    %3983 = vmatprep.subr.mxu0 0.0
    %3984 = vmatpush1.msra.mxu0 0.0
    %3985 = vmatprep.subr.mxu0 0.0
    %3986 = vmatpush1.msra.mxu0 0.0
    %3987 = vmatprep.subr.mxu0 0.0
    %3988 = vmatpush1.msra.mxu0 0.0
    %3989 = vmatprep.subr.mxu0 0.0
    %3990 = vmatpush1.msra.mxu0 0.0
    %3991 = vmatprep.subr.mxu0 0.0
    %3992 = vmatpush1.msra.mxu0 0.0
    %3993 = vmatprep.subr.mxu0 0.0
    %3994 = vmatpush1.msra.mxu0 0.0
    %3995 = vmatprep.subr.mxu0 0.0
    %3996 = vmatpush1.msra.mxu0 0.0
    %3997 = vmatprep.subr.mxu0 0.0
    %3998 = vmatpush1.msra.mxu0 0.0
    %3999 = vmatprep.subr.mxu0 0.0
    %4000 = vmatpush1.msra.mxu0 0.0
    %4001 = vmatprep.subr.mxu0 0.0
    %4002 = vmatpush1.msra.mxu0 0.0
    %4003 = vmatprep.subr.mxu0 0.0
    %4004 = vmatpush1.msra.mxu0 0.0
    %4005 = vmatprep.subr.mxu0 0.0
    %4006 = vmatpush1.msra.mxu0 0.0
    %4007 = vmatprep.subr.mxu0 0.0
    %4008 = vmatpush1.msra.mxu0 0.0
    %4009 = vmatprep.mubr.f32.mxu0 0.0
    %4010 = vmatmul.mubr.f32.gmra.mrb[0].mxu0 %v3943
    %v4011 = vpop.f32.mrb[0].mxu0
    %v4012 = vadd.f32 0.0, %v4011
    %v4013 = vpop.f32.mrb[0].mxu0
    %4014 = vdwg.mxu0
    %v4016 = vsel %vm2788, %v3681, 0
    %4018 = vmatprep.subr.mxu0 0.0
    %4019 = vmatpush1.msra.mxu0 %v2992
    %4020 = vmatprep.subr.mxu0 0.0
    %4021 = vmatpush1.msra.mxu0 0.0
    %4022 = vmatprep.subr.mxu0 0.0
    %4023 = vmatpush1.msra.mxu0 0.0
    %4024 = vmatprep.subr.mxu0 0.0
    %4025 = vmatpush1.msra.mxu0 0.0
    %4026 = vmatprep.subr.mxu0 0.0
    %4027 = vmatpush1.msra.mxu0 0.0
    %4028 = vmatprep.subr.mxu0 0.0
    %4029 = vmatpush1.msra.mxu0 0.0
    %4030 = vmatprep.subr.mxu0 0.0
    %4031 = vmatpush1.msra.mxu0 0.0
    %4032 = vmatprep.subr.mxu0 0.0
    %4033 = vmatpush1.msra.mxu0 0.0
    %4034 = vmatprep.subr.mxu0 0.0
    %4035 = vmatpush1.msra.mxu0 0.0
    %4036 = vmatprep.subr.mxu0 0.0
    %4037 = vmatpush1.msra.mxu0 0.0
    %4038 = vmatprep.subr.mxu0 0.0
    %4039 = vmatpush1.msra.mxu0 0.0
    %4040 = vmatprep.subr.mxu0 0.0
    %4041 = vmatpush1.msra.mxu0 0.0
    %4042 = vmatprep.subr.mxu0 0.0
    %4043 = vmatpush1.msra.mxu0 0.0
    %4044 = vmatprep.subr.mxu0 0.0
    %4045 = vmatpush1.msra.mxu0 0.0
    %4046 = vmatprep.subr.mxu0 0.0
    %4047 = vmatpush1.msra.mxu0 0.0
    %4048 = vmatprep.subr.mxu0 0.0
    %4049 = vmatpush1.msra.mxu0 0.0
    %4050 = vmatprep.subr.mxu0 0.0
    %4051 = vmatpush1.msra.mxu0 0.0
    %4052 = vmatprep.subr.mxu0 0.0
    %4053 = vmatpush1.msra.mxu0 0.0
    %4054 = vmatprep.subr.mxu0 0.0
    %4055 = vmatpush1.msra.mxu0 0.0
    %4056 = vmatprep.subr.mxu0 0.0
    %4057 = vmatpush1.msra.mxu0 0.0
    %4058 = vmatprep.subr.mxu0 0.0
    %4059 = vmatpush1.msra.mxu0 0.0
    %4060 = vmatprep.subr.mxu0 0.0
    %4061 = vmatpush1.msra.mxu0 0.0
    %4062 = vmatprep.subr.mxu0 0.0
    %4063 = vmatpush1.msra.mxu0 0.0
    %4064 = vmatprep.subr.mxu0 0.0
    %4065 = vmatpush1.msra.mxu0 0.0
    %4066 = vmatprep.subr.mxu0 0.0
    %4067 = vmatpush1.msra.mxu0 0.0
    %4068 = vmatprep.subr.mxu0 0.0
    %4069 = vmatpush1.msra.mxu0 0.0
    %4070 = vmatprep.subr.mxu0 0.0
    %4071 = vmatpush1.msra.mxu0 0.0
    %4072 = vmatprep.subr.mxu0 0.0
    %4073 = vmatpush1.msra.mxu0 0.0
    %4074 = vmatprep.subr.mxu0 0.0
    %4075 = vmatpush1.msra.mxu0 0.0
    %4076 = vmatprep.subr.mxu0 0.0
    %4077 = vmatpush1.msra.mxu0 0.0
    %4078 = vmatprep.subr.mxu0 0.0
    %4079 = vmatpush1.msra.mxu0 0.0
    %4080 = vmatprep.subr.mxu0 0.0
    %4081 = vmatpush1.msra.mxu0 0.0
    %4082 = vmatprep.mubr.f32.mxu0 0.0
    %4083 = vmatmul.mubr.f32.gmra.mrb[0].mxu0 %v4016
    %v4084 = vpop.f32.mrb[0].mxu0
    %v4085 = vadd.f32 %v4012, %v4084
    %v4086 = vpop.f32.mrb[0].mxu0
    %4087 = vdwg.mxu0
    %v4088 = vmul.f32 %v4085, %v3937
    %v4089 = vsel %vm2899, %v4088, 0.0
    %4090 = vadd.xlane.f32.xlu0 %v4089
    %v4091 = vpop.xlane.xlu0 %4090
    %v4092 = vmul.f32 %v345, %v4091
    %4094 = vrot.lane.b32.xlu0 %v4092, 124
    %v4095 = vpop.permute.xlu0 %4094
    %v4097 = vadd.f32 %v3841, %v4095
    %4098 = vset.pattern.permute.xlu0 5
    %4099 = vperm.xlu0 %4098, %v3070
    %v4100 = vpop.permute.xlu0 %4099
    %vm4101 = vcmp.eq.s32.totalorder %v4100, 1
    %v4102 = vsel %vm4101, %v3937, %v3846
    %v4103 = vsel %vm2899, %v3931, -inf
    %4104 = vmax.xlane.f32.xlu0 %v4103
    %v4105 = vpop.xlane.xlu0 %4104
    %v4106 = vsub.f32 %v3931, %v4105
    %v4107 = vmul.f32 %v4106, 1.442695
    %v4108 = vpow.pop %v4107
    %v4110 = vsel %vm2788, %v4108, 0
    %4112 = vmatprep.subr.mxu0 0.0
    %4113 = vmatpush1.msra.mxu0 %v3086
    %4114 = vmatprep.subr.mxu0 0.0
    %4115 = vmatpush1.msra.mxu0 0.0
    %4116 = vmatprep.subr.mxu0 0.0
    %4117 = vmatpush1.msra.mxu0 0.0
    %4118 = vmatprep.subr.mxu0 0.0
    %4119 = vmatpush1.msra.mxu0 0.0
    %4120 = vmatprep.subr.mxu0 0.0
    %4121 = vmatpush1.msra.mxu0 0.0
    %4122 = vmatprep.subr.mxu0 0.0
    %4123 = vmatpush1.msra.mxu0 0.0
    %4124 = vmatprep.subr.mxu0 0.0
    %4125 = vmatpush1.msra.mxu0 0.0
    %4126 = vmatprep.subr.mxu0 0.0
    %4127 = vmatpush1.msra.mxu0 0.0
    %4128 = vmatprep.subr.mxu0 0.0
    %4129 = vmatpush1.msra.mxu0 0.0
    %4130 = vmatprep.subr.mxu0 0.0
    %4131 = vmatpush1.msra.mxu0 0.0
    %4132 = vmatprep.subr.mxu0 0.0
    %4133 = vmatpush1.msra.mxu0 0.0
    %4134 = vmatprep.subr.mxu0 0.0
    %4135 = vmatpush1.msra.mxu0 0.0
    %4136 = vmatprep.subr.mxu0 0.0
    %4137 = vmatpush1.msra.mxu0 0.0
    %4138 = vmatprep.subr.mxu0 0.0
    %4139 = vmatpush1.msra.mxu0 0.0
    %4140 = vmatprep.subr.mxu0 0.0
    %4141 = vmatpush1.msra.mxu0 0.0
    %4142 = vmatprep.subr.mxu0 0.0
    %4143 = vmatpush1.msra.mxu0 0.0
    %4144 = vmatprep.subr.mxu0 0.0
    %4145 = vmatpush1.msra.mxu0 0.0
    %4146 = vmatprep.subr.mxu0 0.0
    %4147 = vmatpush1.msra.mxu0 0.0
    %4148 = vmatprep.subr.mxu0 0.0
    %4149 = vmatpush1.msra.mxu0 0.0
    %4150 = vmatprep.subr.mxu0 0.0
    %4151 = vmatpush1.msra.mxu0 0.0
    %4152 = vmatprep.subr.mxu0 0.0
    %4153 = vmatpush1.msra.mxu0 0.0
    %4154 = vmatprep.subr.mxu0 0.0
    %4155 = vmatpush1.msra.mxu0 0.0
    %4156 = vmatprep.subr.mxu0 0.0
    %4157 = vmatpush1.msra.mxu0 0.0
    %4158 = vmatprep.subr.mxu0 0.0
    %4159 = vmatpush1.msra.mxu0 0.0
    %4160 = vmatprep.subr.mxu0 0.0
    %4161 = vmatpush1.msra.mxu0 0.0
    %4162 = vmatprep.subr.mxu0 0.0
    %4163 = vmatpush1.msra.mxu0 0.0
    %4164 = vmatprep.subr.mxu0 0.0
    %4165 = vmatpush1.msra.mxu0 0.0
    %4166 = vmatprep.subr.mxu0 0.0
    %4167 = vmatpush1.msra.mxu0 0.0
    %4168 = vmatprep.subr.mxu0 0.0
    %4169 = vmatpush1.msra.mxu0 0.0
    %4170 = vmatprep.subr.mxu0 0.0
    %4171 = vmatpush1.msra.mxu0 0.0
    %4172 = vmatprep.subr.mxu0 0.0
    %4173 = vmatpush1.msra.mxu0 0.0
    %4174 = vmatprep.subr.mxu0 0.0
    %4175 = vmatpush1.msra.mxu0 0.0
    %4176 = vmatprep.mubr.f32.mxu0 0.0
    %4177 = vmatmul.mubr.f32.gmra.mrb[0].mxu0 %v4110
    %v4178 = vpop.f32.mrb[0].mxu0
    %v4179 = vadd.f32 0.0, %v4178
    %v4180 = vpop.f32.mrb[0].mxu0
    %4181 = vdwg.mxu0
    %v4182 = vadd.f32 %v4012, %v4105
    %v4183 = vadd.f32 %v4182, %v2805
    %v4184 = vlog2.pop %v4179
    %v4185 = vmul.f32 %v4184, 0.6931472
    %v4186 = vadd.f32 %v4183, %v4185
    %v4187 = vsel %vm4101, %v4186, %v3931
    %4188 = vset.pattern.permute.xlu0 6
    %4189 = vperm.xlu0 %4188, %v2794
    %v4190 = vpop.permute.xlu0 %4189
    %vm4191 = vcmp.eq.s32.totalorder %v91, %v4190
    %v4192 = vsel %vm4191, 1, 0
    %v4193 = vcvt.s32.f32 %v4192
    %v4194 = vadd.s32 %v2797, 6
    %vm4195 = vcmp.eq.s32.totalorder %v91, %v4194
    %v4196 = vsel %vm4195, 1, 0
    %v4197 = vcvt.s32.f32 %v4196
    %v4199 = vsel %vm443, %v4197, 0
    %4201 = vmatprep.subr.mxu0 0.0
    %4202 = vmatpush1.msra.mxu0 %v2780
    %4203 = vmatprep.subr.mxu0 0.0
    %4204 = vmatpush1.msra.mxu0 %v2785
    %4205 = vmatprep.subr.mxu0 0.0
    %4206 = vmatpush1.msra.mxu0 0.0
    %4207 = vmatprep.subr.mxu0 0.0
    %4208 = vmatpush1.msra.mxu0 0.0
    %4209 = vmatprep.subr.mxu0 0.0
    %4210 = vmatpush1.msra.mxu0 0.0
    %4211 = vmatprep.subr.mxu0 0.0
    %4212 = vmatpush1.msra.mxu0 0.0
    %4213 = vmatprep.subr.mxu0 0.0
    %4214 = vmatpush1.msra.mxu0 0.0
    %4215 = vmatprep.subr.mxu0 0.0
    %4216 = vmatpush1.msra.mxu0 0.0
    %4217 = vmatprep.subr.mxu0 0.0
    %4218 = vmatpush1.msra.mxu0 0.0
    %4219 = vmatprep.subr.mxu0 0.0
    %4220 = vmatpush1.msra.mxu0 0.0
    %4221 = vmatprep.subr.mxu0 0.0
    %4222 = vmatpush1.msra.mxu0 0.0
    %4223 = vmatprep.subr.mxu0 0.0
    %4224 = vmatpush1.msra.mxu0 0.0
    %4225 = vmatprep.subr.mxu0 0.0
    %4226 = vmatpush1.msra.mxu0 0.0
    %4227 = vmatprep.subr.mxu0 0.0
    %4228 = vmatpush1.msra.mxu0 0.0
    %4229 = vmatprep.subr.mxu0 0.0
    %4230 = vmatpush1.msra.mxu0 0.0
    %4231 = vmatprep.subr.mxu0 0.0
    %4232 = vmatpush1.msra.mxu0 0.0
    %4233 = vmatprep.subr.mxu0 0.0
    %4234 = vmatpush1.msra.mxu0 0.0
    %4235 = vmatprep.subr.mxu0 0.0
    %4236 = vmatpush1.msra.mxu0 0.0
    %4237 = vmatprep.subr.mxu0 0.0
    %4238 = vmatpush1.msra.mxu0 0.0
    %4239 = vmatprep.subr.mxu0 0.0
    %4240 = vmatpush1.msra.mxu0 0.0
    %4241 = vmatprep.subr.mxu0 0.0
    %4242 = vmatpush1.msra.mxu0 0.0
    %4243 = vmatprep.subr.mxu0 0.0
    %4244 = vmatpush1.msra.mxu0 0.0
    %4245 = vmatprep.subr.mxu0 0.0
    %4246 = vmatpush1.msra.mxu0 0.0
    %4247 = vmatprep.subr.mxu0 0.0
    %4248 = vmatpush1.msra.mxu0 0.0
    %4249 = vmatprep.subr.mxu0 0.0
    %4250 = vmatpush1.msra.mxu0 0.0
    %4251 = vmatprep.subr.mxu0 0.0
    %4252 = vmatpush1.msra.mxu0 0.0
    %4253 = vmatprep.subr.mxu0 0.0
    %4254 = vmatpush1.msra.mxu0 0.0
    %4255 = vmatprep.subr.mxu0 0.0
    %4256 = vmatpush1.msra.mxu0 0.0
    %4257 = vmatprep.subr.mxu0 0.0
    %4258 = vmatpush1.msra.mxu0 0.0
    %4259 = vmatprep.subr.mxu0 0.0
    %4260 = vmatpush1.msra.mxu0 0.0
    %4261 = vmatprep.subr.mxu0 0.0
    %4262 = vmatpush1.msra.mxu0 0.0
    %4263 = vmatprep.subr.mxu0 0.0
    %4264 = vmatpush1.msra.mxu0 0.0
    %4265 = vmatprep.mubr.f32.mxu0 0.0
    %4266 = vmatmul.mubr.f32.gmra.mrb[0].mxu0 %v4199
    %v4267 = vpop.f32.mrb[0].mxu0
    %v4268 = vadd.f32 0.0, %v4267
    %v4269 = vpop.f32.mrb[0].mxu0
    %4270 = vdwg.mxu0
    %v4272 = vsel %vm2788, %v3937, 0
    %4274 = vmatprep.subr.mxu0 0.0
    %4275 = vmatpush1.msra.mxu0 %v2992
    %4276 = vmatprep.subr.mxu0 0.0
    %4277 = vmatpush1.msra.mxu0 0.0
    %4278 = vmatprep.subr.mxu0 0.0
    %4279 = vmatpush1.msra.mxu0 0.0
    %4280 = vmatprep.subr.mxu0 0.0
    %4281 = vmatpush1.msra.mxu0 0.0
    %4282 = vmatprep.subr.mxu0 0.0
    %4283 = vmatpush1.msra.mxu0 0.0
    %4284 = vmatprep.subr.mxu0 0.0
    %4285 = vmatpush1.msra.mxu0 0.0
    %4286 = vmatprep.subr.mxu0 0.0
    %4287 = vmatpush1.msra.mxu0 0.0
    %4288 = vmatprep.subr.mxu0 0.0
    %4289 = vmatpush1.msra.mxu0 0.0
    %4290 = vmatprep.subr.mxu0 0.0
    %4291 = vmatpush1.msra.mxu0 0.0
    %4292 = vmatprep.subr.mxu0 0.0
    %4293 = vmatpush1.msra.mxu0 0.0
    %4294 = vmatprep.subr.mxu0 0.0
    %4295 = vmatpush1.msra.mxu0 0.0
    %4296 = vmatprep.subr.mxu0 0.0
    %4297 = vmatpush1.msra.mxu0 0.0
    %4298 = vmatprep.subr.mxu0 0.0
    %4299 = vmatpush1.msra.mxu0 0.0
    %4300 = vmatprep.subr.mxu0 0.0
    %4301 = vmatpush1.msra.mxu0 0.0
    %4302 = vmatprep.subr.mxu0 0.0
    %4303 = vmatpush1.msra.mxu0 0.0
    %4304 = vmatprep.subr.mxu0 0.0
    %4305 = vmatpush1.msra.mxu0 0.0
    %4306 = vmatprep.subr.mxu0 0.0
    %4307 = vmatpush1.msra.mxu0 0.0
    %4308 = vmatprep.subr.mxu0 0.0
    %4309 = vmatpush1.msra.mxu0 0.0
    %4310 = vmatprep.subr.mxu0 0.0
    %4311 = vmatpush1.msra.mxu0 0.0
    %4312 = vmatprep.subr.mxu0 0.0
    %4313 = vmatpush1.msra.mxu0 0.0
    %4314 = vmatprep.subr.mxu0 0.0
    %4315 = vmatpush1.msra.mxu0 0.0
    %4316 = vmatprep.subr.mxu0 0.0
    %4317 = vmatpush1.msra.mxu0 0.0
    %4318 = vmatprep.subr.mxu0 0.0
    %4319 = vmatpush1.msra.mxu0 0.0
    %4320 = vmatprep.subr.mxu0 0.0
    %4321 = vmatpush1.msra.mxu0 0.0
    %4322 = vmatprep.subr.mxu0 0.0
    %4323 = vmatpush1.msra.mxu0 0.0
    %4324 = vmatprep.subr.mxu0 0.0
    %4325 = vmatpush1.msra.mxu0 0.0
    %4326 = vmatprep.subr.mxu0 0.0
    %4327 = vmatpush1.msra.mxu0 0.0
    %4328 = vmatprep.subr.mxu0 0.0
    %4329 = vmatpush1.msra.mxu0 0.0
    %4330 = vmatprep.subr.mxu0 0.0
    %4331 = vmatpush1.msra.mxu0 0.0
    %4332 = vmatprep.subr.mxu0 0.0
    %4333 = vmatpush1.msra.mxu0 0.0
    %4334 = vmatprep.subr.mxu0 0.0
    %4335 = vmatpush1.msra.mxu0 0.0
    %4336 = vmatprep.subr.mxu0 0.0
    %4337 = vmatpush1.msra.mxu0 0.0
    %4338 = vmatprep.mubr.f32.mxu0 0.0
    %4339 = vmatmul.mubr.f32.gmra.mrb[0].mxu0 %v4272
    %v4340 = vpop.f32.mrb[0].mxu0
    %v4341 = vadd.f32 %v4268, %v4340
    %v4342 = vpop.f32.mrb[0].mxu0
    %4343 = vdwg.mxu0
    %v4344 = vmul.f32 %v4341, %v4193
    %v4345 = vsel %vm2899, %v4344, 0.0
    %4346 = vadd.xlane.f32.xlu0 %v4345
    %v4347 = vpop.xlane.xlu0 %4346
    %v4348 = vmul.f32 %v345, %v4347
    %4350 = vrot.lane.b32.xlu0 %v4348, 123
    %v4351 = vpop.permute.xlu0 %4350
    %v4353 = vadd.f32 %v4097, %v4351
    %4354 = vset.pattern.permute.xlu0 6
    %4355 = vperm.xlu0 %4354, %v3070
    %v4356 = vpop.permute.xlu0 %4355
    %vm4357 = vcmp.eq.s32.totalorder %v4356, 1
    %v4358 = vsel %vm4357, %v4193, %v4102
    %v4359 = vsel %vm2899, %v4187, -inf
    %4360 = vmax.xlane.f32.xlu0 %v4359
    %v4361 = vpop.xlane.xlu0 %4360
    %v4362 = vsub.f32 %v4187, %v4361
    %v4363 = vmul.f32 %v4362, 1.442695
    %v4364 = vpow.pop %v4363
    %v4366 = vsel %vm2788, %v4364, 0
    %4368 = vmatprep.subr.mxu0 0.0
    %4369 = vmatpush1.msra.mxu0 %v3086
    %4370 = vmatprep.subr.mxu0 0.0
    %4371 = vmatpush1.msra.mxu0 0.0
    %4372 = vmatprep.subr.mxu0 0.0
    %4373 = vmatpush1.msra.mxu0 0.0
    %4374 = vmatprep.subr.mxu0 0.0
    %4375 = vmatpush1.msra.mxu0 0.0
    %4376 = vmatprep.subr.mxu0 0.0
    %4377 = vmatpush1.msra.mxu0 0.0
    %4378 = vmatprep.subr.mxu0 0.0
    %4379 = vmatpush1.msra.mxu0 0.0
    %4380 = vmatprep.subr.mxu0 0.0
    %4381 = vmatpush1.msra.mxu0 0.0
    %4382 = vmatprep.subr.mxu0 0.0
    %4383 = vmatpush1.msra.mxu0 0.0
    %4384 = vmatprep.subr.mxu0 0.0
    %4385 = vmatpush1.msra.mxu0 0.0
    %4386 = vmatprep.subr.mxu0 0.0
    %4387 = vmatpush1.msra.mxu0 0.0
    %4388 = vmatprep.subr.mxu0 0.0
    %4389 = vmatpush1.msra.mxu0 0.0
    %4390 = vmatprep.subr.mxu0 0.0
    %4391 = vmatpush1.msra.mxu0 0.0
    %4392 = vmatprep.subr.mxu0 0.0
    %4393 = vmatpush1.msra.mxu0 0.0
    %4394 = vmatprep.subr.mxu0 0.0
    %4395 = vmatpush1.msra.mxu0 0.0
    %4396 = vmatprep.subr.mxu0 0.0
    %4397 = vmatpush1.msra.mxu0 0.0
    %4398 = vmatprep.subr.mxu0 0.0
    %4399 = vmatpush1.msra.mxu0 0.0
    %4400 = vmatprep.subr.mxu0 0.0
    %4401 = vmatpush1.msra.mxu0 0.0
    %4402 = vmatprep.subr.mxu0 0.0
    %4403 = vmatpush1.msra.mxu0 0.0
    %4404 = vmatprep.subr.mxu0 0.0
    %4405 = vmatpush1.msra.mxu0 0.0
    %4406 = vmatprep.subr.mxu0 0.0
    %4407 = vmatpush1.msra.mxu0 0.0
    %4408 = vmatprep.subr.mxu0 0.0
    %4409 = vmatpush1.msra.mxu0 0.0
    %4410 = vmatprep.subr.mxu0 0.0
    %4411 = vmatpush1.msra.mxu0 0.0
    %4412 = vmatprep.subr.mxu0 0.0
    %4413 = vmatpush1.msra.mxu0 0.0
    %4414 = vmatprep.subr.mxu0 0.0
    %4415 = vmatpush1.msra.mxu0 0.0
    %4416 = vmatprep.subr.mxu0 0.0
    %4417 = vmatpush1.msra.mxu0 0.0
    %4418 = vmatprep.subr.mxu0 0.0
    %4419 = vmatpush1.msra.mxu0 0.0
    %4420 = vmatprep.subr.mxu0 0.0
    %4421 = vmatpush1.msra.mxu0 0.0
    %4422 = vmatprep.subr.mxu0 0.0
    %4423 = vmatpush1.msra.mxu0 0.0
    %4424 = vmatprep.subr.mxu0 0.0
    %4425 = vmatpush1.msra.mxu0 0.0
    %4426 = vmatprep.subr.mxu0 0.0
    %4427 = vmatpush1.msra.mxu0 0.0
    %4428 = vmatprep.subr.mxu0 0.0
    %4429 = vmatpush1.msra.mxu0 0.0
    %4430 = vmatprep.subr.mxu0 0.0
    %4431 = vmatpush1.msra.mxu0 0.0
    %4432 = vmatprep.mubr.f32.mxu0 0.0
    %4433 = vmatmul.mubr.f32.gmra.mrb[0].mxu0 %v4366
    %v4434 = vpop.f32.mrb[0].mxu0
    %v4435 = vadd.f32 0.0, %v4434
    %v4436 = vpop.f32.mrb[0].mxu0
    %4437 = vdwg.mxu0
    %v4438 = vadd.f32 %v4268, %v4361
    %v4439 = vadd.f32 %v4438, %v2805
    %v4440 = vlog2.pop %v4435
    %v4441 = vmul.f32 %v4440, 0.6931472
    %v4442 = vadd.f32 %v4439, %v4441
    %v4443 = vsel %vm4357, %v4442, %v4187
    %4444 = vset.pattern.permute.xlu0 7
    %4445 = vperm.xlu0 %4444, %v2794
    %v4446 = vpop.permute.xlu0 %4445
    %vm4447 = vcmp.eq.s32.totalorder %v91, %v4446
    %v4448 = vsel %vm4447, 1, 0
    %v4449 = vcvt.s32.f32 %v4448
    %v4450 = vadd.s32 %v2797, 7
    %vm4451 = vcmp.eq.s32.totalorder %v91, %v4450
    %v4452 = vsel %vm4451, 1, 0
    %v4453 = vcvt.s32.f32 %v4452
    %v4455 = vsel %vm443, %v4453, 0
    %4457 = vmatprep.subr.mxu0 0.0
    %4458 = vmatpush1.msra.mxu0 %v2780
    %4459 = vmatprep.subr.mxu0 0.0
    %4460 = vmatpush1.msra.mxu0 %v2785
    %4461 = vmatprep.subr.mxu0 0.0
    %4462 = vmatpush1.msra.mxu0 0.0
    %4463 = vmatprep.subr.mxu0 0.0
    %4464 = vmatpush1.msra.mxu0 0.0
    %4465 = vmatprep.subr.mxu0 0.0
    %4466 = vmatpush1.msra.mxu0 0.0
    %4467 = vmatprep.subr.mxu0 0.0
    %4468 = vmatpush1.msra.mxu0 0.0
    %4469 = vmatprep.subr.mxu0 0.0
    %4470 = vmatpush1.msra.mxu0 0.0
    %4471 = vmatprep.subr.mxu0 0.0
    %4472 = vmatpush1.msra.mxu0 0.0
    %4473 = vmatprep.subr.mxu0 0.0
    %4474 = vmatpush1.msra.mxu0 0.0
    %4475 = vmatprep.subr.mxu0 0.0
    %4476 = vmatpush1.msra.mxu0 0.0
    %4477 = vmatprep.subr.mxu0 0.0
    %4478 = vmatpush1.msra.mxu0 0.0
    %4479 = vmatprep.subr.mxu0 0.0
    %4480 = vmatpush1.msra.mxu0 0.0
    %4481 = vmatprep.subr.mxu0 0.0
    %4482 = vmatpush1.msra.mxu0 0.0
    %4483 = vmatprep.subr.mxu0 0.0
    %4484 = vmatpush1.msra.mxu0 0.0
    %4485 = vmatprep.subr.mxu0 0.0
    %4486 = vmatpush1.msra.mxu0 0.0
    %4487 = vmatprep.subr.mxu0 0.0
    %4488 = vmatpush1.msra.mxu0 0.0
    %4489 = vmatprep.subr.mxu0 0.0
    %4490 = vmatpush1.msra.mxu0 0.0
    %4491 = vmatprep.subr.mxu0 0.0
    %4492 = vmatpush1.msra.mxu0 0.0
    %4493 = vmatprep.subr.mxu0 0.0
    %4494 = vmatpush1.msra.mxu0 0.0
    %4495 = vmatprep.subr.mxu0 0.0
    %4496 = vmatpush1.msra.mxu0 0.0
    %4497 = vmatprep.subr.mxu0 0.0
    %4498 = vmatpush1.msra.mxu0 0.0
    %4499 = vmatprep.subr.mxu0 0.0
    %4500 = vmatpush1.msra.mxu0 0.0
    %4501 = vmatprep.subr.mxu0 0.0
    %4502 = vmatpush1.msra.mxu0 0.0
    %4503 = vmatprep.subr.mxu0 0.0
    %4504 = vmatpush1.msra.mxu0 0.0
    %4505 = vmatprep.subr.mxu0 0.0
    %4506 = vmatpush1.msra.mxu0 0.0
    %4507 = vmatprep.subr.mxu0 0.0
    %4508 = vmatpush1.msra.mxu0 0.0
    %4509 = vmatprep.subr.mxu0 0.0
    %4510 = vmatpush1.msra.mxu0 0.0
    %4511 = vmatprep.subr.mxu0 0.0
    %4512 = vmatpush1.msra.mxu0 0.0
    %4513 = vmatprep.subr.mxu0 0.0
    %4514 = vmatpush1.msra.mxu0 0.0
    %4515 = vmatprep.subr.mxu0 0.0
    %4516 = vmatpush1.msra.mxu0 0.0
    %4517 = vmatprep.subr.mxu0 0.0
    %4518 = vmatpush1.msra.mxu0 0.0
    %4519 = vmatprep.subr.mxu0 0.0
    %4520 = vmatpush1.msra.mxu0 0.0
    %4521 = vmatprep.mubr.f32.mxu0 0.0
    %4522 = vmatmul.mubr.f32.gmra.mrb[0].mxu0 %v4455
    %v4523 = vpop.f32.mrb[0].mxu0
    %v4524 = vadd.f32 0.0, %v4523
    %v4525 = vpop.f32.mrb[0].mxu0
    %4526 = vdwg.mxu0
    %v4528 = vsel %vm2788, %v4193, 0
    %4530 = vmatprep.subr.mxu0 0.0
    %4531 = vmatpush1.msra.mxu0 %v2992
    %4532 = vmatprep.subr.mxu0 0.0
    %4533 = vmatpush1.msra.mxu0 0.0
    %4534 = vmatprep.subr.mxu0 0.0
    %4535 = vmatpush1.msra.mxu0 0.0
    %4536 = vmatprep.subr.mxu0 0.0
    %4537 = vmatpush1.msra.mxu0 0.0
    %4538 = vmatprep.subr.mxu0 0.0
    %4539 = vmatpush1.msra.mxu0 0.0
    %4540 = vmatprep.subr.mxu0 0.0
    %4541 = vmatpush1.msra.mxu0 0.0
    %4542 = vmatprep.subr.mxu0 0.0
    %4543 = vmatpush1.msra.mxu0 0.0
    %4544 = vmatprep.subr.mxu0 0.0
    %4545 = vmatpush1.msra.mxu0 0.0
    %4546 = vmatprep.subr.mxu0 0.0
    %4547 = vmatpush1.msra.mxu0 0.0
    %4548 = vmatprep.subr.mxu0 0.0
    %4549 = vmatpush1.msra.mxu0 0.0
    %4550 = vmatprep.subr.mxu0 0.0
    %4551 = vmatpush1.msra.mxu0 0.0
    %4552 = vmatprep.subr.mxu0 0.0
    %4553 = vmatpush1.msra.mxu0 0.0
    %4554 = vmatprep.subr.mxu0 0.0
    %4555 = vmatpush1.msra.mxu0 0.0
    %4556 = vmatprep.subr.mxu0 0.0
    %4557 = vmatpush1.msra.mxu0 0.0
    %4558 = vmatprep.subr.mxu0 0.0
    %4559 = vmatpush1.msra.mxu0 0.0
    %4560 = vmatprep.subr.mxu0 0.0
    %4561 = vmatpush1.msra.mxu0 0.0
    %4562 = vmatprep.subr.mxu0 0.0
    %4563 = vmatpush1.msra.mxu0 0.0
    %4564 = vmatprep.subr.mxu0 0.0
    %4565 = vmatpush1.msra.mxu0 0.0
    %4566 = vmatprep.subr.mxu0 0.0
    %4567 = vmatpush1.msra.mxu0 0.0
    %4568 = vmatprep.subr.mxu0 0.0
    %4569 = vmatpush1.msra.mxu0 0.0
    %4570 = vmatprep.subr.mxu0 0.0
    %4571 = vmatpush1.msra.mxu0 0.0
    %4572 = vmatprep.subr.mxu0 0.0
    %4573 = vmatpush1.msra.mxu0 0.0
    %4574 = vmatprep.subr.mxu0 0.0
    %4575 = vmatpush1.msra.mxu0 0.0
    %4576 = vmatprep.subr.mxu0 0.0
    %4577 = vmatpush1.msra.mxu0 0.0
    %4578 = vmatprep.subr.mxu0 0.0
    %4579 = vmatpush1.msra.mxu0 0.0
    %4580 = vmatprep.subr.mxu0 0.0
    %4581 = vmatpush1.msra.mxu0 0.0
    %4582 = vmatprep.subr.mxu0 0.0
    %4583 = vmatpush1.msra.mxu0 0.0
    %4584 = vmatprep.subr.mxu0 0.0
    %4585 = vmatpush1.msra.mxu0 0.0
    %4586 = vmatprep.subr.mxu0 0.0
    %4587 = vmatpush1.msra.mxu0 0.0
    %4588 = vmatprep.subr.mxu0 0.0
    %4589 = vmatpush1.msra.mxu0 0.0
    %4590 = vmatprep.subr.mxu0 0.0
    %4591 = vmatpush1.msra.mxu0 0.0
    %4592 = vmatprep.subr.mxu0 0.0
    %4593 = vmatpush1.msra.mxu0 0.0
    %4594 = vmatprep.mubr.f32.mxu0 0.0
    %4595 = vmatmul.mubr.f32.gmra.mrb[0].mxu0 %v4528
    %v4596 = vpop.f32.mrb[0].mxu0
    %v4597 = vadd.f32 %v4524, %v4596
    %v4598 = vpop.f32.mrb[0].mxu0
    %4599 = vdwg.mxu0
    %v4600 = vmul.f32 %v4597, %v4449
    %v4601 = vsel %vm2899, %v4600, 0.0
    %4602 = vadd.xlane.f32.xlu0 %v4601
    %v4603 = vpop.xlane.xlu0 %4602
    %v4604 = vmul.f32 %v345, %v4603
    %4606 = vrot.lane.b32.xlu0 %v4604, 122
    %v4607 = vpop.permute.xlu0 %4606
    %v4609 = vadd.f32 %v4353, %v4607
    %4610 = vset.pattern.permute.xlu0 7
    %4611 = vperm.xlu0 %4610, %v3070
    %v4612 = vpop.permute.xlu0 %4611
    %vm4613 = vcmp.eq.s32.totalorder %v4612, 1
    %v4614 = vsel %vm4613, %v4449, %v4358
    %v4615 = vsel %vm2899, %v4443, -inf
    %4616 = vmax.xlane.f32.xlu0 %v4615
    %v4617 = vpop.xlane.xlu0 %4616
    %v4618 = vsub.f32 %v4443, %v4617
    %v4619 = vmul.f32 %v4618, 1.442695
    %v4620 = vpow.pop %v4619
    %v4622 = vsel %vm2788, %v4620, 0
    %4624 = vmatprep.subr.mxu0 0.0
    %4625 = vmatpush1.msra.mxu0 %v3086
    %4626 = vmatprep.subr.mxu0 0.0
    %4627 = vmatpush1.msra.mxu0 0.0
    %4628 = vmatprep.subr.mxu0 0.0
    %4629 = vmatpush1.msra.mxu0 0.0
    %4630 = vmatprep.subr.mxu0 0.0
    %4631 = vmatpush1.msra.mxu0 0.0
    %4632 = vmatprep.subr.mxu0 0.0
    %4633 = vmatpush1.msra.mxu0 0.0
    %4634 = vmatprep.subr.mxu0 0.0
    %4635 = vmatpush1.msra.mxu0 0.0
    %4636 = vmatprep.subr.mxu0 0.0
    %4637 = vmatpush1.msra.mxu0 0.0
    %4638 = vmatprep.subr.mxu0 0.0
    %4639 = vmatpush1.msra.mxu0 0.0
    %4640 = vmatprep.subr.mxu0 0.0
    %4641 = vmatpush1.msra.mxu0 0.0
    %4642 = vmatprep.subr.mxu0 0.0
    %4643 = vmatpush1.msra.mxu0 0.0
    %4644 = vmatprep.subr.mxu0 0.0
    %4645 = vmatpush1.msra.mxu0 0.0
    %4646 = vmatprep.subr.mxu0 0.0
    %4647 = vmatpush1.msra.mxu0 0.0
    %4648 = vmatprep.subr.mxu0 0.0
    %4649 = vmatpush1.msra.mxu0 0.0
    %4650 = vmatprep.subr.mxu0 0.0
    %4651 = vmatpush1.msra.mxu0 0.0
    %4652 = vmatprep.subr.mxu0 0.0
    %4653 = vmatpush1.msra.mxu0 0.0
    %4654 = vmatprep.subr.mxu0 0.0
    %4655 = vmatpush1.msra.mxu0 0.0
    %4656 = vmatprep.subr.mxu0 0.0
    %4657 = vmatpush1.msra.mxu0 0.0
    %4658 = vmatprep.subr.mxu0 0.0
    %4659 = vmatpush1.msra.mxu0 0.0
    %4660 = vmatprep.subr.mxu0 0.0
    %4661 = vmatpush1.msra.mxu0 0.0
    %4662 = vmatprep.subr.mxu0 0.0
    %4663 = vmatpush1.msra.mxu0 0.0
    %4664 = vmatprep.subr.mxu0 0.0
    %4665 = vmatpush1.msra.mxu0 0.0
    %4666 = vmatprep.subr.mxu0 0.0
    %4667 = vmatpush1.msra.mxu0 0.0
    %4668 = vmatprep.subr.mxu0 0.0
    %4669 = vmatpush1.msra.mxu0 0.0
    %4670 = vmatprep.subr.mxu0 0.0
    %4671 = vmatpush1.msra.mxu0 0.0
    %4672 = vmatprep.subr.mxu0 0.0
    %4673 = vmatpush1.msra.mxu0 0.0
    %4674 = vmatprep.subr.mxu0 0.0
    %4675 = vmatpush1.msra.mxu0 0.0
    %4676 = vmatprep.subr.mxu0 0.0
    %4677 = vmatpush1.msra.mxu0 0.0
    %4678 = vmatprep.subr.mxu0 0.0
    %4679 = vmatpush1.msra.mxu0 0.0
    %4680 = vmatprep.subr.mxu0 0.0
    %4681 = vmatpush1.msra.mxu0 0.0
    %4682 = vmatprep.subr.mxu0 0.0
    %4683 = vmatpush1.msra.mxu0 0.0
    %4684 = vmatprep.subr.mxu0 0.0
    %4685 = vmatpush1.msra.mxu0 0.0
    %4686 = vmatprep.subr.mxu0 0.0
    %4687 = vmatpush1.msra.mxu0 0.0
    %4688 = vmatprep.mubr.f32.mxu0 0.0
    %4689 = vmatmul.mubr.f32.gmra.mrb[0].mxu0 %v4622
    %v4690 = vpop.f32.mrb[0].mxu0
    %v4691 = vadd.f32 0.0, %v4690
    %v4692 = vpop.f32.mrb[0].mxu0
    %4693 = vdwg.mxu0
    %v4694 = vadd.f32 %v4524, %v4617
    %v4695 = vadd.f32 %v4694, %v2805
    %v4696 = vlog2.pop %v4691
    %v4697 = vmul.f32 %v4696, 0.6931472
    %v4698 = vadd.f32 %v4695, %v4697
    %v4699 = vsel %vm4613, %v4698, %v4443
    %v4701 = vlaneseq
    %v4702 = vshrl.u32 %v4701, 7
    %v4703 = vsub.s32 0, %v4702
    %v4704 = vrot.slane %v2793, %v4703
    %v4706 = vmul.f32 %v4704, %v4614
    %v4707 = vsel %vm2899, %v4706, 0.0
    %4708 = vadd.xlane.f32.xlu0 %v4707
    %v4709 = vpop.xlane.xlu0 %4708
    %v4710 = vadd.f32 %v4609, %v4709
    %v4711 = vadd.f32 %v4699, %v4704
    %v4712 = vsel %vm2899, %v4711, -inf
    %4713 = vmax.xlane.f32.xlu0 %v4712
    %v4714 = vpop.xlane.xlu0 %4713
    %v4715 = vsub.f32 %v4711, %v4714
    %v4716 = vmul.f32 %v4715, 1.442695
    %v4717 = vpow.pop %v4716
    %v4718 = vsel %vm2899, %v4717, 0.0
    %4719 = vadd.xlane.f32.xlu0 %v4718
    %v4720 = vpop.xlane.xlu0 %4719
    %v4721 = vlog2.pop %v4720
    %v4722 = vmul.f32 %v4721, 0.6931472
    %v4723 = vadd.f32 %v4714, %v4722
    %v4724 = vsub.f32 %v4710, %v4723
    %vm4725 = vcmask 9224
    %v4726 = vsel %vm4725, %v4724, 0.0
    %v4727 = vrot.slane %v4726, 4
    %v4728 = vadd.f32 %v4726, %v4727
    %v4729 = vrot.slane %v4728, 2
    %v4730 = vadd.f32 %v4728, %v4729
    %v4731 = vrot.slane %v4730, 1
    %v4732 = vadd.f32 %v4730, %v4731
    %v4733 = vsub.f32 0.0, %v4732
    %v4734 = vrcp.pop 2.0
    %v4735 = vmul.f32 %v4733, %v4734
    %4737 = vrot.lane.b32.xlu0 %v4735, 127
    %v4738 = vpop.permute.xlu0 %4737
    %vm4740 = vcmask 0
    %4741 = vst.msk [vmem:[#allocation3] sm:$0x1] %vm4740, %v4738
    // Predicated region
    $region106: #{bert_crf_forward.1} parent=1 // pred_check
      _
    $region107: #{bert_crf_forward.1} parent=1 // pred_check_branch
      %4743 = sbr.rel (0) target = $region109
    $region108: #{bert_crf_forward.1} parent=1 // pred_region
      _
    $region109: #{bert_crf_forward.1} parent=1 // pred_fallthru
      _
    // Predicated region
    $region110: #{bert_crf_forward.1} parent=1 // pred_check
      _
    $region111: #{bert_crf_forward.1} parent=1 // pred_check_branch
      %4745 = sbr.rel (0) target = $region113
    $region112: #{bert_crf_forward.1} parent=1 // pred_region
      %s4747 = ssub.s32 16, 16
      %4748 = vsyncadd [#allocation4], %s4747
      %s4750 = sshll.u32 [#allocation3], 4
      %s4751 = int_to_ptr.vmem [resolvable:$true] %s4750
      %4753 = dma.vmem_to_hbm [thread:$0]  %s4751, 16, %s27, [#allocation4]
    $region113: #{bert_crf_forward.1} parent=1 // pred_fallthru
      _
    // Predicated region
    $region114: #{bert_crf_forward.1} parent=1 // pred_check
      _
    $region115: #{bert_crf_forward.1} parent=1 // pred_check_branch
      %4755 = sbr.rel (0) target = $region117
    $region116: #{bert_crf_forward.1} parent=1 // pred_region
      _
    $region117: #{bert_crf_forward.1} parent=1 // pred_fallthru
      _
    // Predicated region
    $region118: #{bert_crf_forward.1} parent=1 // pred_check
      _
    $region119: #{bert_crf_forward.1} parent=1 // pred_check_branch
      %4757 = sbr.rel (0) target = $region121
    $region120: #{bert_crf_forward.1} parent=1 // pred_region
      %4758 = dma.done [#allocation4], 16
    $region121: #{bert_crf_forward.1} parent=1 // pred_fallthru
      _
    %4759 = vsyncpa [#allocation4], 1

</llo_original>
